<compile_context>
chip_gen: v7x
topology: tpu7x:2x2x1
jax: 0.10.0
libtpu: 0.0.40
codegen_flags: <defaults>
</compile_context>

<pallas_src>
import math
from functools import partial

import jax
import jax.numpy as jnp
from jax.experimental import pallas as pl
from jax.experimental.pallas import tpu as pltpu

LN_EPS = 1e-5  # PyTorch nn.LayerNorm default


def _layernorm(x, gamma, beta):
    mean = jnp.mean(x, axis=-1, keepdims=True)
    var = jnp.mean(jnp.square(x - mean), axis=-1, keepdims=True)
    return (x - mean) * jax.lax.rsqrt(var + LN_EPS) * gamma + beta


def _erf(x):
    # Abramowitz & Stegun 7.1.26 rational approximation, |error| <= 1.5e-7: matches the
    # exact erf-GELU of nn.GELU to f32 noise using only exp / mul / add (no lax.erf).
    p = 0.3275911
    a1, a2, a3, a4, a5 = 0.254829592, -0.284496736, 1.421413741, -1.453152027, 1.061405429
    ax = jnp.abs(x)
    t = 1.0 / (1.0 + p * ax)
    poly = t * (a1 + t * (a2 + t * (a3 + t * (a4 + t * a5))))
    y = 1.0 - poly * jnp.exp(-ax * ax)
    return jnp.where(x < 0.0, -y, y)


def _gelu_exact(x):
    # PyTorch nn.GELU default (erf form)
    return 0.5 * x * (1.0 + _erf(x * (1.0 / math.sqrt(2.0))))


def transformer_block_kernel(x_ref,
                             ln1_g_ref, ln1_b_ref,
                             wq_ref, wk_ref, wv_ref,
                             bq_ref, bk_ref, bv_ref,
                             wo_ref, bo_ref,
                             ln2_g_ref, ln2_b_ref,
                             w1_ref, b1_ref, w2_ref, b2_ref,
                             o_ref,
                             *, num_heads, ff_chunk):
    Bb, T, D = x_ref.shape
    Dh = D // num_heads
    M = Bb * T
    scale = 1.0 / math.sqrt(Dh)
    w_dtype = wq_ref.dtype  # low-precision MXU operand dtype (bf16)

    # Residual stream kept in f32; the batch block is fused into the matmul M dimension.
    x = x_ref[...].reshape(M, D).astype(jnp.float32)

    # ---------------- self-attention sub-module (pre-norm, residual) ----------------
    xn = _layernorm(x, ln1_g_ref[...], ln1_b_ref[...])
    xn_lp = xn.astype(w_dtype)
    q = jnp.dot(xn_lp, wq_ref[...], preferred_element_type=jnp.float32) + bq_ref[...]
    k = jnp.dot(xn_lp, wk_ref[...], preferred_element_type=jnp.float32) + bk_ref[...]
    v = jnp.dot(xn_lp, wv_ref[...], preferred_element_type=jnp.float32) + bv_ref[...]
    q = q * scale                      # fold 1/sqrt(Dh) into q: one (M, D) multiply

    q = q.reshape(Bb, T, D)
    k = k.reshape(Bb, T, D)
    v = v.reshape(Bb, T, D)

    # Per-head attention, batched over the Bb rows of this block; each head's context is
    # fused straight into its Wo row-block and accumulated lane-dense into (M, D), so
    # there is no scratch slab round-trip and no masked column-offset store.
    att = jnp.zeros((M, D), jnp.float32)
    for h in range(num_heads):         # static, short head loop (batch handled by dot_general)
        lo = h * Dh
        qh = q[:, :, lo:lo + Dh]
        kh = k[:, :, lo:lo + Dh]
        vh = v[:, :, lo:lo + Dh]
        s = jax.lax.dot_general(qh, kh, (((2,), (2,)), ((0,), (0,))),
                                preferred_element_type=jnp.float32)       # (Bb, T, T)
        s = s - jnp.max(s, axis=-1, keepdims=True)
        p = jnp.exp(s)
        p = p * pl.reciprocal(jnp.sum(p, axis=-1, keepdims=True), approx=True)
        ctx = jax.lax.dot_general(p, vh, (((2,), (1,)), ((0,), (0,))),
                                  preferred_element_type=jnp.float32)     # (Bb, T, Dh)
        att = att + jnp.dot(ctx.reshape(M, Dh).astype(w_dtype),
                            wo_ref[lo:lo + Dh, :],
                            preferred_element_type=jnp.float32)
    x = x + att + bo_ref[...]          # dropout is identity in eval mode
    # TODO(synk): for production T (>=512) replace the full (T, T) score block with a
    # flash-style online-softmax KV loop (tile K/V along T) to bound live VMEM/vregs.

    # ---------------- feed-forward sub-module (pre-norm, residual) ------------------
    xn2 = _layernorm(x, ln2_g_ref[...], ln2_b_ref[...])
    xn2_lp = xn2.astype(w_dtype)
    F = w1_ref.shape[1]
    y = jnp.zeros((M, D), jnp.float32)
    for f0 in range(0, F, ff_chunk):   # F-tiled FFN: the (M, F) hidden is never materialized
        f1 = min(F, f0 + ff_chunk)
        hdn = jnp.dot(xn2_lp, w1_ref[:, f0:f1],
                      preferred_element_type=jnp.float32) + b1_ref[:, f0:f1]
        hdn = _gelu_exact(hdn)
        y = y + jnp.dot(hdn.astype(w_dtype), w2_ref[f0:f1, :],
                        preferred_element_type=jnp.float32)
    x = x + y + b2_ref[...]

    # post_norm is nn.Identity (post_norm=False default)
    o_ref[...] = x.reshape(Bb, T, D).astype(o_ref.dtype)


def _vmem_limit_bytes():
    """Generation-aware VMEM budget: ~80% of physical per-core VMEM (~51 MiB on v7x,
    ~102 MiB on v5e/v6e), leaving headroom for compiler scratch and buffer overshoot."""
    try:
        cap = int(pltpu.get_tpu_info().vmem_capacity_bytes)
    except Exception:   # hardware-info query unavailable -> keep the compiler default limit
        return None
    return int(cap * 0.8)


def _pick_block_b(B, T, D, F, x_itemsize, vmem_budget):
    """Largest divisor of B such that resident weights + double-buffered x/out blocks +
    the in-kernel f32 working set fit the VMEM budget, capped at B//2 so the parallel
    grid keeps >= 2 steps (v7x has 2 TensorCores fed by sharding the parallel axis)."""
    weight_elems = 4 * D * D + 2 * D * F                 # Wq,Wk,Wv,Wo,W1,W2
    weight_bytes = 2 * (2 * weight_elems)                # bf16, double-buffered
    weight_bytes += 4 * (9 * D + F)                      # f32 biases + LN params (approx)
    io_per_row = 2 * 2 * T * D * x_itemsize              # x in + out blocks, double-buffered
    work_per_row = 10 * T * D * 4 + T * T * 4            # rough f32 live-activation estimate
    per_row = io_per_row + work_per_row
    avail = max(vmem_budget - weight_bytes, per_row)
    bb = int(max(1, min(B, avail // per_row)))
    if B >= 2:
        bb = min(bb, B // 2)
    while B % bb:
        bb -= 1
    return bb


def transformer_block(x, params, num_heads, block_b=None, ff_chunk=None,
                      weight_dtype=jnp.bfloat16):
    B, T, D = x.shape
    F = params["w1"].shape[1]
    assert D % num_heads == 0

    vmem_limit = _vmem_limit_bytes()
    budget = vmem_limit if vmem_limit is not None else 32 * 1024 * 1024
    if block_b is None:
        block_b = _pick_block_b(B, T, D, F, x.dtype.itemsize, budget)
    assert B % block_b == 0, "batch must be divisible by block_b"
    grid = (B // block_b,)
    if ff_chunk is None:
        ff_chunk = min(F, 512)

    f32 = jnp.float32
    wqkv, bqkv = params["wqkv"], params["bqkv"]
    args = (
        x,
        params["ln1_g"].astype(f32), params["ln1_b"].astype(f32),
        wqkv[:, 0 * D:1 * D].astype(weight_dtype),
        wqkv[:, 1 * D:2 * D].astype(weight_dtype),
        wqkv[:, 2 * D:3 * D].astype(weight_dtype),
        bqkv[:, 0 * D:1 * D].astype(f32),
        bqkv[:, 1 * D:2 * D].astype(f32),
        bqkv[:, 2 * D:3 * D].astype(f32),
        params["wo"].astype(weight_dtype), params["bo"].astype(f32),
        params["ln2_g"].astype(f32), params["ln2_b"].astype(f32),
        params["w1"].astype(weight_dtype), params["b1"].astype(f32),
        params["w2"].astype(weight_dtype), params["b2"].astype(f32),
    )

    def whole(shape):
        nd = len(shape)
        return pl.BlockSpec(shape, lambda b, _nd=nd: (0,) * _nd)
    # TODO(synk): on JAX builds where pallas_call honors BlockSpec(pipeline_mode=
    # pl.Buffered(1)), single-buffer these constant-index weight specs to halve their
    # resident VMEM again (they are DMA'd once and revisited across grid steps anyway).

    in_specs = [
        pl.BlockSpec((block_b, T, D), lambda b: (b, 0, 0)),     # x (double-buffered)
        whole((1, D)), whole((1, D)),                           # ln1 gamma / beta
        whole((D, D)), whole((D, D)), whole((D, D)),            # Wq, Wk, Wv (bf16)
        whole((1, D)), whole((1, D)), whole((1, D)),            # bq, bk, bv
        whole((D, D)), whole((1, D)),                           # Wo (bf16), bo
        whole((1, D)), whole((1, D)),                           # ln2 gamma / beta
        whole((D, F)), whole((1, F)),                           # W1 (bf16), b1
        whole((F, D)), whole((1, D)),                           # W2 (bf16), b2
    ]

    cp_kwargs = dict(dimension_semantics=("parallel",))
    if vmem_limit is not None:
        cp_kwargs["vmem_limit_bytes"] = vmem_limit

    return pl.pallas_call(
        partial(transformer_block_kernel, num_heads=num_heads, ff_chunk=ff_chunk),
        out_shape=jax.ShapeDtypeStruct((B, T, D), x.dtype),
        grid_spec=pltpu.PrefetchScalarGridSpec(
            num_scalar_prefetch=0,
            grid=grid,
            in_specs=in_specs,
            out_specs=pl.BlockSpec((block_b, T, D), lambda b: (b, 0, 0)),
        ),
        compiler_params=pltpu.CompilerParams(**cp_kwargs),
    )(*args)


# ------------------------------ pure-JAX reference ------------------------------
def reference(x, params, num_heads):
    B, T, D = x.shape
    Dh = D // num_heads

    def ln(v, g, b):
        m = jnp.mean(v, axis=-1, keepdims=True)
        s = jnp.mean((v - m) ** 2, axis=-1, keepdims=True)
        return (v - m) * jax.lax.rsqrt(s + LN_EPS) * g + b

    xn = ln(x, params["ln1_g"][0], params["ln1_b"][0])
    qkv = jnp.einsum("btd,de->bte", xn, params["wqkv"]) + params["bqkv"][0]
    q, k, v = jnp.split(qkv, 3, axis=-1)
    q = q.reshape(B, T, num_heads, Dh).transpose(0, 2, 1, 3)
    k = k.reshape(B, T, num_heads, Dh).transpose(0, 2, 1, 3)
    v = v.reshape(B, T, num_heads, Dh).transpose(0, 2, 1, 3)
    s = jnp.einsum("bhtd,bhsd->bhts", q, k) / math.sqrt(Dh)
    p = jax.nn.softmax(s, axis=-1)
    att = jnp.einsum("bhts,bhsd->bhtd", p, v).transpose(0, 2, 1, 3).reshape(B, T, D)
    att = jnp.einsum("btd,de->bte", att, params["wo"]) + params["bo"][0]
    x = x + att

    xn2 = ln(x, params["ln2_g"][0], params["ln2_b"][0])
    h = jnp.einsum("btd,df->btf", xn2, params["w1"]) + params["b1"][0]
    h = 0.5 * h * (1.0 + jax.lax.erf(h / math.sqrt(2.0)))
    y = jnp.einsum("btf,fd->btd", h, params["w2"]) + params["b2"][0]
    return x + y


if __name__ == "__main__":
    B, T, D, H, FF_RATIO = 4, 8, 32, 4, 4
    F = D * FF_RATIO

    key = jax.random.PRNGKey(0)
    keys = jax.random.split(key, 5)
    x = jax.random.normal(keys[0], (B, T, D), jnp.float32)

    # weight_init='normal_02' (std 0.02), bias_init='zeros', LayerNorm gamma=1 / beta=0
    params = dict(
        ln1_g=jnp.ones((1, D), jnp.float32),
        ln1_b=jnp.zeros((1, D), jnp.float32),
        wqkv=0.02 * jax.random.normal(keys[1], (D, 3 * D), jnp.float32),
        bqkv=jnp.zeros((1, 3 * D), jnp.float32),
        wo=0.02 * jax.random.normal(keys[2], (D, D), jnp.float32),
        bo=jnp.zeros((1, D), jnp.float32),
        ln2_g=jnp.ones((1, D), jnp.float32),
        ln2_b=jnp.zeros((1, D), jnp.float32),
        w1=0.02 * jax.random.normal(keys[3], (D, F), jnp.float32),
        b1=jnp.zeros((1, F), jnp.float32),
        w2=0.02 * jax.random.normal(keys[4], (F, D), jnp.float32),
        b2=jnp.zeros((1, D), jnp.float32),
    )

    # VMEM-aware block_b heuristic picks block_b=2 here -> grid=(2,), >=2 parallel steps.
    out = transformer_block(x, params, num_heads=H)
    jax.block_until_ready(out)

    ref = reference(x, params, H)
    assert out.shape == (B, T, D)
    # tolerance covers bf16 MXU weight operands + the approximate EUP reciprocal in softmax
    assert jnp.allclose(out, ref, atol=1e-2, rtol=1e-2), "mismatch vs pure-JAX reference"

    # TODO(synk): dropout (drop_rate=0.1) is identity (eval mode); training-mode stochastic
    # dropout would need pltpu.prng_* inside the kernel. mask / hidden / return_att_w paths
    # (defaults mask=None, hidden=None, False) are not implemented.
    print("KERNEL_OK")
</pallas_src>

<mosaic_0001>
module attributes {stable_mosaic.version = 11 : i64} {
  func.func @transformer_block_kernel(%arg0: i32, %arg1: memref<2x8x32xf32, #tpu.memory_space<vmem>>, %arg2: memref<1x32xf32, #tpu.memory_space<vmem>>, %arg3: memref<1x32xf32, #tpu.memory_space<vmem>>, %arg4: memref<32x32xbf16, #tpu.memory_space<vmem>>, %arg5: memref<32x32xbf16, #tpu.memory_space<vmem>>, %arg6: memref<32x32xbf16, #tpu.memory_space<vmem>>, %arg7: memref<1x32xf32, #tpu.memory_space<vmem>>, %arg8: memref<1x32xf32, #tpu.memory_space<vmem>>, %arg9: memref<1x32xf32, #tpu.memory_space<vmem>>, %arg10: memref<32x32xbf16, #tpu.memory_space<vmem>>, %arg11: memref<1x32xf32, #tpu.memory_space<vmem>>, %arg12: memref<1x32xf32, #tpu.memory_space<vmem>>, %arg13: memref<1x32xf32, #tpu.memory_space<vmem>>, %arg14: memref<32x128xbf16, #tpu.memory_space<vmem>>, %arg15: memref<1x128xf32, #tpu.memory_space<vmem>>, %arg16: memref<128x32xbf16, #tpu.memory_space<vmem>>, %arg17: memref<1x32xf32, #tpu.memory_space<vmem>>, %arg18: memref<2x8x32xf32, #tpu.memory_space<vmem>>) attributes {dimension_semantics = [#tpu.dimension_semantics<parallel>], iteration_bounds = array<i64: 2>, scalar_prefetch = 0 : i64, scratch_operands = 0 : i64, tpu.core_type = #tpu.core_type<tc>, window_params = [{transform_indices = @transform_0, window_bounds = array<i64: 2, 8, 32>}, {pipeline_mode = #tpu.pipeline_mode<synchronous>, transform_indices = @transform_1, window_bounds = array<i64: 1, 32>}, {pipeline_mode = #tpu.pipeline_mode<synchronous>, transform_indices = @transform_2, window_bounds = array<i64: 1, 32>}, {pipeline_mode = #tpu.pipeline_mode<synchronous>, transform_indices = @transform_3, window_bounds = array<i64: 32, 32>}, {pipeline_mode = #tpu.pipeline_mode<synchronous>, transform_indices = @transform_4, window_bounds = array<i64: 32, 32>}, {pipeline_mode = #tpu.pipeline_mode<synchronous>, transform_indices = @transform_5, window_bounds = array<i64: 32, 32>}, {pipeline_mode = #tpu.pipeline_mode<synchronous>, transform_indices = @transform_6, window_bounds = array<i64: 1, 32>}, {pipeline_mode = #tpu.pipeline_mode<synchronous>, transform_indices = @transform_7, window_bounds = array<i64: 1, 32>}, {pipeline_mode = #tpu.pipeline_mode<synchronous>, transform_indices = @transform_8, window_bounds = array<i64: 1, 32>}, {pipeline_mode = #tpu.pipeline_mode<synchronous>, transform_indices = @transform_9, window_bounds = array<i64: 32, 32>}, {pipeline_mode = #tpu.pipeline_mode<synchronous>, transform_indices = @transform_10, window_bounds = array<i64: 1, 32>}, {pipeline_mode = #tpu.pipeline_mode<synchronous>, transform_indices = @transform_11, window_bounds = array<i64: 1, 32>}, {pipeline_mode = #tpu.pipeline_mode<synchronous>, transform_indices = @transform_12, window_bounds = array<i64: 1, 32>}, {pipeline_mode = #tpu.pipeline_mode<synchronous>, transform_indices = @transform_13, window_bounds = array<i64: 32, 128>}, {pipeline_mode = #tpu.pipeline_mode<synchronous>, transform_indices = @transform_14, window_bounds = array<i64: 1, 128>}, {pipeline_mode = #tpu.pipeline_mode<synchronous>, transform_indices = @transform_15, window_bounds = array<i64: 128, 32>}, {pipeline_mode = #tpu.pipeline_mode<synchronous>, transform_indices = @transform_16, window_bounds = array<i64: 1, 32>}, {transform_indices = @transform_17, window_bounds = array<i64: 2, 8, 32>}]} {
    %c0 = arith.constant 0 : index
    %c0_0 = arith.constant 0 : index
    %c0_1 = arith.constant 0 : index
    %0 = vector.load %arg1[%c0, %c0_0, %c0_1] : memref<2x8x32xf32, #tpu.memory_space<vmem>>, vector<2x8x32xf32>
    %1 = vector.shape_cast %0 : vector<2x8x32xf32> to vector<16x32xf32>
    %c0_2 = arith.constant 0 : index
    %c0_3 = arith.constant 0 : index
    %2 = vector.load %arg2[%c0_2, %c0_3] : memref<1x32xf32, #tpu.memory_space<vmem>>, vector<1x32xf32>
    %c0_4 = arith.constant 0 : index
    %c0_5 = arith.constant 0 : index
    %3 = vector.load %arg3[%c0_4, %c0_5] : memref<1x32xf32, #tpu.memory_space<vmem>>, vector<1x32xf32>
    %cst = arith.constant dense<0.000000e+00> : vector<16xf32>
    %4 = vector.multi_reduction <add>, %1, %cst [1] : vector<16x32xf32> to vector<16xf32>
    %5 = vector.shape_cast %4 : vector<16xf32> to vector<16x1xf32>
    %cst_6 = arith.constant 3.200000e+01 : f32
    %6 = vector.broadcast %cst_6 : f32 to vector<16x1xf32>
    %7 = arith.divf %5, %6 : vector<16x1xf32>
    %8 = vector.broadcast %7 : vector<16x1xf32> to vector<16x32xf32>
    %9 = arith.subf %1, %8 : vector<16x32xf32>
    %10 = arith.mulf %9, %9 : vector<16x32xf32>
    %cst_7 = arith.constant dense<0.000000e+00> : vector<16xf32>
    %11 = vector.multi_reduction <add>, %10, %cst_7 [1] : vector<16x32xf32> to vector<16xf32>
    %12 = vector.shape_cast %11 : vector<16xf32> to vector<16x1xf32>
    %cst_8 = arith.constant 3.200000e+01 : f32
    %13 = vector.broadcast %cst_8 : f32 to vector<16x1xf32>
    %14 = arith.divf %12, %13 : vector<16x1xf32>
    %15 = vector.broadcast %7 : vector<16x1xf32> to vector<16x32xf32>
    %16 = arith.subf %1, %15 : vector<16x32xf32>
    %cst_9 = arith.constant 9.99999974E-6 : f32
    %17 = vector.broadcast %cst_9 : f32 to vector<16x1xf32>
    %18 = arith.addf %14, %17 : vector<16x1xf32>
    %19 = math.rsqrt %18 : vector<16x1xf32>
    %20 = vector.broadcast %19 : vector<16x1xf32> to vector<16x32xf32>
    %21 = arith.mulf %16, %20 : vector<16x32xf32>
    %22 = vector.broadcast %2 : vector<1x32xf32> to vector<16x32xf32>
    %23 = arith.mulf %21, %22 : vector<16x32xf32>
    %24 = vector.broadcast %3 : vector<1x32xf32> to vector<16x32xf32>
    %25 = arith.addf %23, %24 : vector<16x32xf32>
    %26 = arith.truncf %25 : vector<16x32xf32> to vector<16x32xbf16>
    %c0_10 = arith.constant 0 : index
    %c0_11 = arith.constant 0 : index
    %27 = vector.load %arg4[%c0_10, %c0_11] : memref<32x32xbf16, #tpu.memory_space<vmem>>, vector<32x32xbf16>
    %cst_12 = arith.constant dense<0.000000e+00> : vector<16x32xf32>
    %28 = tpu.matmul %26, %27, %cst_12 {dimension_numbers = #tpu.dot_dimension_numbers<[1], [0], [0], [1], [0, 0, 1, 1], [], []>} : vector<16x32xbf16>, vector<32x32xbf16>, vector<16x32xf32> -> vector<16x32xf32>
    %c0_13 = arith.constant 0 : index
    %c0_14 = arith.constant 0 : index
    %29 = vector.load %arg7[%c0_13, %c0_14] : memref<1x32xf32, #tpu.memory_space<vmem>>, vector<1x32xf32>
    %30 = vector.broadcast %29 : vector<1x32xf32> to vector<16x32xf32>
    %31 = arith.addf %28, %30 : vector<16x32xf32>
    %c0_15 = arith.constant 0 : index
    %c0_16 = arith.constant 0 : index
    %32 = vector.load %arg5[%c0_15, %c0_16] : memref<32x32xbf16, #tpu.memory_space<vmem>>, vector<32x32xbf16>
    %cst_17 = arith.constant dense<0.000000e+00> : vector<16x32xf32>
    %33 = tpu.matmul %26, %32, %cst_17 {dimension_numbers = #tpu.dot_dimension_numbers<[1], [0], [0], [1], [0, 0, 1, 1], [], []>} : vector<16x32xbf16>, vector<32x32xbf16>, vector<16x32xf32> -> vector<16x32xf32>
    %c0_18 = arith.constant 0 : index
    %c0_19 = arith.constant 0 : index
    %34 = vector.load %arg8[%c0_18, %c0_19] : memref<1x32xf32, #tpu.memory_space<vmem>>, vector<1x32xf32>
    %35 = vector.broadcast %34 : vector<1x32xf32> to vector<16x32xf32>
    %36 = arith.addf %33, %35 : vector<16x32xf32>
    %c0_20 = arith.constant 0 : index
    %c0_21 = arith.constant 0 : index
    %37 = vector.load %arg6[%c0_20, %c0_21] : memref<32x32xbf16, #tpu.memory_space<vmem>>, vector<32x32xbf16>
    %cst_22 = arith.constant dense<0.000000e+00> : vector<16x32xf32>
    %38 = tpu.matmul %26, %37, %cst_22 {dimension_numbers = #tpu.dot_dimension_numbers<[1], [0], [0], [1], [0, 0, 1, 1], [], []>} : vector<16x32xbf16>, vector<32x32xbf16>, vector<16x32xf32> -> vector<16x32xf32>
    %c0_23 = arith.constant 0 : index
    %c0_24 = arith.constant 0 : index
    %39 = vector.load %arg9[%c0_23, %c0_24] : memref<1x32xf32, #tpu.memory_space<vmem>>, vector<1x32xf32>
    %40 = vector.broadcast %39 : vector<1x32xf32> to vector<16x32xf32>
    %41 = arith.addf %38, %40 : vector<16x32xf32>
    %cst_25 = arith.constant 0.353553385 : f32
    %42 = vector.broadcast %cst_25 : f32 to vector<16x32xf32>
    %43 = arith.mulf %31, %42 : vector<16x32xf32>
    %44 = vector.shape_cast %43 : vector<16x32xf32> to vector<2x8x32xf32>
    %45 = vector.shape_cast %36 : vector<16x32xf32> to vector<2x8x32xf32>
    %46 = vector.shape_cast %41 : vector<16x32xf32> to vector<2x8x32xf32>
    %cst_26 = arith.constant 0.000000e+00 : f32
    %47 = vector.broadcast %cst_26 : f32 to vector<16x32xf32>
    %48 = vector.extract_strided_slice %44 {offsets = [0, 0, 0], sizes = [2, 8, 8], strides = [1, 1, 1]} : vector<2x8x32xf32> to vector<2x8x8xf32>
    %49 = vector.extract_strided_slice %45 {offsets = [0, 0, 0], sizes = [2, 8, 8], strides = [1, 1, 1]} : vector<2x8x32xf32> to vector<2x8x8xf32>
    %50 = vector.extract_strided_slice %46 {offsets = [0, 0, 0], sizes = [2, 8, 8], strides = [1, 1, 1]} : vector<2x8x32xf32> to vector<2x8x8xf32>
    %cst_27 = arith.constant dense<0.000000e+00> : vector<2x8x8xf32>
    %51 = tpu.matmul %48, %49, %cst_27 {dimension_numbers = #tpu.dot_dimension_numbers<[2], [2], [1], [1], [0, 0, 0, 1, 1, 1], [0], [0]>} : vector<2x8x8xf32>, vector<2x8x8xf32>, vector<2x8x8xf32> -> vector<2x8x8xf32>
    %cst_28 = arith.constant dense<0xFF800000> : vector<2x8xf32>
    %52 = vector.multi_reduction <maximumf>, %51, %cst_28 [2] : vector<2x8x8xf32> to vector<2x8xf32>
    %53 = vector.shape_cast %52 : vector<2x8xf32> to vector<2x8x1xf32>
    %54 = vector.broadcast %53 : vector<2x8x1xf32> to vector<2x8x8xf32>
    %55 = arith.subf %51, %54 : vector<2x8x8xf32>
    %56 = math.exp %55 : vector<2x8x8xf32>
    %cst_29 = arith.constant dense<0.000000e+00> : vector<2x8xf32>
    %57 = vector.multi_reduction <add>, %56, %cst_29 [2] : vector<2x8x8xf32> to vector<2x8xf32>
    %58 = vector.shape_cast %57 : vector<2x8xf32> to vector<2x8x1xf32>
    %59 = tpu.reciprocal %58 {approx = true} : vector<2x8x1xf32> -> vector<2x8x1xf32>
    %60 = vector.broadcast %59 : vector<2x8x1xf32> to vector<2x8x8xf32>
    %61 = arith.mulf %56, %60 : vector<2x8x8xf32>
    %cst_30 = arith.constant dense<0.000000e+00> : vector<2x8x8xf32>
    %62 = tpu.matmul %61, %50, %cst_30 {dimension_numbers = #tpu.dot_dimension_numbers<[2], [1], [1], [2], [0, 0, 0, 1, 1, 2], [0], [0]>} : vector<2x8x8xf32>, vector<2x8x8xf32>, vector<2x8x8xf32> -> vector<2x8x8xf32>
    %63 = vector.shape_cast %62 : vector<2x8x8xf32> to vector<16x8xf32>
    %64 = arith.truncf %63 : vector<16x8xf32> to vector<16x8xbf16>
    %c0_31 = arith.constant 0 : index
    %c0_32 = arith.constant 0 : index
    %65 = vector.load %arg10[%c0_31, %c0_32] : memref<32x32xbf16, #tpu.memory_space<vmem>>, vector<8x32xbf16>
    %cst_33 = arith.constant dense<0.000000e+00> : vector<16x32xf32>
    %66 = tpu.matmul %64, %65, %cst_33 {dimension_numbers = #tpu.dot_dimension_numbers<[1], [0], [0], [1], [0, 0, 1, 1], [], []>} : vector<16x8xbf16>, vector<8x32xbf16>, vector<16x32xf32> -> vector<16x32xf32>
    %67 = arith.addf %47, %66 : vector<16x32xf32>
    %68 = vector.extract_strided_slice %44 {offsets = [0, 0, 8], sizes = [2, 8, 8], strides = [1, 1, 1]} : vector<2x8x32xf32> to vector<2x8x8xf32>
    %69 = vector.extract_strided_slice %45 {offsets = [0, 0, 8], sizes = [2, 8, 8], strides = [1, 1, 1]} : vector<2x8x32xf32> to vector<2x8x8xf32>
    %70 = vector.extract_strided_slice %46 {offsets = [0, 0, 8], sizes = [2, 8, 8], strides = [1, 1, 1]} : vector<2x8x32xf32> to vector<2x8x8xf32>
    %cst_34 = arith.constant dense<0.000000e+00> : vector<2x8x8xf32>
    %71 = tpu.matmul %68, %69, %cst_34 {dimension_numbers = #tpu.dot_dimension_numbers<[2], [2], [1], [1], [0, 0, 0, 1, 1, 1], [0], [0]>} : vector<2x8x8xf32>, vector<2x8x8xf32>, vector<2x8x8xf32> -> vector<2x8x8xf32>
    %cst_35 = arith.constant dense<0xFF800000> : vector<2x8xf32>
    %72 = vector.multi_reduction <maximumf>, %71, %cst_35 [2] : vector<2x8x8xf32> to vector<2x8xf32>
    %73 = vector.shape_cast %72 : vector<2x8xf32> to vector<2x8x1xf32>
    %74 = vector.broadcast %73 : vector<2x8x1xf32> to vector<2x8x8xf32>
    %75 = arith.subf %71, %74 : vector<2x8x8xf32>
    %76 = math.exp %75 : vector<2x8x8xf32>
    %cst_36 = arith.constant dense<0.000000e+00> : vector<2x8xf32>
    %77 = vector.multi_reduction <add>, %76, %cst_36 [2] : vector<2x8x8xf32> to vector<2x8xf32>
    %78 = vector.shape_cast %77 : vector<2x8xf32> to vector<2x8x1xf32>
    %79 = tpu.reciprocal %78 {approx = true} : vector<2x8x1xf32> -> vector<2x8x1xf32>
    %80 = vector.broadcast %79 : vector<2x8x1xf32> to vector<2x8x8xf32>
    %81 = arith.mulf %76, %80 : vector<2x8x8xf32>
    %cst_37 = arith.constant dense<0.000000e+00> : vector<2x8x8xf32>
    %82 = tpu.matmul %81, %70, %cst_37 {dimension_numbers = #tpu.dot_dimension_numbers<[2], [1], [1], [2], [0, 0, 0, 1, 1, 2], [0], [0]>} : vector<2x8x8xf32>, vector<2x8x8xf32>, vector<2x8x8xf32> -> vector<2x8x8xf32>
    %83 = vector.shape_cast %82 : vector<2x8x8xf32> to vector<16x8xf32>
    %84 = arith.truncf %83 : vector<16x8xf32> to vector<16x8xbf16>
    %c8 = arith.constant 8 : index
    %c0_38 = arith.constant 0 : index
    %85 = vector.load %arg10[%c8, %c0_38] : memref<32x32xbf16, #tpu.memory_space<vmem>>, vector<8x32xbf16>
    %cst_39 = arith.constant dense<0.000000e+00> : vector<16x32xf32>
    %86 = tpu.matmul %84, %85, %cst_39 {dimension_numbers = #tpu.dot_dimension_numbers<[1], [0], [0], [1], [0, 0, 1, 1], [], []>} : vector<16x8xbf16>, vector<8x32xbf16>, vector<16x32xf32> -> vector<16x32xf32>
    %87 = arith.addf %67, %86 : vector<16x32xf32>
    %88 = vector.extract_strided_slice %44 {offsets = [0, 0, 16], sizes = [2, 8, 8], strides = [1, 1, 1]} : vector<2x8x32xf32> to vector<2x8x8xf32>
    %89 = vector.extract_strided_slice %45 {offsets = [0, 0, 16], sizes = [2, 8, 8], strides = [1, 1, 1]} : vector<2x8x32xf32> to vector<2x8x8xf32>
    %90 = vector.extract_strided_slice %46 {offsets = [0, 0, 16], sizes = [2, 8, 8], strides = [1, 1, 1]} : vector<2x8x32xf32> to vector<2x8x8xf32>
    %cst_40 = arith.constant dense<0.000000e+00> : vector<2x8x8xf32>
    %91 = tpu.matmul %88, %89, %cst_40 {dimension_numbers = #tpu.dot_dimension_numbers<[2], [2], [1], [1], [0, 0, 0, 1, 1, 1], [0], [0]>} : vector<2x8x8xf32>, vector<2x8x8xf32>, vector<2x8x8xf32> -> vector<2x8x8xf32>
    %cst_41 = arith.constant dense<0xFF800000> : vector<2x8xf32>
    %92 = vector.multi_reduction <maximumf>, %91, %cst_41 [2] : vector<2x8x8xf32> to vector<2x8xf32>
    %93 = vector.shape_cast %92 : vector<2x8xf32> to vector<2x8x1xf32>
    %94 = vector.broadcast %93 : vector<2x8x1xf32> to vector<2x8x8xf32>
    %95 = arith.subf %91, %94 : vector<2x8x8xf32>
    %96 = math.exp %95 : vector<2x8x8xf32>
    %cst_42 = arith.constant dense<0.000000e+00> : vector<2x8xf32>
    %97 = vector.multi_reduction <add>, %96, %cst_42 [2] : vector<2x8x8xf32> to vector<2x8xf32>
    %98 = vector.shape_cast %97 : vector<2x8xf32> to vector<2x8x1xf32>
    %99 = tpu.reciprocal %98 {approx = true} : vector<2x8x1xf32> -> vector<2x8x1xf32>
    %100 = vector.broadcast %99 : vector<2x8x1xf32> to vector<2x8x8xf32>
    %101 = arith.mulf %96, %100 : vector<2x8x8xf32>
    %cst_43 = arith.constant dense<0.000000e+00> : vector<2x8x8xf32>
    %102 = tpu.matmul %101, %90, %cst_43 {dimension_numbers = #tpu.dot_dimension_numbers<[2], [1], [1], [2], [0, 0, 0, 1, 1, 2], [0], [0]>} : vector<2x8x8xf32>, vector<2x8x8xf32>, vector<2x8x8xf32> -> vector<2x8x8xf32>
    %103 = vector.shape_cast %102 : vector<2x8x8xf32> to vector<16x8xf32>
    %104 = arith.truncf %103 : vector<16x8xf32> to vector<16x8xbf16>
    %c16 = arith.constant 16 : index
    %c0_44 = arith.constant 0 : index
    %105 = vector.load %arg10[%c16, %c0_44] : memref<32x32xbf16, #tpu.memory_space<vmem>>, vector<8x32xbf16>
    %cst_45 = arith.constant dense<0.000000e+00> : vector<16x32xf32>
    %106 = tpu.matmul %104, %105, %cst_45 {dimension_numbers = #tpu.dot_dimension_numbers<[1], [0], [0], [1], [0, 0, 1, 1], [], []>} : vector<16x8xbf16>, vector<8x32xbf16>, vector<16x32xf32> -> vector<16x32xf32>
    %107 = arith.addf %87, %106 : vector<16x32xf32>
    %108 = vector.extract_strided_slice %44 {offsets = [0, 0, 24], sizes = [2, 8, 8], strides = [1, 1, 1]} : vector<2x8x32xf32> to vector<2x8x8xf32>
    %109 = vector.extract_strided_slice %45 {offsets = [0, 0, 24], sizes = [2, 8, 8], strides = [1, 1, 1]} : vector<2x8x32xf32> to vector<2x8x8xf32>
    %110 = vector.extract_strided_slice %46 {offsets = [0, 0, 24], sizes = [2, 8, 8], strides = [1, 1, 1]} : vector<2x8x32xf32> to vector<2x8x8xf32>
    %cst_46 = arith.constant dense<0.000000e+00> : vector<2x8x8xf32>
    %111 = tpu.matmul %108, %109, %cst_46 {dimension_numbers = #tpu.dot_dimension_numbers<[2], [2], [1], [1], [0, 0, 0, 1, 1, 1], [0], [0]>} : vector<2x8x8xf32>, vector<2x8x8xf32>, vector<2x8x8xf32> -> vector<2x8x8xf32>
    %cst_47 = arith.constant dense<0xFF800000> : vector<2x8xf32>
    %112 = vector.multi_reduction <maximumf>, %111, %cst_47 [2] : vector<2x8x8xf32> to vector<2x8xf32>
    %113 = vector.shape_cast %112 : vector<2x8xf32> to vector<2x8x1xf32>
    %114 = vector.broadcast %113 : vector<2x8x1xf32> to vector<2x8x8xf32>
    %115 = arith.subf %111, %114 : vector<2x8x8xf32>
    %116 = math.exp %115 : vector<2x8x8xf32>
    %cst_48 = arith.constant dense<0.000000e+00> : vector<2x8xf32>
    %117 = vector.multi_reduction <add>, %116, %cst_48 [2] : vector<2x8x8xf32> to vector<2x8xf32>
    %118 = vector.shape_cast %117 : vector<2x8xf32> to vector<2x8x1xf32>
    %119 = tpu.reciprocal %118 {approx = true} : vector<2x8x1xf32> -> vector<2x8x1xf32>
    %120 = vector.broadcast %119 : vector<2x8x1xf32> to vector<2x8x8xf32>
    %121 = arith.mulf %116, %120 : vector<2x8x8xf32>
    %cst_49 = arith.constant dense<0.000000e+00> : vector<2x8x8xf32>
    %122 = tpu.matmul %121, %110, %cst_49 {dimension_numbers = #tpu.dot_dimension_numbers<[2], [1], [1], [2], [0, 0, 0, 1, 1, 2], [0], [0]>} : vector<2x8x8xf32>, vector<2x8x8xf32>, vector<2x8x8xf32> -> vector<2x8x8xf32>
    %123 = vector.shape_cast %122 : vector<2x8x8xf32> to vector<16x8xf32>
    %124 = arith.truncf %123 : vector<16x8xf32> to vector<16x8xbf16>
    %c24 = arith.constant 24 : index
    %c0_50 = arith.constant 0 : index
    %125 = vector.load %arg10[%c24, %c0_50] : memref<32x32xbf16, #tpu.memory_space<vmem>>, vector<8x32xbf16>
    %cst_51 = arith.constant dense<0.000000e+00> : vector<16x32xf32>
    %126 = tpu.matmul %124, %125, %cst_51 {dimension_numbers = #tpu.dot_dimension_numbers<[1], [0], [0], [1], [0, 0, 1, 1], [], []>} : vector<16x8xbf16>, vector<8x32xbf16>, vector<16x32xf32> -> vector<16x32xf32>
    %127 = arith.addf %107, %126 : vector<16x32xf32>
    %128 = arith.addf %1, %127 : vector<16x32xf32>
    %c0_52 = arith.constant 0 : index
    %c0_53 = arith.constant 0 : index
    %129 = vector.load %arg11[%c0_52, %c0_53] : memref<1x32xf32, #tpu.memory_space<vmem>>, vector<1x32xf32>
    %130 = vector.broadcast %129 : vector<1x32xf32> to vector<16x32xf32>
    %131 = arith.addf %128, %130 : vector<16x32xf32>
    %c0_54 = arith.constant 0 : index
    %c0_55 = arith.constant 0 : index
    %132 = vector.load %arg12[%c0_54, %c0_55] : memref<1x32xf32, #tpu.memory_space<vmem>>, vector<1x32xf32>
    %c0_56 = arith.constant 0 : index
    %c0_57 = arith.constant 0 : index
    %133 = vector.load %arg13[%c0_56, %c0_57] : memref<1x32xf32, #tpu.memory_space<vmem>>, vector<1x32xf32>
    %cst_58 = arith.constant dense<0.000000e+00> : vector<16xf32>
    %134 = vector.multi_reduction <add>, %131, %cst_58 [1] : vector<16x32xf32> to vector<16xf32>
    %135 = vector.shape_cast %134 : vector<16xf32> to vector<16x1xf32>
    %cst_59 = arith.constant 3.200000e+01 : f32
    %136 = vector.broadcast %cst_59 : f32 to vector<16x1xf32>
    %137 = arith.divf %135, %136 : vector<16x1xf32>
    %138 = vector.broadcast %137 : vector<16x1xf32> to vector<16x32xf32>
    %139 = arith.subf %131, %138 : vector<16x32xf32>
    %140 = arith.mulf %139, %139 : vector<16x32xf32>
    %cst_60 = arith.constant dense<0.000000e+00> : vector<16xf32>
    %141 = vector.multi_reduction <add>, %140, %cst_60 [1] : vector<16x32xf32> to vector<16xf32>
    %142 = vector.shape_cast %141 : vector<16xf32> to vector<16x1xf32>
    %cst_61 = arith.constant 3.200000e+01 : f32
    %143 = vector.broadcast %cst_61 : f32 to vector<16x1xf32>
    %144 = arith.divf %142, %143 : vector<16x1xf32>
    %145 = vector.broadcast %137 : vector<16x1xf32> to vector<16x32xf32>
    %146 = arith.subf %131, %145 : vector<16x32xf32>
    %cst_62 = arith.constant 9.99999974E-6 : f32
    %147 = vector.broadcast %cst_62 : f32 to vector<16x1xf32>
    %148 = arith.addf %144, %147 : vector<16x1xf32>
    %149 = math.rsqrt %148 : vector<16x1xf32>
    %150 = vector.broadcast %149 : vector<16x1xf32> to vector<16x32xf32>
    %151 = arith.mulf %146, %150 : vector<16x32xf32>
    %152 = vector.broadcast %132 : vector<1x32xf32> to vector<16x32xf32>
    %153 = arith.mulf %151, %152 : vector<16x32xf32>
    %154 = vector.broadcast %133 : vector<1x32xf32> to vector<16x32xf32>
    %155 = arith.addf %153, %154 : vector<16x32xf32>
    %156 = arith.truncf %155 : vector<16x32xf32> to vector<16x32xbf16>
    %cst_63 = arith.constant 0.000000e+00 : f32
    %157 = vector.broadcast %cst_63 : f32 to vector<16x32xf32>
    %c0_64 = arith.constant 0 : index
    %c0_65 = arith.constant 0 : index
    %158 = vector.load %arg14[%c0_64, %c0_65] : memref<32x128xbf16, #tpu.memory_space<vmem>>, vector<32x128xbf16>
    %cst_66 = arith.constant dense<0.000000e+00> : vector<16x128xf32>
    %159 = tpu.matmul %156, %158, %cst_66 {dimension_numbers = #tpu.dot_dimension_numbers<[1], [0], [0], [1], [0, 0, 1, 1], [], []>} : vector<16x32xbf16>, vector<32x128xbf16>, vector<16x128xf32> -> vector<16x128xf32>
    %c0_67 = arith.constant 0 : index
    %c0_68 = arith.constant 0 : index
    %160 = vector.load %arg15[%c0_67, %c0_68] : memref<1x128xf32, #tpu.memory_space<vmem>>, vector<1x128xf32>
    %161 = vector.broadcast %160 : vector<1x128xf32> to vector<16x128xf32>
    %162 = arith.addf %159, %161 : vector<16x128xf32>
    %cst_69 = arith.constant 5.000000e-01 : f32
    %163 = vector.broadcast %cst_69 : f32 to vector<16x128xf32>
    %164 = arith.mulf %163, %162 : vector<16x128xf32>
    %cst_70 = arith.constant 0.707106769 : f32
    %165 = vector.broadcast %cst_70 : f32 to vector<16x128xf32>
    %166 = arith.mulf %162, %165 : vector<16x128xf32>
    %167 = math.absf %166 : vector<16x128xf32>
    %cst_71 = arith.constant 0.327591091 : f32
    %168 = vector.broadcast %cst_71 : f32 to vector<16x128xf32>
    %169 = arith.mulf %168, %167 : vector<16x128xf32>
    %cst_72 = arith.constant 1.000000e+00 : f32
    %170 = vector.broadcast %cst_72 : f32 to vector<16x128xf32>
    %171 = arith.addf %170, %169 : vector<16x128xf32>
    %cst_73 = arith.constant 1.000000e+00 : f32
    %172 = vector.broadcast %cst_73 : f32 to vector<16x128xf32>
    %173 = arith.divf %172, %171 : vector<16x128xf32>
    %cst_74 = arith.constant 1.06140542 : f32
    %174 = vector.broadcast %cst_74 : f32 to vector<16x128xf32>
    %175 = arith.mulf %173, %174 : vector<16x128xf32>
    %cst_75 = arith.constant -1.45315206 : f32
    %176 = vector.broadcast %cst_75 : f32 to vector<16x128xf32>
    %177 = arith.addf %176, %175 : vector<16x128xf32>
    %178 = arith.mulf %173, %177 : vector<16x128xf32>
    %cst_76 = arith.constant 1.42141378 : f32
    %179 = vector.broadcast %cst_76 : f32 to vector<16x128xf32>
    %180 = arith.addf %179, %178 : vector<16x128xf32>
    %181 = arith.mulf %173, %180 : vector<16x128xf32>
    %cst_77 = arith.constant -0.284496725 : f32
    %182 = vector.broadcast %cst_77 : f32 to vector<16x128xf32>
    %183 = arith.addf %182, %181 : vector<16x128xf32>
    %184 = arith.mulf %173, %183 : vector<16x128xf32>
    %cst_78 = arith.constant 0.254829586 : f32
    %185 = vector.broadcast %cst_78 : f32 to vector<16x128xf32>
    %186 = arith.addf %185, %184 : vector<16x128xf32>
    %187 = arith.mulf %173, %186 : vector<16x128xf32>
    %cst_79 = arith.constant 0.000000e+00 : f32
    %188 = vector.broadcast %cst_79 : f32 to vector<16x128xf32>
    %189 = arith.subf %188, %167 : vector<16x128xf32>
    %190 = arith.mulf %189, %167 : vector<16x128xf32>
    %191 = math.exp %190 : vector<16x128xf32>
    %192 = arith.mulf %187, %191 : vector<16x128xf32>
    %cst_80 = arith.constant 1.000000e+00 : f32
    %193 = vector.broadcast %cst_80 : f32 to vector<16x128xf32>
    %194 = arith.subf %193, %192 : vector<16x128xf32>
    %cst_81 = arith.constant 0.000000e+00 : f32
    %195 = vector.broadcast %cst_81 : f32 to vector<16x128xf32>
    %196 = arith.cmpf olt, %166, %195 : vector<16x128xf32>
    %cst_82 = arith.constant 0.000000e+00 : f32
    %197 = vector.broadcast %cst_82 : f32 to vector<16x128xf32>
    %198 = arith.subf %197, %194 : vector<16x128xf32>
    %199 = arith.select %196, %198, %194 : vector<16x128xi1>, vector<16x128xf32>
    %cst_83 = arith.constant 1.000000e+00 : f32
    %200 = vector.broadcast %cst_83 : f32 to vector<16x128xf32>
    %201 = arith.addf %200, %199 : vector<16x128xf32>
    %202 = arith.mulf %164, %201 : vector<16x128xf32>
    %203 = arith.truncf %202 : vector<16x128xf32> to vector<16x128xbf16>
    %c0_84 = arith.constant 0 : index
    %c0_85 = arith.constant 0 : index
    %204 = vector.load %arg16[%c0_84, %c0_85] : memref<128x32xbf16, #tpu.memory_space<vmem>>, vector<128x32xbf16>
    %cst_86 = arith.constant dense<0.000000e+00> : vector<16x32xf32>
    %205 = tpu.matmul %203, %204, %cst_86 {dimension_numbers = #tpu.dot_dimension_numbers<[1], [0], [0], [1], [0, 0, 1, 1], [], []>} : vector<16x128xbf16>, vector<128x32xbf16>, vector<16x32xf32> -> vector<16x32xf32>
    %206 = arith.addf %157, %205 : vector<16x32xf32>
    %207 = arith.addf %131, %206 : vector<16x32xf32>
    %c0_87 = arith.constant 0 : index
    %c0_88 = arith.constant 0 : index
    %208 = vector.load %arg17[%c0_87, %c0_88] : memref<1x32xf32, #tpu.memory_space<vmem>>, vector<1x32xf32>
    %209 = vector.broadcast %208 : vector<1x32xf32> to vector<16x32xf32>
    %210 = arith.addf %207, %209 : vector<16x32xf32>
    %211 = vector.shape_cast %210 : vector<16x32xf32> to vector<2x8x32xf32>
    %c0_89 = arith.constant 0 : index
    %c0_90 = arith.constant 0 : index
    %c0_91 = arith.constant 0 : index
    %212 = vector.load %arg18[%c0_89, %c0_90, %c0_91] : memref<2x8x32xf32, #tpu.memory_space<vmem>>, vector<2x8x32xf32>
    tpu.vector_store %arg18[%c0_89, %c0_90, %c0_91], %211 {strides = array<i32>} : memref<2x8x32xf32, #tpu.memory_space<vmem>>, vector<2x8x32xf32>,
    return
  }
  func.func @transform_0(%arg0: i32) -> (i32, i32, i32) {
    %c0_i32 = arith.constant 0 : i32
    %c0_i32_0 = arith.constant 0 : i32
    %c0_i32_1 = arith.constant 0 : i32
    return %arg0, %c0_i32, %c0_i32_0 : i32, i32, i32
  }
  func.func @transform_1(%arg0: i32) -> (i32, i32) {
    %c0_i32 = arith.constant 0 : i32
    %c0_i32_0 = arith.constant 0 : i32
    %c0_i32_1 = arith.constant 0 : i32
    return %c0_i32, %c0_i32_0 : i32, i32
  }
  func.func @transform_2(%arg0: i32) -> (i32, i32) {
    %c0_i32 = arith.constant 0 : i32
    %c0_i32_0 = arith.constant 0 : i32
    %c0_i32_1 = arith.constant 0 : i32
    return %c0_i32, %c0_i32_0 : i32, i32
  }
  func.func @transform_3(%arg0: i32) -> (i32, i32) {
    %c0_i32 = arith.constant 0 : i32
    %c0_i32_0 = arith.constant 0 : i32
    %c0_i32_1 = arith.constant 0 : i32
    return %c0_i32, %c0_i32_0 : i32, i32
  }
  func.func @transform_4(%arg0: i32) -> (i32, i32) {
    %c0_i32 = arith.constant 0 : i32
    %c0_i32_0 = arith.constant 0 : i32
    %c0_i32_1 = arith.constant 0 : i32
    return %c0_i32, %c0_i32_0 : i32, i32
  }
  func.func @transform_5(%arg0: i32) -> (i32, i32) {
    %c0_i32 = arith.constant 0 : i32
    %c0_i32_0 = arith.constant 0 : i32
    %c0_i32_1 = arith.constant 0 : i32
    return %c0_i32, %c0_i32_0 : i32, i32
  }
  func.func @transform_6(%arg0: i32) -> (i32, i32) {
    %c0_i32 = arith.constant 0 : i32
    %c0_i32_0 = arith.constant 0 : i32
    %c0_i32_1 = arith.constant 0 : i32
    return %c0_i32, %c0_i32_0 : i32, i32
  }
  func.func @transform_7(%arg0: i32) -> (i32, i32) {
    %c0_i32 = arith.constant 0 : i32
    %c0_i32_0 = arith.constant 0 : i32
    %c0_i32_1 = arith.constant 0 : i32
    return %c0_i32, %c0_i32_0 : i32, i32
  }
  func.func @transform_8(%arg0: i32) -> (i32, i32) {
    %c0_i32 = arith.constant 0 : i32
    %c0_i32_0 = arith.constant 0 : i32
    %c0_i32_1 = arith.constant 0 : i32
    return %c0_i32, %c0_i32_0 : i32, i32
  }
  func.func @transform_9(%arg0: i32) -> (i32, i32) {
    %c0_i32 = arith.constant 0 : i32
    %c0_i32_0 = arith.constant 0 : i32
    %c0_i32_1 = arith.constant 0 : i32
    return %c0_i32, %c0_i32_0 : i32, i32
  }
  func.func @transform_10(%arg0: i32) -> (i32, i32) {
    %c0_i32 = arith.constant 0 : i32
    %c0_i32_0 = arith.constant 0 : i32
    %c0_i32_1 = arith.constant 0 : i32
    return %c0_i32, %c0_i32_0 : i32, i32
  }
  func.func @transform_11(%arg0: i32) -> (i32, i32) {
    %c0_i32 = arith.constant 0 : i32
    %c0_i32_0 = arith.constant 0 : i32
    %c0_i32_1 = arith.constant 0 : i32
    return %c0_i32, %c0_i32_0 : i32, i32
  }
  func.func @transform_12(%arg0: i32) -> (i32, i32) {
    %c0_i32 = arith.constant 0 : i32
    %c0_i32_0 = arith.constant 0 : i32
    %c0_i32_1 = arith.constant 0 : i32
    return %c0_i32, %c0_i32_0 : i32, i32
  }
  func.func @transform_13(%arg0: i32) -> (i32, i32) {
    %c0_i32 = arith.constant 0 : i32
    %c0_i32_0 = arith.constant 0 : i32
    %c0_i32_1 = arith.constant 0 : i32
    return %c0_i32, %c0_i32_0 : i32, i32
  }
  func.func @transform_14(%arg0: i32) -> (i32, i32) {
    %c0_i32 = arith.constant 0 : i32
    %c0_i32_0 = arith.constant 0 : i32
    %c0_i32_1 = arith.constant 0 : i32
    return %c0_i32, %c0_i32_0 : i32, i32
  }
  func.func @transform_15(%arg0: i32) -> (i32, i32) {
    %c0_i32 = arith.constant 0 : i32
    %c0_i32_0 = arith.constant 0 : i32
    %c0_i32_1 = arith.constant 0 : i32
    return %c0_i32, %c0_i32_0 : i32, i32
  }
  func.func @transform_16(%arg0: i32) -> (i32, i32) {
    %c0_i32 = arith.constant 0 : i32
    %c0_i32_0 = arith.constant 0 : i32
    %c0_i32_1 = arith.constant 0 : i32
    return %c0_i32, %c0_i32_0 : i32, i32
  }
  func.func @transform_17(%arg0: i32) -> (i32, i32, i32) {
    %c0_i32 = arith.constant 0 : i32
    %c0_i32_0 = arith.constant 0 : i32
    %c0_i32_1 = arith.constant 0 : i32
    return %arg0, %c0_i32, %c0_i32_0 : i32, i32, i32
  }
}

</mosaic_0001>

<llo_original>
// kernel: tpu_custom_call.1
$region0: #{tpu_custom_call.1}
  #allocation0 [shape = 'u32[]', space=smem, size = 0x4, offset = 0x4, fixed_abs, tag = 'smem constant byte address 0x4 - core index']
  #allocation1 [shape = 'u32[144,128]{1,0:T(1,128)}', space=vmem, size = 0x12000, scoped, tag = 'internal scratch']
  %s0 = inlined_call_operand.vmem [shape: f32[4,8,32], index: 0, kind: input, shape index: {}]
  %s1 = inlined_call_operand.vmem [shape: f32[1,32], index: 1, kind: input, shape index: {}]
  %s2 = inlined_call_operand.hbm [shape: f32[1,32], index: 2, kind: input, shape index: {}]
  %s3 = inlined_call_operand.vmem [shape: bf16[32,32], index: 3, kind: input, shape index: {}]
  %s4 = inlined_call_operand.vmem [shape: bf16[32,32], index: 4, kind: input, shape index: {}]
  %s5 = inlined_call_operand.vmem [shape: bf16[32,32], index: 5, kind: input, shape index: {}]
  %s6 = inlined_call_operand.hbm [shape: f32[1,32], index: 6, kind: input, shape index: {}]
  %s7 = inlined_call_operand.hbm [shape: f32[1,32], index: 7, kind: input, shape index: {}]
  %s8 = inlined_call_operand.hbm [shape: f32[1,32], index: 8, kind: input, shape index: {}]
  %s9 = inlined_call_operand.vmem [shape: bf16[32,32], index: 9, kind: input, shape index: {}]
  %s10 = inlined_call_operand.hbm [shape: f32[1,32], index: 10, kind: input, shape index: {}]
  %s11 = inlined_call_operand.hbm [shape: f32[1,32], index: 11, kind: input, shape index: {}]
  %s12 = inlined_call_operand.hbm [shape: f32[1,32], index: 12, kind: input, shape index: {}]
  %s13 = inlined_call_operand.vmem [shape: bf16[32,128], index: 13, kind: input, shape index: {}]
  %s14 = inlined_call_operand.vmem [shape: f32[1,128], index: 14, kind: input, shape index: {}]
  %s15 = inlined_call_operand.vmem [shape: bf16[128,32], index: 15, kind: input, shape index: {}]
  %s16 = inlined_call_operand.vmem [shape: f32[1,32], index: 16, kind: input, shape index: {}]
  %s17 = inlined_call_operand.hbm [shape: f32[4,8,32], index: 17, kind: output, shape index: {}]
  %s18 = sld [smem:[#allocation0]]
  $region129: #{tpu_custom_call.1} parent=0
    _
  %s20 = ssub.s32 1, %s18
  %s21 = scalar_select 0, %s20, %s18
  $region1: #{tpu_custom_call.1} parent=0
    #allocation2 [shape = 'u8[512]{0}', space=vmem, size = 0x400, scoped, tag = 'input window, operand 2, single buffered']
    #allocation3 [shape = 's32[2]{0}', space=sflag, size = 0x8, scoped, tag = 'scoped memory for tpu_custom_call.1']
    #allocation4 [shape = 's32[2]{0}', space=sflag, size = 0x8, scoped, tag = 'scoped memory for tpu_custom_call.1']
    #allocation5 [shape = 'u8[512]{0}', space=vmem, size = 0x400, scoped, tag = 'input window, operand 6, single buffered']
    #allocation6 [shape = 's32[1]{0}', space=sflag, size = 0x4, scoped, tag = 'scoped memory for tpu_custom_call.1']
    #allocation7 [shape = 'u8[512]{0}', space=vmem, size = 0x400, scoped, tag = 'input window, operand 7, single buffered']
    #allocation8 [shape = 'u8[512]{0}', space=vmem, size = 0x400, scoped, tag = 'input window, operand 8, single buffered']
    #allocation9 [shape = 's32[1]{0}', space=sflag, size = 0x4, scoped, tag = 'scoped memory for tpu_custom_call.1']
    #allocation10 [shape = 'u8[512]{0}', space=vmem, size = 0x400, scoped, tag = 'input window, operand 10, single buffered']
    #allocation11 [shape = 'u8[512]{0}', space=vmem, size = 0x400, scoped, tag = 'input window, operand 11, single buffered']
    #allocation12 [shape = 's32[1]{0}', space=sflag, size = 0x4, scoped, tag = 'scoped memory for tpu_custom_call.1']
    #allocation13 [shape = 'u8[512]{0}', space=vmem, size = 0x400, scoped, tag = 'input window, operand 12, single buffered']
    #allocation14 [shape = 'u8[16384]{0}', space=vmem, size = 0x4000, scoped, tag = 'output window, operand 0']
    %22 = vsyncpa [#allocation3], 0
    %23 = vsyncpa [#allocation6], 0
    %24 = vsyncpa [#allocation9], 0
    %25 = vsyncpa [#allocation12], 0
    %26 = vsyncpa [#allocation4], 0
    %s27 = scalar_lea.sflag [#allocation4], 1
    %28 = vsyncpa %s27, 0
    loop: start=0, step=1, limit=4
    $region2: #{tpu_custom_call.1} parent=1 // loop_pre_header
      _
    $region3: #{tpu_custom_call.1} parent=1 // loop_header
      %s30 = sphi 0, %s34
      %p31 = scmp.ge.s32.totalorder %s30, 4
      %s40 = sphi 0, %s42
      %s43 = sphi 0, %s40
      %s44 = sphi 0, %s43
      %s60 = sphi 0, %s44
      %s64 = sphi 0, %s64
      %s66 = sphi 0, %s64
      %s67 = sphi 0, %s66
      %s81 = sphi 0, %s67
      %s85 = sphi 0, %s85
      %s87 = sphi 0, %s85
      %s88 = sphi 0, %s87
      %s102 = sphi 0, %s88
      %s106 = sphi 0, %s106
      %s108 = sphi 0, %s106
      %s109 = sphi 0, %s108
      %s123 = sphi 0, %s109
      %s127 = sphi 0, %s127
      %s129 = sphi 0, %s127
      %s130 = sphi 0, %s129
      %s144 = sphi 0, %s130
      %s148 = sphi 0, %s148
      %s150 = sphi 0, %s148
      %s151 = sphi 0, %s150
      %s165 = sphi 0, %s151
      %s169 = sphi 0, %s169
      %s171 = sphi 0, %s169
      %s172 = sphi 0, %s171
      %s186 = sphi 0, %s172
      %s190 = sphi 0, %s190
      %s192 = sphi 0, %s190
      %s193 = sphi 0, %s192
      %s207 = sphi 0, %s193
      %s211 = sphi 0, %s211
      %s213 = sphi 0, %s211
      %s214 = sphi 0, %s213
      %s228 = sphi 0, %s214
      %s232 = sphi 0, %s232
      %s234 = sphi 0, %s232
      %s235 = sphi 0, %s234
      %s249 = sphi 0, %s235
      %s253 = sphi 0, %s253
      %s255 = sphi 0, %s253
      %s256 = sphi 0, %s255
      %s270 = sphi 0, %s256
      %s274 = sphi 0, %s274
      %s276 = sphi 0, %s274
      %s277 = sphi 0, %s276
      %s291 = sphi 0, %s277
      %s295 = sphi 0, %s295
      %s297 = sphi 0, %s295
      %s298 = sphi 0, %s297
      %s312 = sphi 0, %s298
      %s316 = sphi 0, %s316
      %s318 = sphi 0, %s316
      %s319 = sphi 0, %s318
      %s333 = sphi 0, %s319
      %s337 = sphi 0, %s337
      %s339 = sphi 0, %s337
      %s340 = sphi 0, %s339
      %s354 = sphi 0, %s340
      %s358 = sphi 0, %s358
      %s360 = sphi 0, %s358
      %s361 = sphi 0, %s360
      %s375 = sphi 0, %s361
      %s379 = sphi 0, %s379
      %s381 = sphi 0, %s379
      %s382 = sphi 0, %s381
      %s396 = sphi 0, %s382
      %s402 = sphi 0, %s404
      %s405 = sphi 0, %s402
      %s406 = sphi 0, %s405
      %s422 = sphi 0, %s406
    $region4: #{tpu_custom_call.1} parent=1 // loop_header_branch
      %33 = sbr.rel (%p31) target = $region8
    $region5: #{tpu_custom_call.1} parent=1 // loop_body
      %s35 = ssub.s32 %s30, 1
      %s36 = ssub.s32 %s30, 2
      %s37 = sadd.s32 %s30, 1
      %s38 = ssub.s32 %s30, %s37
      %p39 = scmp.eq.s32.totalorder %s38, 0
      %s41 = sadd.s32 %s40, 1
      %s42 = scalar_select %p39, %s40, %s41
      %p45 = pneg %p39
      %p46 = scmp.eq.s32.totalorder %s30, 1
      %p47 = por %p45, %p46
      %p48 = scmp.ne.s32.totalorder %s40, %s43
      %p49 = scmp.eq.s32.totalorder %s30, 0
      %p50 = por %p48, %p49
      %p51 = scmp.ne.s32.totalorder %s40, %s43
      %p52 = scmp.eq.s32.totalorder %s35, 1
      %p53 = por %p51, %p52
      %p54 = scmp.ne.s32.totalorder %s43, %s44
      %p55 = scmp.eq.s32.totalorder %s35, 0
      %p56 = por %p54, %p55
      %p57 = scmp.ne.s32.totalorder %s43, %s44
      %p58 = scmp.eq.s32.totalorder %s36, 1
      %p59 = por %p57, %p58
      %p61 = scmp.ne.s32.totalorder %s44, %s60
      %p62 = scmp.eq.s32.totalorder %s36, 0
      %p63 = por %p61, %p62
      %s65 = sadd.s32 %s64, 1
      %p68 = scmp.eq.s32.totalorder %s30, 1
      %p69 = scmp.ne.s32.totalorder %s64, %s66
      %p70 = scmp.eq.s32.totalorder %s30, 0
      %p71 = por %p69, %p70
      %p72 = scmp.ne.s32.totalorder %s64, %s66
      %p73 = scmp.eq.s32.totalorder %s35, 1
      %p74 = por %p72, %p73
      %p75 = scmp.ne.s32.totalorder %s66, %s67
      %p76 = scmp.eq.s32.totalorder %s35, 0
      %p77 = por %p75, %p76
      %p78 = scmp.ne.s32.totalorder %s66, %s67
      %p79 = scmp.eq.s32.totalorder %s36, 1
      %p80 = por %p78, %p79
      %p82 = scmp.ne.s32.totalorder %s67, %s81
      %p83 = scmp.eq.s32.totalorder %s36, 0
      %p84 = por %p82, %p83
      %s86 = sadd.s32 %s85, 1
      %p89 = scmp.eq.s32.totalorder %s30, 1
      %p90 = scmp.ne.s32.totalorder %s85, %s87
      %p91 = scmp.eq.s32.totalorder %s30, 0
      %p92 = por %p90, %p91
      %p93 = scmp.ne.s32.totalorder %s85, %s87
      %p94 = scmp.eq.s32.totalorder %s35, 1
      %p95 = por %p93, %p94
      %p96 = scmp.ne.s32.totalorder %s87, %s88
      %p97 = scmp.eq.s32.totalorder %s35, 0
      %p98 = por %p96, %p97
      %p99 = scmp.ne.s32.totalorder %s87, %s88
      %p100 = scmp.eq.s32.totalorder %s36, 1
      %p101 = por %p99, %p100
      %p103 = scmp.ne.s32.totalorder %s88, %s102
      %p104 = scmp.eq.s32.totalorder %s36, 0
      %p105 = por %p103, %p104
      %s107 = sadd.s32 %s106, 1
      %p110 = scmp.eq.s32.totalorder %s30, 1
      %p111 = scmp.ne.s32.totalorder %s106, %s108
      %p112 = scmp.eq.s32.totalorder %s30, 0
      %p113 = por %p111, %p112
      %p114 = scmp.ne.s32.totalorder %s106, %s108
      %p115 = scmp.eq.s32.totalorder %s35, 1
      %p116 = por %p114, %p115
      %p117 = scmp.ne.s32.totalorder %s108, %s109
      %p118 = scmp.eq.s32.totalorder %s35, 0
      %p119 = por %p117, %p118
      %p120 = scmp.ne.s32.totalorder %s108, %s109
      %p121 = scmp.eq.s32.totalorder %s36, 1
      %p122 = por %p120, %p121
      %p124 = scmp.ne.s32.totalorder %s109, %s123
      %p125 = scmp.eq.s32.totalorder %s36, 0
      %p126 = por %p124, %p125
      %s128 = sadd.s32 %s127, 1
      %p131 = scmp.eq.s32.totalorder %s30, 1
      %p132 = scmp.ne.s32.totalorder %s127, %s129
      %p133 = scmp.eq.s32.totalorder %s30, 0
      %p134 = por %p132, %p133
      %p135 = scmp.ne.s32.totalorder %s127, %s129
      %p136 = scmp.eq.s32.totalorder %s35, 1
      %p137 = por %p135, %p136
      %p138 = scmp.ne.s32.totalorder %s129, %s130
      %p139 = scmp.eq.s32.totalorder %s35, 0
      %p140 = por %p138, %p139
      %p141 = scmp.ne.s32.totalorder %s129, %s130
      %p142 = scmp.eq.s32.totalorder %s36, 1
      %p143 = por %p141, %p142
      %p145 = scmp.ne.s32.totalorder %s130, %s144
      %p146 = scmp.eq.s32.totalorder %s36, 0
      %p147 = por %p145, %p146
      %s149 = sadd.s32 %s148, 1
      %p152 = scmp.eq.s32.totalorder %s30, 1
      %p153 = scmp.ne.s32.totalorder %s148, %s150
      %p154 = scmp.eq.s32.totalorder %s30, 0
      %p155 = por %p153, %p154
      %p156 = scmp.ne.s32.totalorder %s148, %s150
      %p157 = scmp.eq.s32.totalorder %s35, 1
      %p158 = por %p156, %p157
      %p159 = scmp.ne.s32.totalorder %s150, %s151
      %p160 = scmp.eq.s32.totalorder %s35, 0
      %p161 = por %p159, %p160
      %p162 = scmp.ne.s32.totalorder %s150, %s151
      %p163 = scmp.eq.s32.totalorder %s36, 1
      %p164 = por %p162, %p163
      %p166 = scmp.ne.s32.totalorder %s151, %s165
      %p167 = scmp.eq.s32.totalorder %s36, 0
      %p168 = por %p166, %p167
      %s170 = sadd.s32 %s169, 1
      %p173 = scmp.eq.s32.totalorder %s30, 1
      %p174 = scmp.ne.s32.totalorder %s169, %s171
      %p175 = scmp.eq.s32.totalorder %s30, 0
      %p176 = por %p174, %p175
      %p177 = scmp.ne.s32.totalorder %s169, %s171
      %p178 = scmp.eq.s32.totalorder %s35, 1
      %p179 = por %p177, %p178
      %p180 = scmp.ne.s32.totalorder %s171, %s172
      %p181 = scmp.eq.s32.totalorder %s35, 0
      %p182 = por %p180, %p181
      %p183 = scmp.ne.s32.totalorder %s171, %s172
      %p184 = scmp.eq.s32.totalorder %s36, 1
      %p185 = por %p183, %p184
      %p187 = scmp.ne.s32.totalorder %s172, %s186
      %p188 = scmp.eq.s32.totalorder %s36, 0
      %p189 = por %p187, %p188
      %s191 = sadd.s32 %s190, 1
      %p194 = scmp.eq.s32.totalorder %s30, 1
      %p195 = scmp.ne.s32.totalorder %s190, %s192
      %p196 = scmp.eq.s32.totalorder %s30, 0
      %p197 = por %p195, %p196
      %p198 = scmp.ne.s32.totalorder %s190, %s192
      %p199 = scmp.eq.s32.totalorder %s35, 1
      %p200 = por %p198, %p199
      %p201 = scmp.ne.s32.totalorder %s192, %s193
      %p202 = scmp.eq.s32.totalorder %s35, 0
      %p203 = por %p201, %p202
      %p204 = scmp.ne.s32.totalorder %s192, %s193
      %p205 = scmp.eq.s32.totalorder %s36, 1
      %p206 = por %p204, %p205
      %p208 = scmp.ne.s32.totalorder %s193, %s207
      %p209 = scmp.eq.s32.totalorder %s36, 0
      %p210 = por %p208, %p209
      %s212 = sadd.s32 %s211, 1
      %p215 = scmp.eq.s32.totalorder %s30, 1
      %p216 = scmp.ne.s32.totalorder %s211, %s213
      %p217 = scmp.eq.s32.totalorder %s30, 0
      %p218 = por %p216, %p217
      %p219 = scmp.ne.s32.totalorder %s211, %s213
      %p220 = scmp.eq.s32.totalorder %s35, 1
      %p221 = por %p219, %p220
      %p222 = scmp.ne.s32.totalorder %s213, %s214
      %p223 = scmp.eq.s32.totalorder %s35, 0
      %p224 = por %p222, %p223
      %p225 = scmp.ne.s32.totalorder %s213, %s214
      %p226 = scmp.eq.s32.totalorder %s36, 1
      %p227 = por %p225, %p226
      %p229 = scmp.ne.s32.totalorder %s214, %s228
      %p230 = scmp.eq.s32.totalorder %s36, 0
      %p231 = por %p229, %p230
      %s233 = sadd.s32 %s232, 1
      %p236 = scmp.eq.s32.totalorder %s30, 1
      %p237 = scmp.ne.s32.totalorder %s232, %s234
      %p238 = scmp.eq.s32.totalorder %s30, 0
      %p239 = por %p237, %p238
      %p240 = scmp.ne.s32.totalorder %s232, %s234
      %p241 = scmp.eq.s32.totalorder %s35, 1
      %p242 = por %p240, %p241
      %p243 = scmp.ne.s32.totalorder %s234, %s235
      %p244 = scmp.eq.s32.totalorder %s35, 0
      %p245 = por %p243, %p244
      %p246 = scmp.ne.s32.totalorder %s234, %s235
      %p247 = scmp.eq.s32.totalorder %s36, 1
      %p248 = por %p246, %p247
      %p250 = scmp.ne.s32.totalorder %s235, %s249
      %p251 = scmp.eq.s32.totalorder %s36, 0
      %p252 = por %p250, %p251
      %s254 = sadd.s32 %s253, 1
      %p257 = scmp.eq.s32.totalorder %s30, 1
      %p258 = scmp.ne.s32.totalorder %s253, %s255
      %p259 = scmp.eq.s32.totalorder %s30, 0
      %p260 = por %p258, %p259
      %p261 = scmp.ne.s32.totalorder %s253, %s255
      %p262 = scmp.eq.s32.totalorder %s35, 1
      %p263 = por %p261, %p262
      %p264 = scmp.ne.s32.totalorder %s255, %s256
      %p265 = scmp.eq.s32.totalorder %s35, 0
      %p266 = por %p264, %p265
      %p267 = scmp.ne.s32.totalorder %s255, %s256
      %p268 = scmp.eq.s32.totalorder %s36, 1
      %p269 = por %p267, %p268
      %p271 = scmp.ne.s32.totalorder %s256, %s270
      %p272 = scmp.eq.s32.totalorder %s36, 0
      %p273 = por %p271, %p272
      %s275 = sadd.s32 %s274, 1
      %p278 = scmp.eq.s32.totalorder %s30, 1
      %p279 = scmp.ne.s32.totalorder %s274, %s276
      %p280 = scmp.eq.s32.totalorder %s30, 0
      %p281 = por %p279, %p280
      %p282 = scmp.ne.s32.totalorder %s274, %s276
      %p283 = scmp.eq.s32.totalorder %s35, 1
      %p284 = por %p282, %p283
      %p285 = scmp.ne.s32.totalorder %s276, %s277
      %p286 = scmp.eq.s32.totalorder %s35, 0
      %p287 = por %p285, %p286
      %p288 = scmp.ne.s32.totalorder %s276, %s277
      %p289 = scmp.eq.s32.totalorder %s36, 1
      %p290 = por %p288, %p289
      %p292 = scmp.ne.s32.totalorder %s277, %s291
      %p293 = scmp.eq.s32.totalorder %s36, 0
      %p294 = por %p292, %p293
      %s296 = sadd.s32 %s295, 1
      %p299 = scmp.eq.s32.totalorder %s30, 1
      %p300 = scmp.ne.s32.totalorder %s295, %s297
      %p301 = scmp.eq.s32.totalorder %s30, 0
      %p302 = por %p300, %p301
      %p303 = scmp.ne.s32.totalorder %s295, %s297
      %p304 = scmp.eq.s32.totalorder %s35, 1
      %p305 = por %p303, %p304
      %p306 = scmp.ne.s32.totalorder %s297, %s298
      %p307 = scmp.eq.s32.totalorder %s35, 0
      %p308 = por %p306, %p307
      %p309 = scmp.ne.s32.totalorder %s297, %s298
      %p310 = scmp.eq.s32.totalorder %s36, 1
      %p311 = por %p309, %p310
      %p313 = scmp.ne.s32.totalorder %s298, %s312
      %p314 = scmp.eq.s32.totalorder %s36, 0
      %p315 = por %p313, %p314
      %s317 = sadd.s32 %s316, 1
      %p320 = scmp.eq.s32.totalorder %s30, 1
      %p321 = scmp.ne.s32.totalorder %s316, %s318
      %p322 = scmp.eq.s32.totalorder %s30, 0
      %p323 = por %p321, %p322
      %p324 = scmp.ne.s32.totalorder %s316, %s318
      %p325 = scmp.eq.s32.totalorder %s35, 1
      %p326 = por %p324, %p325
      %p327 = scmp.ne.s32.totalorder %s318, %s319
      %p328 = scmp.eq.s32.totalorder %s35, 0
      %p329 = por %p327, %p328
      %p330 = scmp.ne.s32.totalorder %s318, %s319
      %p331 = scmp.eq.s32.totalorder %s36, 1
      %p332 = por %p330, %p331
      %p334 = scmp.ne.s32.totalorder %s319, %s333
      %p335 = scmp.eq.s32.totalorder %s36, 0
      %p336 = por %p334, %p335
      %s338 = sadd.s32 %s337, 1
      %p341 = scmp.eq.s32.totalorder %s30, 1
      %p342 = scmp.ne.s32.totalorder %s337, %s339
      %p343 = scmp.eq.s32.totalorder %s30, 0
      %p344 = por %p342, %p343
      %p345 = scmp.ne.s32.totalorder %s337, %s339
      %p346 = scmp.eq.s32.totalorder %s35, 1
      %p347 = por %p345, %p346
      %p348 = scmp.ne.s32.totalorder %s339, %s340
      %p349 = scmp.eq.s32.totalorder %s35, 0
      %p350 = por %p348, %p349
      %p351 = scmp.ne.s32.totalorder %s339, %s340
      %p352 = scmp.eq.s32.totalorder %s36, 1
      %p353 = por %p351, %p352
      %p355 = scmp.ne.s32.totalorder %s340, %s354
      %p356 = scmp.eq.s32.totalorder %s36, 0
      %p357 = por %p355, %p356
      %s359 = sadd.s32 %s358, 1
      %p362 = scmp.eq.s32.totalorder %s30, 1
      %p363 = scmp.ne.s32.totalorder %s358, %s360
      %p364 = scmp.eq.s32.totalorder %s30, 0
      %p365 = por %p363, %p364
      %p366 = scmp.ne.s32.totalorder %s358, %s360
      %p367 = scmp.eq.s32.totalorder %s35, 1
      %p368 = por %p366, %p367
      %p369 = scmp.ne.s32.totalorder %s360, %s361
      %p370 = scmp.eq.s32.totalorder %s35, 0
      %p371 = por %p369, %p370
      %p372 = scmp.ne.s32.totalorder %s360, %s361
      %p373 = scmp.eq.s32.totalorder %s36, 1
      %p374 = por %p372, %p373
      %p376 = scmp.ne.s32.totalorder %s361, %s375
      %p377 = scmp.eq.s32.totalorder %s36, 0
      %p378 = por %p376, %p377
      %s380 = sadd.s32 %s379, 1
      %p383 = scmp.eq.s32.totalorder %s30, 1
      %p384 = scmp.ne.s32.totalorder %s379, %s381
      %p385 = scmp.eq.s32.totalorder %s30, 0
      %p386 = por %p384, %p385
      %p387 = scmp.ne.s32.totalorder %s379, %s381
      %p388 = scmp.eq.s32.totalorder %s35, 1
      %p389 = por %p387, %p388
      %p390 = scmp.ne.s32.totalorder %s381, %s382
      %p391 = scmp.eq.s32.totalorder %s35, 0
      %p392 = por %p390, %p391
      %p393 = scmp.ne.s32.totalorder %s381, %s382
      %p394 = scmp.eq.s32.totalorder %s36, 1
      %p395 = por %p393, %p394
      %p397 = scmp.ne.s32.totalorder %s382, %s396
      %p398 = scmp.eq.s32.totalorder %s36, 0
      %p399 = por %p397, %p398
      %s400 = ssub.s32 %s30, %s37
      %p401 = scmp.eq.s32.totalorder %s400, 0
      %s403 = sadd.s32 %s402, 1
      %s404 = scalar_select %p401, %s402, %s403
      %p407 = pneg %p401
      %p408 = scmp.eq.s32.totalorder %s30, 1
      %p409 = por %p407, %p408
      %p410 = scmp.ne.s32.totalorder %s402, %s405
      %p411 = scmp.eq.s32.totalorder %s30, 0
      %p412 = por %p410, %p411
      %p413 = scmp.ne.s32.totalorder %s402, %s405
      %p414 = scmp.eq.s32.totalorder %s35, 1
      %p415 = por %p413, %p414
      %p416 = scmp.ne.s32.totalorder %s405, %s406
      %p417 = scmp.eq.s32.totalorder %s35, 0
      %p418 = por %p416, %p417
      %p419 = scmp.ne.s32.totalorder %s405, %s406
      %p420 = scmp.eq.s32.totalorder %s36, 1
      %p421 = por %p419, %p420
      %p423 = scmp.ne.s32.totalorder %s406, %s422
      %p424 = scmp.eq.s32.totalorder %s36, 0
      %p425 = por %p423, %p424
      %p426 = scmp.le.s32.totalorder 1, %s30
      %p427 = scmp.lt.s32.totalorder %s30, 3
      %p428 = pnand %p426, %p427
      %p429 = pneg %p428
      // Predicated region
      $region9: #{tpu_custom_call.1} parent=5 // pred_check
        _
      $region10: #{tpu_custom_call.1} parent=5 // pred_check_branch
        %431 = sbr.rel (%p428) target = $region12
      $region11: #{tpu_custom_call.1} parent=5 // pred_region
        %s432 = ssub.s32 %s30, 1
        // Predicated region
        $region13: #{tpu_custom_call.1} parent=11 // pred_check
          %p433 = pneg %p77
        $region14: #{tpu_custom_call.1} parent=11 // pred_check_branch
          %435 = sbr.rel (%p433) target = $region16
        $region15: #{tpu_custom_call.1} parent=11 // pred_region
          _
        $region16: #{tpu_custom_call.1} parent=11 // pred_fallthru
          _
        // Predicated region
        $region17: #{tpu_custom_call.1} parent=11 // pred_check
          %p436 = pneg %p98
        $region18: #{tpu_custom_call.1} parent=11 // pred_check_branch
          %438 = sbr.rel (%p436) target = $region20
        $region19: #{tpu_custom_call.1} parent=11 // pred_region
          %s440 = ssub.s32 16, 16
          %441 = vsyncadd [#allocation3], %s440
          %s443 = sshll.u32 [#allocation2], 4
          %s444 = int_to_ptr.vmem [resolvable:$true] %s443
          %446 = dma.hbm_to_vmem [thread:$0]  %s2, 16, %s444, [#allocation3]
        $region20: #{tpu_custom_call.1} parent=11 // pred_fallthru
          _
        // Predicated region
        $region21: #{tpu_custom_call.1} parent=11 // pred_check
          %p447 = pneg %p119
        $region22: #{tpu_custom_call.1} parent=11 // pred_check_branch
          %449 = sbr.rel (%p447) target = $region24
        $region23: #{tpu_custom_call.1} parent=11 // pred_region
          _
        $region24: #{tpu_custom_call.1} parent=11 // pred_fallthru
          _
        // Predicated region
        $region25: #{tpu_custom_call.1} parent=11 // pred_check
          %p450 = pneg %p140
        $region26: #{tpu_custom_call.1} parent=11 // pred_check_branch
          %452 = sbr.rel (%p450) target = $region28
        $region27: #{tpu_custom_call.1} parent=11 // pred_region
          _
        $region28: #{tpu_custom_call.1} parent=11 // pred_fallthru
          _
        // Predicated region
        $region29: #{tpu_custom_call.1} parent=11 // pred_check
          %p453 = pneg %p161
        $region30: #{tpu_custom_call.1} parent=11 // pred_check_branch
          %455 = sbr.rel (%p453) target = $region32
        $region31: #{tpu_custom_call.1} parent=11 // pred_region
          _
        $region32: #{tpu_custom_call.1} parent=11 // pred_fallthru
          _
        // Predicated region
        $region33: #{tpu_custom_call.1} parent=11 // pred_check
          %p456 = pneg %p182
        $region34: #{tpu_custom_call.1} parent=11 // pred_check_branch
          %458 = sbr.rel (%p456) target = $region36
        $region35: #{tpu_custom_call.1} parent=11 // pred_region
          %s460 = ssub.s32 16, 16
          %461 = vsyncadd [#allocation6], %s460
          %s463 = sshll.u32 [#allocation5], 4
          %s464 = int_to_ptr.vmem [resolvable:$true] %s463
          %466 = dma.hbm_to_vmem [thread:$0]  %s6, 16, %s464, [#allocation6]
        $region36: #{tpu_custom_call.1} parent=11 // pred_fallthru
          _
        // Predicated region
        $region37: #{tpu_custom_call.1} parent=11 // pred_check
          %p467 = pneg %p203
        $region38: #{tpu_custom_call.1} parent=11 // pred_check_branch
          %469 = sbr.rel (%p467) target = $region40
        $region39: #{tpu_custom_call.1} parent=11 // pred_region
          %s471 = ssub.s32 16, 16
          %472 = vsyncadd [#allocation6], %s471
          %s474 = sshll.u32 [#allocation7], 4
          %s475 = int_to_ptr.vmem [resolvable:$true] %s474
          %477 = dma.hbm_to_vmem [thread:$0]  %s7, 16, %s475, [#allocation6]
        $region40: #{tpu_custom_call.1} parent=11 // pred_fallthru
          _
        // Predicated region
        $region41: #{tpu_custom_call.1} parent=11 // pred_check
          %p478 = pneg %p224
        $region42: #{tpu_custom_call.1} parent=11 // pred_check_branch
          %480 = sbr.rel (%p478) target = $region44
        $region43: #{tpu_custom_call.1} parent=11 // pred_region
          %s482 = ssub.s32 16, 16
          %483 = vsyncadd [#allocation9], %s482
          %s485 = sshll.u32 [#allocation8], 4
          %s486 = int_to_ptr.vmem [resolvable:$true] %s485
          %488 = dma.hbm_to_vmem [thread:$0]  %s8, 16, %s486, [#allocation9]
        $region44: #{tpu_custom_call.1} parent=11 // pred_fallthru
          _
        // Predicated region
        $region45: #{tpu_custom_call.1} parent=11 // pred_check
          %p489 = pneg %p245
        $region46: #{tpu_custom_call.1} parent=11 // pred_check_branch
          %491 = sbr.rel (%p489) target = $region48
        $region47: #{tpu_custom_call.1} parent=11 // pred_region
          _
        $region48: #{tpu_custom_call.1} parent=11 // pred_fallthru
          _
        // Predicated region
        $region49: #{tpu_custom_call.1} parent=11 // pred_check
          %p492 = pneg %p266
        $region50: #{tpu_custom_call.1} parent=11 // pred_check_branch
          %494 = sbr.rel (%p492) target = $region52
        $region51: #{tpu_custom_call.1} parent=11 // pred_region
          %s496 = ssub.s32 16, 16
          %497 = vsyncadd [#allocation9], %s496
          %s499 = sshll.u32 [#allocation10], 4
          %s500 = int_to_ptr.vmem [resolvable:$true] %s499
          %502 = dma.hbm_to_vmem [thread:$0]  %s10, 16, %s500, [#allocation9]
        $region52: #{tpu_custom_call.1} parent=11 // pred_fallthru
          _
        // Predicated region
        $region53: #{tpu_custom_call.1} parent=11 // pred_check
          %p503 = pneg %p287
        $region54: #{tpu_custom_call.1} parent=11 // pred_check_branch
          %505 = sbr.rel (%p503) target = $region56
        $region55: #{tpu_custom_call.1} parent=11 // pred_region
          %s507 = ssub.s32 16, 16
          %508 = vsyncadd [#allocation12], %s507
          %s510 = sshll.u32 [#allocation11], 4
          %s511 = int_to_ptr.vmem [resolvable:$true] %s510
          %513 = dma.hbm_to_vmem [thread:$0]  %s11, 16, %s511, [#allocation12]
        $region56: #{tpu_custom_call.1} parent=11 // pred_fallthru
          _
        // Predicated region
        $region57: #{tpu_custom_call.1} parent=11 // pred_check
          %p514 = pneg %p308
        $region58: #{tpu_custom_call.1} parent=11 // pred_check_branch
          %516 = sbr.rel (%p514) target = $region60
        $region59: #{tpu_custom_call.1} parent=11 // pred_region
          %s518 = ssub.s32 16, 16
          %519 = vsyncadd [#allocation12], %s518
          %s521 = sshll.u32 [#allocation13], 4
          %s522 = int_to_ptr.vmem [resolvable:$true] %s521
          %524 = dma.hbm_to_vmem [thread:$0]  %s12, 16, %s522, [#allocation12]
        $region60: #{tpu_custom_call.1} parent=11 // pred_fallthru
          _
        // Predicated region
        $region61: #{tpu_custom_call.1} parent=11 // pred_check
          %p525 = pneg %p329
        $region62: #{tpu_custom_call.1} parent=11 // pred_check_branch
          %527 = sbr.rel (%p525) target = $region64
        $region63: #{tpu_custom_call.1} parent=11 // pred_region
          _
        $region64: #{tpu_custom_call.1} parent=11 // pred_fallthru
          _
        // Predicated region
        $region65: #{tpu_custom_call.1} parent=11 // pred_check
          %p528 = pneg %p350
        $region66: #{tpu_custom_call.1} parent=11 // pred_check_branch
          %530 = sbr.rel (%p528) target = $region68
        $region67: #{tpu_custom_call.1} parent=11 // pred_region
          _
        $region68: #{tpu_custom_call.1} parent=11 // pred_fallthru
          _
        // Predicated region
        $region69: #{tpu_custom_call.1} parent=11 // pred_check
          %p531 = pneg %p371
        $region70: #{tpu_custom_call.1} parent=11 // pred_check_branch
          %533 = sbr.rel (%p531) target = $region72
        $region71: #{tpu_custom_call.1} parent=11 // pred_region
          _
        $region72: #{tpu_custom_call.1} parent=11 // pred_fallthru
          _
        // Predicated region
        $region73: #{tpu_custom_call.1} parent=11 // pred_check
          %p534 = pneg %p392
        $region74: #{tpu_custom_call.1} parent=11 // pred_check_branch
          %536 = sbr.rel (%p534) target = $region76
        $region75: #{tpu_custom_call.1} parent=11 // pred_region
          _
        $region76: #{tpu_custom_call.1} parent=11 // pred_fallthru
          _
      $region12: #{tpu_custom_call.1} parent=5 // pred_fallthru
        _
      %p537 = scmp.lt.s32.totalorder %s30, 2
      // Predicated region
      $region77: #{tpu_custom_call.1} parent=5 // pred_check
        %p538 = pneg %p537
      $region78: #{tpu_custom_call.1} parent=5 // pred_check_branch
        %540 = sbr.rel (%p538) target = $region80
      $region79: #{tpu_custom_call.1} parent=5 // pred_region
        // Predicated region
        $region81: #{tpu_custom_call.1} parent=79 // pred_check
          %p541 = pneg %p50
        $region82: #{tpu_custom_call.1} parent=79 // pred_check_branch
          %543 = sbr.rel (%p541) target = $region84
        $region83: #{tpu_custom_call.1} parent=79 // pred_region
          %s544 = smul.u32 2, %s30
          %p545 = scmp.lt.s32.totalorder %s544, 3
          %s546 = scalar_select %p545, %s544, 3
          %s547 = smul.addr %s546, 8
          %s548 = scalar_lea.vmem %s0, %s547
          %s549 = smul.u32 2, %s30
        $region84: #{tpu_custom_call.1} parent=79 // pred_fallthru
          _
      $region80: #{tpu_custom_call.1} parent=5 // pred_fallthru
        _
      %p550 = scmp.le.s32.totalorder 1, %s30
      %p551 = scmp.lt.s32.totalorder %s30, 3
      %p552 = pnand %p550, %p551
      %p553 = pneg %p552
      // Predicated region
      $region85: #{tpu_custom_call.1} parent=5 // pred_check
        _
      $region86: #{tpu_custom_call.1} parent=5 // pred_check_branch
        %555 = sbr.rel (%p552) target = $region88
      $region87: #{tpu_custom_call.1} parent=5 // pred_region
        %s556 = ssub.s32 %s30, 1
        // Predicated region
        $region89: #{tpu_custom_call.1} parent=87 // pred_check
          %p557 = pneg %p98
        $region90: #{tpu_custom_call.1} parent=87 // pred_check_branch
          %559 = sbr.rel (%p557) target = $region92
        $region91: #{tpu_custom_call.1} parent=87 // pred_region
          %560 = dma.done [#allocation3], 16
        $region92: #{tpu_custom_call.1} parent=87 // pred_fallthru
          _
        // Predicated region
        $region93: #{tpu_custom_call.1} parent=87 // pred_check
          %p561 = pneg %p182
        $region94: #{tpu_custom_call.1} parent=87 // pred_check_branch
          %563 = sbr.rel (%p561) target = $region96
        $region95: #{tpu_custom_call.1} parent=87 // pred_region
          %564 = dma.done [#allocation6], 16
        $region96: #{tpu_custom_call.1} parent=87 // pred_fallthru
          _
        // Predicated region
        $region97: #{tpu_custom_call.1} parent=87 // pred_check
          %p565 = pneg %p203
        $region98: #{tpu_custom_call.1} parent=87 // pred_check_branch
          %567 = sbr.rel (%p565) target = $region100
        $region99: #{tpu_custom_call.1} parent=87 // pred_region
          %568 = dma.done [#allocation6], 16
        $region100: #{tpu_custom_call.1} parent=87 // pred_fallthru
          _
        // Predicated region
        $region101: #{tpu_custom_call.1} parent=87 // pred_check
          %p569 = pneg %p224
        $region102: #{tpu_custom_call.1} parent=87 // pred_check_branch
          %571 = sbr.rel (%p569) target = $region104
        $region103: #{tpu_custom_call.1} parent=87 // pred_region
          %572 = dma.done [#allocation9], 16
        $region104: #{tpu_custom_call.1} parent=87 // pred_fallthru
          _
        // Predicated region
        $region105: #{tpu_custom_call.1} parent=87 // pred_check
          %p573 = pneg %p266
        $region106: #{tpu_custom_call.1} parent=87 // pred_check_branch
          %575 = sbr.rel (%p573) target = $region108
        $region107: #{tpu_custom_call.1} parent=87 // pred_region
          %576 = dma.done [#allocation9], 16
        $region108: #{tpu_custom_call.1} parent=87 // pred_fallthru
          _
        // Predicated region
        $region109: #{tpu_custom_call.1} parent=87 // pred_check
          %p577 = pneg %p287
        $region110: #{tpu_custom_call.1} parent=87 // pred_check_branch
          %579 = sbr.rel (%p577) target = $region112
        $region111: #{tpu_custom_call.1} parent=87 // pred_region
          %580 = dma.done [#allocation12], 16
        $region112: #{tpu_custom_call.1} parent=87 // pred_fallthru
          _
        // Predicated region
        $region113: #{tpu_custom_call.1} parent=87 // pred_check
          %p581 = pneg %p308
        $region114: #{tpu_custom_call.1} parent=87 // pred_check_branch
          %583 = sbr.rel (%p581) target = $region116
        $region115: #{tpu_custom_call.1} parent=87 // pred_region
          %584 = dma.done [#allocation12], 16
        $region116: #{tpu_custom_call.1} parent=87 // pred_fallthru
          _
        %s585 = smul.u32 2, %s35
        %p586 = scmp.lt.s32.totalorder %s585, 3
        %s587 = scalar_select %p586, %s585, 3
        %s588 = smul.addr %s587, 8
        %s589 = scalar_lea.vmem %s0, %s588
        %p590 = pneg %p56
        %p591 = pneg %p53
        %p592 = pneg %p77
        %p593 = pneg %p74
        %p594 = pneg %p98
        %p595 = pneg %p95
        %p596 = pneg %p119
        %p597 = pneg %p116
        %p598 = pneg %p140
        %p599 = pneg %p137
        %p600 = pneg %p161
        %p601 = pneg %p158
        %p602 = pneg %p182
        %p603 = pneg %p179
        %p604 = pneg %p203
        %p605 = pneg %p200
        %p606 = pneg %p224
        %p607 = pneg %p221
        %p608 = pneg %p245
        %p609 = pneg %p242
        %p610 = pneg %p266
        %p611 = pneg %p263
        %p612 = pneg %p287
        %p613 = pneg %p284
        %p614 = pneg %p308
        %p615 = pneg %p305
        %p616 = pneg %p329
        %p617 = pneg %p326
        %p618 = pneg %p350
        %p619 = pneg %p347
        %p620 = pneg %p371
        %p621 = pneg %p368
        %p622 = pneg %p392
        %p623 = pneg %p389
        %p624 = pneg %p418
        %p625 = pneg %p415
        %s626 = sand.u32 %s405, 1
        %s627 = scalar_lea.sflag [#allocation4], %s626
        %s628 = sand.u32 %s405, 1
        %s629 = smul.addr %s628, 16
        %s630 = scalar_lea.vmem [#allocation14], %s629
        %s631 = smul.u32 2, %s35
        %p632 = scmp.lt.s32.totalorder %s631, 3
        %s633 = scalar_select %p632, %s631, 3
        %s634 = smul.addr %s633, 8
        %s635 = scalar_lea.vmem %s0, %s634
        %s636 = smul.u32 2, %s35
        %s637 = smul.u32 2, %s35
        %v639 = vld [vmem:[%s635] sm:$0xff]
        %v640 = vld [vmem:[%s635 + $0x8] sm:$0xff]
        %v641 = vld [vmem:[%s1] sm:$0x1]
        %v642 = vld [vmem:[#allocation2] sm:$0x1]
        %vm643 = vcmask 261120
        %v644 = vsel %vm643, %v639, 0.0
        %645 = vadd.xlane.f32.xlu0 %v644
        %v646 = vpop.xlane.xlu0 %645
        %v647 = vsel %vm643, %v640, 0.0
        %648 = vadd.xlane.f32.xlu0 %v647
        %v649 = vpop.xlane.xlu0 %648
        %v650 = vrcp.pop 32.0
        %v651 = vmul.f32 %v646, %v650
        %v652 = vmul.f32 %v649, %v650
        %v653 = vsub.f32 %v639, %v651
        %v654 = vsub.f32 %v640, %v652
        %v655 = vmul.f32 %v653, %v653
        %v656 = vmul.f32 %v654, %v654
        %v657 = vsel %vm643, %v655, 0.0
        %658 = vadd.xlane.f32.xlu0 %v657
        %v659 = vpop.xlane.xlu0 %658
        %v660 = vsel %vm643, %v656, 0.0
        %661 = vadd.xlane.f32.xlu0 %v660
        %v662 = vpop.xlane.xlu0 %661
        %v663 = vmul.f32 %v659, %v650
        %v664 = vmul.f32 %v662, %v650
        %v665 = vadd.f32 %v663, 1e-05
        %v666 = vadd.f32 %v664, 1e-05
        %v667 = vrsqrt.pop %v665
        %v668 = vrsqrt.pop %v666
        %v669 = vmul.f32 %v653, %v667
        %v670 = vmul.f32 %v654, %v668
        %v672 = vlaneseq
        %v673 = vshrl.u32 %v672, 7
        %v674 = vsub.s32 0, %v673
        %v675 = vrot.slane %v641, %v674
        %v677 = vmul.f32 %v669, %v675
        %v678 = vmul.f32 %v670, %v675
        %v680 = vlaneseq
        %v681 = vshrl.u32 %v680, 7
        %v682 = vsub.s32 0, %v681
        %v683 = vrot.slane %v642, %v682
        %v685 = vadd.f32 %v677, %v683
        %v686 = vadd.f32 %v678, %v683
        %v687 = vpack.c.bf16 %v686, %v685
        %v688 = vld [vmem:[%s3] sm:$0xf]
        %v689 = vld [vmem:[%s3 + $0x4] sm:$0xf]
        %v690 = vld [vmem:[%s3 + $0x8] sm:$0xf]
        %v691 = vld [vmem:[%s3 + $0xc] sm:$0xf]
        %v692 = vld [vmem:[#allocation5] sm:$0x1]
        %v694 = vlaneseq
        %v695 = vshrl.u32 %v694, 7
        %v696 = vsub.s32 0, %v695
        %v697 = vrot.slane %v692, %v696
        %v703 = vunpack.c.l.b16 %v688
        %v704 = vunpack.c.l.b16 %v689
        %v705 = vunpack.c.l.b16 %v690
        %v706 = vunpack.c.l.b16 %v691
        %v707 = vpack.c.b16 %v704, %v703
        %v708 = vpack.c.b16 %v706, %v705
        %v712 = vsel %vm643, %v687, 0
        %714 = vmatprep.subr.bf16.mxu0 0
        %715 = vmatpush1.bf16.msra.mxu0 %v707
        %716 = vmatprep.subr.bf16.mxu0 0
        %717 = vmatpush1.bf16.msra.mxu0 %v708
        %718 = vmatprep.subr.bf16.mxu0 0
        %719 = vmatpush1.bf16.msra.mxu0 0
        %720 = vmatprep.subr.bf16.mxu0 0
        %721 = vmatpush1.bf16.msra.mxu0 0
        %722 = vmatprep.subr.bf16.mxu0 0
        %723 = vmatpush1.bf16.msra.mxu0 0
        %724 = vmatprep.subr.bf16.mxu0 0
        %725 = vmatpush1.bf16.msra.mxu0 0
        %726 = vmatprep.subr.bf16.mxu0 0
        %727 = vmatpush1.bf16.msra.mxu0 0
        %728 = vmatprep.subr.bf16.mxu0 0
        %729 = vmatpush1.bf16.msra.mxu0 0
        %730 = vmatprep.subr.bf16.mxu0 0
        %731 = vmatpush1.bf16.msra.mxu0 0
        %732 = vmatprep.subr.bf16.mxu0 0
        %733 = vmatpush1.bf16.msra.mxu0 0
        %734 = vmatprep.subr.bf16.mxu0 0
        %735 = vmatpush1.bf16.msra.mxu0 0
        %736 = vmatprep.subr.bf16.mxu0 0
        %737 = vmatpush1.bf16.msra.mxu0 0
        %738 = vmatprep.subr.bf16.mxu0 0
        %739 = vmatpush1.bf16.msra.mxu0 0
        %740 = vmatprep.subr.bf16.mxu0 0
        %741 = vmatpush1.bf16.msra.mxu0 0
        %742 = vmatprep.subr.bf16.mxu0 0
        %743 = vmatpush1.bf16.msra.mxu0 0
        %744 = vmatprep.subr.bf16.mxu0 0
        %745 = vmatpush1.bf16.msra.mxu0 0
        %746 = vmatprep.mubr.bf16.mxu0 0
        %747 = vmatmul.mubr.bf16.gmra.mrb[0].mxu0 %v712
        %v748 = vpop.f32.mrb[0].mxu0
        %v749 = vadd.f32 %v697, %v748
        %v750 = vpop.f32.mrb[0].mxu0
        %v751 = vpop.f32.mrb[0].mxu0
        %v752 = vadd.f32 %v697, %v751
        %v753 = vpop.f32.mrb[0].mxu0
        %754 = vdwg.mxu0
        %v755 = vld [vmem:[%s4] sm:$0xf]
        %v756 = vld [vmem:[%s4 + $0x4] sm:$0xf]
        %v757 = vld [vmem:[%s4 + $0x8] sm:$0xf]
        %v758 = vld [vmem:[%s4 + $0xc] sm:$0xf]
        %v759 = vld [vmem:[#allocation7] sm:$0x1]
        %v761 = vlaneseq
        %v762 = vshrl.u32 %v761, 7
        %v763 = vsub.s32 0, %v762
        %v764 = vrot.slane %v759, %v763
        %v770 = vunpack.c.l.b16 %v755
        %v771 = vunpack.c.l.b16 %v756
        %v772 = vunpack.c.l.b16 %v757
        %v773 = vunpack.c.l.b16 %v758
        %v774 = vpack.c.b16 %v771, %v770
        %v775 = vpack.c.b16 %v773, %v772
        %778 = vmatprep.subr.bf16.mxu0 0
        %779 = vmatpush1.bf16.msra.mxu0 %v774
        %780 = vmatprep.subr.bf16.mxu0 0
        %781 = vmatpush1.bf16.msra.mxu0 %v775
        %782 = vmatprep.subr.bf16.mxu0 0
        %783 = vmatpush1.bf16.msra.mxu0 0
        %784 = vmatprep.subr.bf16.mxu0 0
        %785 = vmatpush1.bf16.msra.mxu0 0
        %786 = vmatprep.subr.bf16.mxu0 0
        %787 = vmatpush1.bf16.msra.mxu0 0
        %788 = vmatprep.subr.bf16.mxu0 0
        %789 = vmatpush1.bf16.msra.mxu0 0
        %790 = vmatprep.subr.bf16.mxu0 0
        %791 = vmatpush1.bf16.msra.mxu0 0
        %792 = vmatprep.subr.bf16.mxu0 0
        %793 = vmatpush1.bf16.msra.mxu0 0
        %794 = vmatprep.subr.bf16.mxu0 0
        %795 = vmatpush1.bf16.msra.mxu0 0
        %796 = vmatprep.subr.bf16.mxu0 0
        %797 = vmatpush1.bf16.msra.mxu0 0
        %798 = vmatprep.subr.bf16.mxu0 0
        %799 = vmatpush1.bf16.msra.mxu0 0
        %800 = vmatprep.subr.bf16.mxu0 0
        %801 = vmatpush1.bf16.msra.mxu0 0
        %802 = vmatprep.subr.bf16.mxu0 0
        %803 = vmatpush1.bf16.msra.mxu0 0
        %804 = vmatprep.subr.bf16.mxu0 0
        %805 = vmatpush1.bf16.msra.mxu0 0
        %806 = vmatprep.subr.bf16.mxu0 0
        %807 = vmatpush1.bf16.msra.mxu0 0
        %808 = vmatprep.subr.bf16.mxu0 0
        %809 = vmatpush1.bf16.msra.mxu0 0
        %810 = vmatprep.mubr.bf16.mxu0 0
        %811 = vmatmul.mubr.bf16.gmra.mrb[0].mxu0 %v712
        %v812 = vpop.f32.mrb[0].mxu0
        %v813 = vadd.f32 %v764, %v812
        %v814 = vpop.f32.mrb[0].mxu0
        %v815 = vpop.f32.mrb[0].mxu0
        %v816 = vadd.f32 %v764, %v815
        %v817 = vpop.f32.mrb[0].mxu0
        %818 = vdwg.mxu0
        %v819 = vld [vmem:[%s5] sm:$0xf]
        %v820 = vld [vmem:[%s5 + $0x4] sm:$0xf]
        %v821 = vld [vmem:[%s5 + $0x8] sm:$0xf]
        %v822 = vld [vmem:[%s5 + $0xc] sm:$0xf]
        %v823 = vld [vmem:[#allocation8] sm:$0x1]
        %v825 = vlaneseq
        %v826 = vshrl.u32 %v825, 7
        %v827 = vsub.s32 0, %v826
        %v828 = vrot.slane %v823, %v827
        %v834 = vunpack.c.l.b16 %v819
        %v835 = vunpack.c.l.b16 %v820
        %v836 = vunpack.c.l.b16 %v821
        %v837 = vunpack.c.l.b16 %v822
        %v838 = vpack.c.b16 %v835, %v834
        %v839 = vpack.c.b16 %v837, %v836
        %842 = vmatprep.subr.bf16.mxu0 0
        %843 = vmatpush1.bf16.msra.mxu0 %v838
        %844 = vmatprep.subr.bf16.mxu0 0
        %845 = vmatpush1.bf16.msra.mxu0 %v839
        %846 = vmatprep.subr.bf16.mxu0 0
        %847 = vmatpush1.bf16.msra.mxu0 0
        %848 = vmatprep.subr.bf16.mxu0 0
        %849 = vmatpush1.bf16.msra.mxu0 0
        %850 = vmatprep.subr.bf16.mxu0 0
        %851 = vmatpush1.bf16.msra.mxu0 0
        %852 = vmatprep.subr.bf16.mxu0 0
        %853 = vmatpush1.bf16.msra.mxu0 0
        %854 = vmatprep.subr.bf16.mxu0 0
        %855 = vmatpush1.bf16.msra.mxu0 0
        %856 = vmatprep.subr.bf16.mxu0 0
        %857 = vmatpush1.bf16.msra.mxu0 0
        %858 = vmatprep.subr.bf16.mxu0 0
        %859 = vmatpush1.bf16.msra.mxu0 0
        %860 = vmatprep.subr.bf16.mxu0 0
        %861 = vmatpush1.bf16.msra.mxu0 0
        %862 = vmatprep.subr.bf16.mxu0 0
        %863 = vmatpush1.bf16.msra.mxu0 0
        %864 = vmatprep.subr.bf16.mxu0 0
        %865 = vmatpush1.bf16.msra.mxu0 0
        %866 = vmatprep.subr.bf16.mxu0 0
        %867 = vmatpush1.bf16.msra.mxu0 0
        %868 = vmatprep.subr.bf16.mxu0 0
        %869 = vmatpush1.bf16.msra.mxu0 0
        %870 = vmatprep.subr.bf16.mxu0 0
        %871 = vmatpush1.bf16.msra.mxu0 0
        %872 = vmatprep.subr.bf16.mxu0 0
        %873 = vmatpush1.bf16.msra.mxu0 0
        %874 = vmatprep.mubr.bf16.mxu0 0
        %875 = vmatmul.mubr.bf16.gmra.mrb[0].mxu0 %v712
        %v876 = vpop.f32.mrb[0].mxu0
        %v877 = vadd.f32 %v828, %v876
        %v878 = vpop.f32.mrb[0].mxu0
        %v879 = vpop.f32.mrb[0].mxu0
        %v880 = vadd.f32 %v828, %v879
        %v881 = vpop.f32.mrb[0].mxu0
        %882 = vdwg.mxu0
        %v883 = vmul.f32 %v749, 0.35355338
        %v884 = vmul.f32 %v752, 0.35355338
        %vm885 = vcmask 64512
        %v887 = vsel %vm885, %v883, 0
        %v890 = vsel %vm885, %v813, 0
        %892 = vmatprep.subr.mxu0 0.0
        %893 = vmatpush1.xpose.msra.mxu0 %v890
        %894 = vmatprep.subr.mxu0 0.0
        %895 = vmatpush1.xpose.msra.mxu0 0.0
        %896 = vmatprep.subr.mxu0 0.0
        %897 = vmatpush1.xpose.msra.mxu0 0.0
        %898 = vmatprep.subr.mxu0 0.0
        %899 = vmatpush1.xpose.msra.mxu0 0.0
        %900 = vmatprep.subr.mxu0 0.0
        %901 = vmatpush1.xpose.msra.mxu0 0.0
        %902 = vmatprep.subr.mxu0 0.0
        %903 = vmatpush1.xpose.msra.mxu0 0.0
        %904 = vmatprep.subr.mxu0 0.0
        %905 = vmatpush1.xpose.msra.mxu0 0.0
        %906 = vmatprep.subr.mxu0 0.0
        %907 = vmatpush1.xpose.msra.mxu0 0.0
        %908 = vmatprep.subr.mxu0 0.0
        %909 = vmatpush1.xpose.msra.mxu0 0.0
        %910 = vmatprep.subr.mxu0 0.0
        %911 = vmatpush1.xpose.msra.mxu0 0.0
        %912 = vmatprep.subr.mxu0 0.0
        %913 = vmatpush1.xpose.msra.mxu0 0.0
        %914 = vmatprep.subr.mxu0 0.0
        %915 = vmatpush1.xpose.msra.mxu0 0.0
        %916 = vmatprep.subr.mxu0 0.0
        %917 = vmatpush1.xpose.msra.mxu0 0.0
        %918 = vmatprep.subr.mxu0 0.0
        %919 = vmatpush1.xpose.msra.mxu0 0.0
        %920 = vmatprep.subr.mxu0 0.0
        %921 = vmatpush1.xpose.msra.mxu0 0.0
        %922 = vmatprep.subr.mxu0 0.0
        %923 = vmatpush1.xpose.msra.mxu0 0.0
        %924 = vmatprep.subr.mxu0 0.0
        %925 = vmatpush1.xpose.msra.mxu0 0.0
        %926 = vmatprep.subr.mxu0 0.0
        %927 = vmatpush1.xpose.msra.mxu0 0.0
        %928 = vmatprep.subr.mxu0 0.0
        %929 = vmatpush1.xpose.msra.mxu0 0.0
        %930 = vmatprep.subr.mxu0 0.0
        %931 = vmatpush1.xpose.msra.mxu0 0.0
        %932 = vmatprep.subr.mxu0 0.0
        %933 = vmatpush1.xpose.msra.mxu0 0.0
        %934 = vmatprep.subr.mxu0 0.0
        %935 = vmatpush1.xpose.msra.mxu0 0.0
        %936 = vmatprep.subr.mxu0 0.0
        %937 = vmatpush1.xpose.msra.mxu0 0.0
        %938 = vmatprep.subr.mxu0 0.0
        %939 = vmatpush1.xpose.msra.mxu0 0.0
        %940 = vmatprep.subr.mxu0 0.0
        %941 = vmatpush1.xpose.msra.mxu0 0.0
        %942 = vmatprep.subr.mxu0 0.0
        %943 = vmatpush1.xpose.msra.mxu0 0.0
        %944 = vmatprep.subr.mxu0 0.0
        %945 = vmatpush1.xpose.msra.mxu0 0.0
        %946 = vmatprep.subr.mxu0 0.0
        %947 = vmatpush1.xpose.msra.mxu0 0.0
        %948 = vmatprep.subr.mxu0 0.0
        %949 = vmatpush1.xpose.msra.mxu0 0.0
        %950 = vmatprep.subr.mxu0 0.0
        %951 = vmatpush1.xpose.msra.mxu0 0.0
        %952 = vmatprep.subr.mxu0 0.0
        %953 = vmatpush1.xpose.msra.mxu0 0.0
        %954 = vmatprep.subr.mxu0 0.0
        %955 = vmatpush1.xpose.msra.mxu0 0.0
        %956 = vmatprep.mubr.f32.mxu0 0.0
        %957 = vmatmul.mubr.f32.gmra.mrb[0].mxu0 %v887
        %v958 = vpop.f32.mrb[0].mxu0
        %v959 = vadd.f32 0.0, %v958
        %v960 = vpop.f32.mrb[0].mxu0
        %961 = vdwg.mxu0
        %v963 = vsel %vm885, %v884, 0
        %v966 = vsel %vm885, %v816, 0
        %968 = vmatprep.subr.mxu0 0.0
        %969 = vmatpush1.xpose.msra.mxu0 %v966
        %970 = vmatprep.subr.mxu0 0.0
        %971 = vmatpush1.xpose.msra.mxu0 0.0
        %972 = vmatprep.subr.mxu0 0.0
        %973 = vmatpush1.xpose.msra.mxu0 0.0
        %974 = vmatprep.subr.mxu0 0.0
        %975 = vmatpush1.xpose.msra.mxu0 0.0
        %976 = vmatprep.subr.mxu0 0.0
        %977 = vmatpush1.xpose.msra.mxu0 0.0
        %978 = vmatprep.subr.mxu0 0.0
        %979 = vmatpush1.xpose.msra.mxu0 0.0
        %980 = vmatprep.subr.mxu0 0.0
        %981 = vmatpush1.xpose.msra.mxu0 0.0
        %982 = vmatprep.subr.mxu0 0.0
        %983 = vmatpush1.xpose.msra.mxu0 0.0
        %984 = vmatprep.subr.mxu0 0.0
        %985 = vmatpush1.xpose.msra.mxu0 0.0
        %986 = vmatprep.subr.mxu0 0.0
        %987 = vmatpush1.xpose.msra.mxu0 0.0
        %988 = vmatprep.subr.mxu0 0.0
        %989 = vmatpush1.xpose.msra.mxu0 0.0
        %990 = vmatprep.subr.mxu0 0.0
        %991 = vmatpush1.xpose.msra.mxu0 0.0
        %992 = vmatprep.subr.mxu0 0.0
        %993 = vmatpush1.xpose.msra.mxu0 0.0
        %994 = vmatprep.subr.mxu0 0.0
        %995 = vmatpush1.xpose.msra.mxu0 0.0
        %996 = vmatprep.subr.mxu0 0.0
        %997 = vmatpush1.xpose.msra.mxu0 0.0
        %998 = vmatprep.subr.mxu0 0.0
        %999 = vmatpush1.xpose.msra.mxu0 0.0
        %1000 = vmatprep.subr.mxu0 0.0
        %1001 = vmatpush1.xpose.msra.mxu0 0.0
        %1002 = vmatprep.subr.mxu0 0.0
        %1003 = vmatpush1.xpose.msra.mxu0 0.0
        %1004 = vmatprep.subr.mxu0 0.0
        %1005 = vmatpush1.xpose.msra.mxu0 0.0
        %1006 = vmatprep.subr.mxu0 0.0
        %1007 = vmatpush1.xpose.msra.mxu0 0.0
        %1008 = vmatprep.subr.mxu0 0.0
        %1009 = vmatpush1.xpose.msra.mxu0 0.0
        %1010 = vmatprep.subr.mxu0 0.0
        %1011 = vmatpush1.xpose.msra.mxu0 0.0
        %1012 = vmatprep.subr.mxu0 0.0
        %1013 = vmatpush1.xpose.msra.mxu0 0.0
        %1014 = vmatprep.subr.mxu0 0.0
        %1015 = vmatpush1.xpose.msra.mxu0 0.0
        %1016 = vmatprep.subr.mxu0 0.0
        %1017 = vmatpush1.xpose.msra.mxu0 0.0
        %1018 = vmatprep.subr.mxu0 0.0
        %1019 = vmatpush1.xpose.msra.mxu0 0.0
        %1020 = vmatprep.subr.mxu0 0.0
        %1021 = vmatpush1.xpose.msra.mxu0 0.0
        %1022 = vmatprep.subr.mxu0 0.0
        %1023 = vmatpush1.xpose.msra.mxu0 0.0
        %1024 = vmatprep.subr.mxu0 0.0
        %1025 = vmatpush1.xpose.msra.mxu0 0.0
        %1026 = vmatprep.subr.mxu0 0.0
        %1027 = vmatpush1.xpose.msra.mxu0 0.0
        %1028 = vmatprep.subr.mxu0 0.0
        %1029 = vmatpush1.xpose.msra.mxu0 0.0
        %1030 = vmatprep.subr.mxu0 0.0
        %1031 = vmatpush1.xpose.msra.mxu0 0.0
        %1032 = vmatprep.mubr.f32.mxu0 0.0
        %1033 = vmatmul.mubr.f32.gmra.mrb[0].mxu0 %v963
        %v1034 = vpop.f32.mrb[0].mxu0
        %v1035 = vadd.f32 0.0, %v1034
        %v1036 = vpop.f32.mrb[0].mxu0
        %1037 = vdwg.mxu0
        %v1038 = vsel %vm885, %v959, -inf
        %1039 = vmax.xlane.f32.xlu0 %v1038
        %v1040 = vpop.xlane.xlu0 %1039
        %v1041 = vsel %vm885, %v1035, -inf
        %1042 = vmax.xlane.f32.xlu0 %v1041
        %v1043 = vpop.xlane.xlu0 %1042
        %v1044 = vsub.f32 %v959, %v1040
        %v1045 = vsub.f32 %v1035, %v1043
        %v1046 = vmul.f32 %v1044, 1.442695
        %v1047 = vpow.pop %v1046
        %v1048 = vmul.f32 %v1045, 1.442695
        %v1049 = vpow.pop %v1048
        %v1050 = vsel %vm885, %v1047, 0.0
        %1051 = vadd.xlane.f32.xlu0 %v1050
        %v1052 = vpop.xlane.xlu0 %1051
        %v1053 = vsel %vm885, %v1049, 0.0
        %1054 = vadd.xlane.f32.xlu0 %v1053
        %v1055 = vpop.xlane.xlu0 %1054
        %v1056 = vrcp.pop %v1052
        %v1057 = vrcp.pop %v1055
        %v1058 = vmul.f32 %v1047, %v1056
        %v1059 = vmul.f32 %v1049, %v1057
        %v1061 = vsel %vm885, %v1058, 0
        %1063 = vmatprep.subr.mxu0 0.0
        %1064 = vmatpush1.msra.mxu0 %v877
        %1065 = vmatprep.subr.mxu0 0.0
        %1066 = vmatpush1.msra.mxu0 0.0
        %1067 = vmatprep.subr.mxu0 0.0
        %1068 = vmatpush1.msra.mxu0 0.0
        %1069 = vmatprep.subr.mxu0 0.0
        %1070 = vmatpush1.msra.mxu0 0.0
        %1071 = vmatprep.subr.mxu0 0.0
        %1072 = vmatpush1.msra.mxu0 0.0
        %1073 = vmatprep.subr.mxu0 0.0
        %1074 = vmatpush1.msra.mxu0 0.0
        %1075 = vmatprep.subr.mxu0 0.0
        %1076 = vmatpush1.msra.mxu0 0.0
        %1077 = vmatprep.subr.mxu0 0.0
        %1078 = vmatpush1.msra.mxu0 0.0
        %1079 = vmatprep.subr.mxu0 0.0
        %1080 = vmatpush1.msra.mxu0 0.0
        %1081 = vmatprep.subr.mxu0 0.0
        %1082 = vmatpush1.msra.mxu0 0.0
        %1083 = vmatprep.subr.mxu0 0.0
        %1084 = vmatpush1.msra.mxu0 0.0
        %1085 = vmatprep.subr.mxu0 0.0
        %1086 = vmatpush1.msra.mxu0 0.0
        %1087 = vmatprep.subr.mxu0 0.0
        %1088 = vmatpush1.msra.mxu0 0.0
        %1089 = vmatprep.subr.mxu0 0.0
        %1090 = vmatpush1.msra.mxu0 0.0
        %1091 = vmatprep.subr.mxu0 0.0
        %1092 = vmatpush1.msra.mxu0 0.0
        %1093 = vmatprep.subr.mxu0 0.0
        %1094 = vmatpush1.msra.mxu0 0.0
        %1095 = vmatprep.subr.mxu0 0.0
        %1096 = vmatpush1.msra.mxu0 0.0
        %1097 = vmatprep.subr.mxu0 0.0
        %1098 = vmatpush1.msra.mxu0 0.0
        %1099 = vmatprep.subr.mxu0 0.0
        %1100 = vmatpush1.msra.mxu0 0.0
        %1101 = vmatprep.subr.mxu0 0.0
        %1102 = vmatpush1.msra.mxu0 0.0
        %1103 = vmatprep.subr.mxu0 0.0
        %1104 = vmatpush1.msra.mxu0 0.0
        %1105 = vmatprep.subr.mxu0 0.0
        %1106 = vmatpush1.msra.mxu0 0.0
        %1107 = vmatprep.subr.mxu0 0.0
        %1108 = vmatpush1.msra.mxu0 0.0
        %1109 = vmatprep.subr.mxu0 0.0
        %1110 = vmatpush1.msra.mxu0 0.0
        %1111 = vmatprep.subr.mxu0 0.0
        %1112 = vmatpush1.msra.mxu0 0.0
        %1113 = vmatprep.subr.mxu0 0.0
        %1114 = vmatpush1.msra.mxu0 0.0
        %1115 = vmatprep.subr.mxu0 0.0
        %1116 = vmatpush1.msra.mxu0 0.0
        %1117 = vmatprep.subr.mxu0 0.0
        %1118 = vmatpush1.msra.mxu0 0.0
        %1119 = vmatprep.subr.mxu0 0.0
        %1120 = vmatpush1.msra.mxu0 0.0
        %1121 = vmatprep.subr.mxu0 0.0
        %1122 = vmatpush1.msra.mxu0 0.0
        %1123 = vmatprep.subr.mxu0 0.0
        %1124 = vmatpush1.msra.mxu0 0.0
        %1125 = vmatprep.subr.mxu0 0.0
        %1126 = vmatpush1.msra.mxu0 0.0
        %1127 = vmatprep.mubr.f32.mxu0 0.0
        %1128 = vmatmul.mubr.f32.gmra.mrb[0].mxu0 %v1061
        %v1129 = vpop.f32.mrb[0].mxu0
        %v1130 = vadd.f32 0.0, %v1129
        %v1131 = vpop.f32.mrb[0].mxu0
        %1132 = vdwg.mxu0
        %v1134 = vsel %vm885, %v1059, 0
        %1136 = vmatprep.subr.mxu0 0.0
        %1137 = vmatpush1.msra.mxu0 %v880
        %1138 = vmatprep.subr.mxu0 0.0
        %1139 = vmatpush1.msra.mxu0 0.0
        %1140 = vmatprep.subr.mxu0 0.0
        %1141 = vmatpush1.msra.mxu0 0.0
        %1142 = vmatprep.subr.mxu0 0.0
        %1143 = vmatpush1.msra.mxu0 0.0
        %1144 = vmatprep.subr.mxu0 0.0
        %1145 = vmatpush1.msra.mxu0 0.0
        %1146 = vmatprep.subr.mxu0 0.0
        %1147 = vmatpush1.msra.mxu0 0.0
        %1148 = vmatprep.subr.mxu0 0.0
        %1149 = vmatpush1.msra.mxu0 0.0
        %1150 = vmatprep.subr.mxu0 0.0
        %1151 = vmatpush1.msra.mxu0 0.0
        %1152 = vmatprep.subr.mxu0 0.0
        %1153 = vmatpush1.msra.mxu0 0.0
        %1154 = vmatprep.subr.mxu0 0.0
        %1155 = vmatpush1.msra.mxu0 0.0
        %1156 = vmatprep.subr.mxu0 0.0
        %1157 = vmatpush1.msra.mxu0 0.0
        %1158 = vmatprep.subr.mxu0 0.0
        %1159 = vmatpush1.msra.mxu0 0.0
        %1160 = vmatprep.subr.mxu0 0.0
        %1161 = vmatpush1.msra.mxu0 0.0
        %1162 = vmatprep.subr.mxu0 0.0
        %1163 = vmatpush1.msra.mxu0 0.0
        %1164 = vmatprep.subr.mxu0 0.0
        %1165 = vmatpush1.msra.mxu0 0.0
        %1166 = vmatprep.subr.mxu0 0.0
        %1167 = vmatpush1.msra.mxu0 0.0
        %1168 = vmatprep.subr.mxu0 0.0
        %1169 = vmatpush1.msra.mxu0 0.0
        %1170 = vmatprep.subr.mxu0 0.0
        %1171 = vmatpush1.msra.mxu0 0.0
        %1172 = vmatprep.subr.mxu0 0.0
        %1173 = vmatpush1.msra.mxu0 0.0
        %1174 = vmatprep.subr.mxu0 0.0
        %1175 = vmatpush1.msra.mxu0 0.0
        %1176 = vmatprep.subr.mxu0 0.0
        %1177 = vmatpush1.msra.mxu0 0.0
        %1178 = vmatprep.subr.mxu0 0.0
        %1179 = vmatpush1.msra.mxu0 0.0
        %1180 = vmatprep.subr.mxu0 0.0
        %1181 = vmatpush1.msra.mxu0 0.0
        %1182 = vmatprep.subr.mxu0 0.0
        %1183 = vmatpush1.msra.mxu0 0.0
        %1184 = vmatprep.subr.mxu0 0.0
        %1185 = vmatpush1.msra.mxu0 0.0
        %1186 = vmatprep.subr.mxu0 0.0
        %1187 = vmatpush1.msra.mxu0 0.0
        %1188 = vmatprep.subr.mxu0 0.0
        %1189 = vmatpush1.msra.mxu0 0.0
        %1190 = vmatprep.subr.mxu0 0.0
        %1191 = vmatpush1.msra.mxu0 0.0
        %1192 = vmatprep.subr.mxu0 0.0
        %1193 = vmatpush1.msra.mxu0 0.0
        %1194 = vmatprep.subr.mxu0 0.0
        %1195 = vmatpush1.msra.mxu0 0.0
        %1196 = vmatprep.subr.mxu0 0.0
        %1197 = vmatpush1.msra.mxu0 0.0
        %1198 = vmatprep.subr.mxu0 0.0
        %1199 = vmatpush1.msra.mxu0 0.0
        %1200 = vmatprep.mubr.f32.mxu0 0.0
        %1201 = vmatmul.mubr.f32.gmra.mrb[0].mxu0 %v1134
        %v1202 = vpop.f32.mrb[0].mxu0
        %v1203 = vadd.f32 0.0, %v1202
        %v1204 = vpop.f32.mrb[0].mxu0
        %1205 = vdwg.mxu0
        %v1206 = vpack.c.bf16 %v1203, %v1130
        %v1207 = vld [vmem:[%s9] sm:$0xf]
        %1208 = vrot.lane.b32.xlu0 %v883, 120
        %v1209 = vpop.permute.xlu0 %1208
        %1210 = vrot.lane.b32.xlu0 %v813, 120
        %v1211 = vpop.permute.xlu0 %1210
        %v1212 = vsel %vm885, %v1209, 0
        %v1214 = vsel %vm885, %v1211, 0
        %1216 = vmatprep.subr.mxu0 0.0
        %1217 = vmatpush1.xpose.msra.mxu0 %v1214
        %1218 = vmatprep.subr.mxu0 0.0
        %1219 = vmatpush1.xpose.msra.mxu0 0.0
        %1220 = vmatprep.subr.mxu0 0.0
        %1221 = vmatpush1.xpose.msra.mxu0 0.0
        %1222 = vmatprep.subr.mxu0 0.0
        %1223 = vmatpush1.xpose.msra.mxu0 0.0
        %1224 = vmatprep.subr.mxu0 0.0
        %1225 = vmatpush1.xpose.msra.mxu0 0.0
        %1226 = vmatprep.subr.mxu0 0.0
        %1227 = vmatpush1.xpose.msra.mxu0 0.0
        %1228 = vmatprep.subr.mxu0 0.0
        %1229 = vmatpush1.xpose.msra.mxu0 0.0
        %1230 = vmatprep.subr.mxu0 0.0
        %1231 = vmatpush1.xpose.msra.mxu0 0.0
        %1232 = vmatprep.subr.mxu0 0.0
        %1233 = vmatpush1.xpose.msra.mxu0 0.0
        %1234 = vmatprep.subr.mxu0 0.0
        %1235 = vmatpush1.xpose.msra.mxu0 0.0
        %1236 = vmatprep.subr.mxu0 0.0
        %1237 = vmatpush1.xpose.msra.mxu0 0.0
        %1238 = vmatprep.subr.mxu0 0.0
        %1239 = vmatpush1.xpose.msra.mxu0 0.0
        %1240 = vmatprep.subr.mxu0 0.0
        %1241 = vmatpush1.xpose.msra.mxu0 0.0
        %1242 = vmatprep.subr.mxu0 0.0
        %1243 = vmatpush1.xpose.msra.mxu0 0.0
        %1244 = vmatprep.subr.mxu0 0.0
        %1245 = vmatpush1.xpose.msra.mxu0 0.0
        %1246 = vmatprep.subr.mxu0 0.0
        %1247 = vmatpush1.xpose.msra.mxu0 0.0
        %1248 = vmatprep.subr.mxu0 0.0
        %1249 = vmatpush1.xpose.msra.mxu0 0.0
        %1250 = vmatprep.subr.mxu0 0.0
        %1251 = vmatpush1.xpose.msra.mxu0 0.0
        %1252 = vmatprep.subr.mxu0 0.0
        %1253 = vmatpush1.xpose.msra.mxu0 0.0
        %1254 = vmatprep.subr.mxu0 0.0
        %1255 = vmatpush1.xpose.msra.mxu0 0.0
        %1256 = vmatprep.subr.mxu0 0.0
        %1257 = vmatpush1.xpose.msra.mxu0 0.0
        %1258 = vmatprep.subr.mxu0 0.0
        %1259 = vmatpush1.xpose.msra.mxu0 0.0
        %1260 = vmatprep.subr.mxu0 0.0
        %1261 = vmatpush1.xpose.msra.mxu0 0.0
        %1262 = vmatprep.subr.mxu0 0.0
        %1263 = vmatpush1.xpose.msra.mxu0 0.0
        %1264 = vmatprep.subr.mxu0 0.0
        %1265 = vmatpush1.xpose.msra.mxu0 0.0
        %1266 = vmatprep.subr.mxu0 0.0
        %1267 = vmatpush1.xpose.msra.mxu0 0.0
        %1268 = vmatprep.subr.mxu0 0.0
        %1269 = vmatpush1.xpose.msra.mxu0 0.0
        %1270 = vmatprep.subr.mxu0 0.0
        %1271 = vmatpush1.xpose.msra.mxu0 0.0
        %1272 = vmatprep.subr.mxu0 0.0
        %1273 = vmatpush1.xpose.msra.mxu0 0.0
        %1274 = vmatprep.subr.mxu0 0.0
        %1275 = vmatpush1.xpose.msra.mxu0 0.0
        %1276 = vmatprep.subr.mxu0 0.0
        %1277 = vmatpush1.xpose.msra.mxu0 0.0
        %1278 = vmatprep.subr.mxu0 0.0
        %1279 = vmatpush1.xpose.msra.mxu0 0.0
        %1280 = vmatprep.mubr.f32.mxu0 0.0
        %1281 = vmatmul.mubr.f32.gmra.mrb[0].mxu0 %v1212
        %v1282 = vpop.f32.mrb[0].mxu0
        %v1283 = vadd.f32 0.0, %v1282
        %v1284 = vpop.f32.mrb[0].mxu0
        %1285 = vdwg.mxu0
        %1286 = vrot.lane.b32.xlu0 %v884, 120
        %v1287 = vpop.permute.xlu0 %1286
        %1288 = vrot.lane.b32.xlu0 %v816, 120
        %v1289 = vpop.permute.xlu0 %1288
        %v1290 = vsel %vm885, %v1287, 0
        %v1292 = vsel %vm885, %v1289, 0
        %1294 = vmatprep.subr.mxu0 0.0
        %1295 = vmatpush1.xpose.msra.mxu0 %v1292
        %1296 = vmatprep.subr.mxu0 0.0
        %1297 = vmatpush1.xpose.msra.mxu0 0.0
        %1298 = vmatprep.subr.mxu0 0.0
        %1299 = vmatpush1.xpose.msra.mxu0 0.0
        %1300 = vmatprep.subr.mxu0 0.0
        %1301 = vmatpush1.xpose.msra.mxu0 0.0
        %1302 = vmatprep.subr.mxu0 0.0
        %1303 = vmatpush1.xpose.msra.mxu0 0.0
        %1304 = vmatprep.subr.mxu0 0.0
        %1305 = vmatpush1.xpose.msra.mxu0 0.0
        %1306 = vmatprep.subr.mxu0 0.0
        %1307 = vmatpush1.xpose.msra.mxu0 0.0
        %1308 = vmatprep.subr.mxu0 0.0
        %1309 = vmatpush1.xpose.msra.mxu0 0.0
        %1310 = vmatprep.subr.mxu0 0.0
        %1311 = vmatpush1.xpose.msra.mxu0 0.0
        %1312 = vmatprep.subr.mxu0 0.0
        %1313 = vmatpush1.xpose.msra.mxu0 0.0
        %1314 = vmatprep.subr.mxu0 0.0
        %1315 = vmatpush1.xpose.msra.mxu0 0.0
        %1316 = vmatprep.subr.mxu0 0.0
        %1317 = vmatpush1.xpose.msra.mxu0 0.0
        %1318 = vmatprep.subr.mxu0 0.0
        %1319 = vmatpush1.xpose.msra.mxu0 0.0
        %1320 = vmatprep.subr.mxu0 0.0
        %1321 = vmatpush1.xpose.msra.mxu0 0.0
        %1322 = vmatprep.subr.mxu0 0.0
        %1323 = vmatpush1.xpose.msra.mxu0 0.0
        %1324 = vmatprep.subr.mxu0 0.0
        %1325 = vmatpush1.xpose.msra.mxu0 0.0
        %1326 = vmatprep.subr.mxu0 0.0
        %1327 = vmatpush1.xpose.msra.mxu0 0.0
        %1328 = vmatprep.subr.mxu0 0.0
        %1329 = vmatpush1.xpose.msra.mxu0 0.0
        %1330 = vmatprep.subr.mxu0 0.0
        %1331 = vmatpush1.xpose.msra.mxu0 0.0
        %1332 = vmatprep.subr.mxu0 0.0
        %1333 = vmatpush1.xpose.msra.mxu0 0.0
        %1334 = vmatprep.subr.mxu0 0.0
        %1335 = vmatpush1.xpose.msra.mxu0 0.0
        %1336 = vmatprep.subr.mxu0 0.0
        %1337 = vmatpush1.xpose.msra.mxu0 0.0
        %1338 = vmatprep.subr.mxu0 0.0
        %1339 = vmatpush1.xpose.msra.mxu0 0.0
        %1340 = vmatprep.subr.mxu0 0.0
        %1341 = vmatpush1.xpose.msra.mxu0 0.0
        %1342 = vmatprep.subr.mxu0 0.0
        %1343 = vmatpush1.xpose.msra.mxu0 0.0
        %1344 = vmatprep.subr.mxu0 0.0
        %1345 = vmatpush1.xpose.msra.mxu0 0.0
        %1346 = vmatprep.subr.mxu0 0.0
        %1347 = vmatpush1.xpose.msra.mxu0 0.0
        %1348 = vmatprep.subr.mxu0 0.0
        %1349 = vmatpush1.xpose.msra.mxu0 0.0
        %1350 = vmatprep.subr.mxu0 0.0
        %1351 = vmatpush1.xpose.msra.mxu0 0.0
        %1352 = vmatprep.subr.mxu0 0.0
        %1353 = vmatpush1.xpose.msra.mxu0 0.0
        %1354 = vmatprep.subr.mxu0 0.0
        %1355 = vmatpush1.xpose.msra.mxu0 0.0
        %1356 = vmatprep.subr.mxu0 0.0
        %1357 = vmatpush1.xpose.msra.mxu0 0.0
        %1358 = vmatprep.mubr.f32.mxu0 0.0
        %1359 = vmatmul.mubr.f32.gmra.mrb[0].mxu0 %v1290
        %v1360 = vpop.f32.mrb[0].mxu0
        %v1361 = vadd.f32 0.0, %v1360
        %v1362 = vpop.f32.mrb[0].mxu0
        %1363 = vdwg.mxu0
        %v1364 = vsel %vm885, %v1283, -inf
        %1365 = vmax.xlane.f32.xlu0 %v1364
        %v1366 = vpop.xlane.xlu0 %1365
        %v1367 = vsel %vm885, %v1361, -inf
        %1368 = vmax.xlane.f32.xlu0 %v1367
        %v1369 = vpop.xlane.xlu0 %1368
        %v1370 = vsub.f32 %v1283, %v1366
        %v1371 = vsub.f32 %v1361, %v1369
        %v1372 = vmul.f32 %v1370, 1.442695
        %v1373 = vpow.pop %v1372
        %v1374 = vmul.f32 %v1371, 1.442695
        %v1375 = vpow.pop %v1374
        %v1376 = vsel %vm885, %v1373, 0.0
        %1377 = vadd.xlane.f32.xlu0 %v1376
        %v1378 = vpop.xlane.xlu0 %1377
        %v1379 = vsel %vm885, %v1375, 0.0
        %1380 = vadd.xlane.f32.xlu0 %v1379
        %v1381 = vpop.xlane.xlu0 %1380
        %v1382 = vrcp.pop %v1378
        %v1383 = vrcp.pop %v1381
        %v1384 = vmul.f32 %v1373, %v1382
        %v1385 = vmul.f32 %v1375, %v1383
        %1387 = vrot.lane.b32.xlu0 %v877, 120
        %v1388 = vpop.permute.xlu0 %1387
        %v1391 = vsel %vm885, %v1384, 0
        %1393 = vmatprep.subr.mxu0 0.0
        %1394 = vmatpush1.msra.mxu0 %v1388
        %1395 = vmatprep.subr.mxu0 0.0
        %1396 = vmatpush1.msra.mxu0 0.0
        %1397 = vmatprep.subr.mxu0 0.0
        %1398 = vmatpush1.msra.mxu0 0.0
        %1399 = vmatprep.subr.mxu0 0.0
        %1400 = vmatpush1.msra.mxu0 0.0
        %1401 = vmatprep.subr.mxu0 0.0
        %1402 = vmatpush1.msra.mxu0 0.0
        %1403 = vmatprep.subr.mxu0 0.0
        %1404 = vmatpush1.msra.mxu0 0.0
        %1405 = vmatprep.subr.mxu0 0.0
        %1406 = vmatpush1.msra.mxu0 0.0
        %1407 = vmatprep.subr.mxu0 0.0
        %1408 = vmatpush1.msra.mxu0 0.0
        %1409 = vmatprep.subr.mxu0 0.0
        %1410 = vmatpush1.msra.mxu0 0.0
        %1411 = vmatprep.subr.mxu0 0.0
        %1412 = vmatpush1.msra.mxu0 0.0
        %1413 = vmatprep.subr.mxu0 0.0
        %1414 = vmatpush1.msra.mxu0 0.0
        %1415 = vmatprep.subr.mxu0 0.0
        %1416 = vmatpush1.msra.mxu0 0.0
        %1417 = vmatprep.subr.mxu0 0.0
        %1418 = vmatpush1.msra.mxu0 0.0
        %1419 = vmatprep.subr.mxu0 0.0
        %1420 = vmatpush1.msra.mxu0 0.0
        %1421 = vmatprep.subr.mxu0 0.0
        %1422 = vmatpush1.msra.mxu0 0.0
        %1423 = vmatprep.subr.mxu0 0.0
        %1424 = vmatpush1.msra.mxu0 0.0
        %1425 = vmatprep.subr.mxu0 0.0
        %1426 = vmatpush1.msra.mxu0 0.0
        %1427 = vmatprep.subr.mxu0 0.0
        %1428 = vmatpush1.msra.mxu0 0.0
        %1429 = vmatprep.subr.mxu0 0.0
        %1430 = vmatpush1.msra.mxu0 0.0
        %1431 = vmatprep.subr.mxu0 0.0
        %1432 = vmatpush1.msra.mxu0 0.0
        %1433 = vmatprep.subr.mxu0 0.0
        %1434 = vmatpush1.msra.mxu0 0.0
        %1435 = vmatprep.subr.mxu0 0.0
        %1436 = vmatpush1.msra.mxu0 0.0
        %1437 = vmatprep.subr.mxu0 0.0
        %1438 = vmatpush1.msra.mxu0 0.0
        %1439 = vmatprep.subr.mxu0 0.0
        %1440 = vmatpush1.msra.mxu0 0.0
        %1441 = vmatprep.subr.mxu0 0.0
        %1442 = vmatpush1.msra.mxu0 0.0
        %1443 = vmatprep.subr.mxu0 0.0
        %1444 = vmatpush1.msra.mxu0 0.0
        %1445 = vmatprep.subr.mxu0 0.0
        %1446 = vmatpush1.msra.mxu0 0.0
        %1447 = vmatprep.subr.mxu0 0.0
        %1448 = vmatpush1.msra.mxu0 0.0
        %1449 = vmatprep.subr.mxu0 0.0
        %1450 = vmatpush1.msra.mxu0 0.0
        %1451 = vmatprep.subr.mxu0 0.0
        %1452 = vmatpush1.msra.mxu0 0.0
        %1453 = vmatprep.subr.mxu0 0.0
        %1454 = vmatpush1.msra.mxu0 0.0
        %1455 = vmatprep.subr.mxu0 0.0
        %1456 = vmatpush1.msra.mxu0 0.0
        %1457 = vmatprep.mubr.f32.mxu0 0.0
        %1458 = vmatmul.mubr.f32.gmra.mrb[0].mxu0 %v1391
        %v1459 = vpop.f32.mrb[0].mxu0
        %v1460 = vadd.f32 0.0, %v1459
        %v1461 = vpop.f32.mrb[0].mxu0
        %1462 = vdwg.mxu0
        %1464 = vrot.lane.b32.xlu0 %v880, 120
        %v1465 = vpop.permute.xlu0 %1464
        %v1468 = vsel %vm885, %v1385, 0
        %1470 = vmatprep.subr.mxu0 0.0
        %1471 = vmatpush1.msra.mxu0 %v1465
        %1472 = vmatprep.subr.mxu0 0.0
        %1473 = vmatpush1.msra.mxu0 0.0
        %1474 = vmatprep.subr.mxu0 0.0
        %1475 = vmatpush1.msra.mxu0 0.0
        %1476 = vmatprep.subr.mxu0 0.0
        %1477 = vmatpush1.msra.mxu0 0.0
        %1478 = vmatprep.subr.mxu0 0.0
        %1479 = vmatpush1.msra.mxu0 0.0
        %1480 = vmatprep.subr.mxu0 0.0
        %1481 = vmatpush1.msra.mxu0 0.0
        %1482 = vmatprep.subr.mxu0 0.0
        %1483 = vmatpush1.msra.mxu0 0.0
        %1484 = vmatprep.subr.mxu0 0.0
        %1485 = vmatpush1.msra.mxu0 0.0
        %1486 = vmatprep.subr.mxu0 0.0
        %1487 = vmatpush1.msra.mxu0 0.0
        %1488 = vmatprep.subr.mxu0 0.0
        %1489 = vmatpush1.msra.mxu0 0.0
        %1490 = vmatprep.subr.mxu0 0.0
        %1491 = vmatpush1.msra.mxu0 0.0
        %1492 = vmatprep.subr.mxu0 0.0
        %1493 = vmatpush1.msra.mxu0 0.0
        %1494 = vmatprep.subr.mxu0 0.0
        %1495 = vmatpush1.msra.mxu0 0.0
        %1496 = vmatprep.subr.mxu0 0.0
        %1497 = vmatpush1.msra.mxu0 0.0
        %1498 = vmatprep.subr.mxu0 0.0
        %1499 = vmatpush1.msra.mxu0 0.0
        %1500 = vmatprep.subr.mxu0 0.0
        %1501 = vmatpush1.msra.mxu0 0.0
        %1502 = vmatprep.subr.mxu0 0.0
        %1503 = vmatpush1.msra.mxu0 0.0
        %1504 = vmatprep.subr.mxu0 0.0
        %1505 = vmatpush1.msra.mxu0 0.0
        %1506 = vmatprep.subr.mxu0 0.0
        %1507 = vmatpush1.msra.mxu0 0.0
        %1508 = vmatprep.subr.mxu0 0.0
        %1509 = vmatpush1.msra.mxu0 0.0
        %1510 = vmatprep.subr.mxu0 0.0
        %1511 = vmatpush1.msra.mxu0 0.0
        %1512 = vmatprep.subr.mxu0 0.0
        %1513 = vmatpush1.msra.mxu0 0.0
        %1514 = vmatprep.subr.mxu0 0.0
        %1515 = vmatpush1.msra.mxu0 0.0
        %1516 = vmatprep.subr.mxu0 0.0
        %1517 = vmatpush1.msra.mxu0 0.0
        %1518 = vmatprep.subr.mxu0 0.0
        %1519 = vmatpush1.msra.mxu0 0.0
        %1520 = vmatprep.subr.mxu0 0.0
        %1521 = vmatpush1.msra.mxu0 0.0
        %1522 = vmatprep.subr.mxu0 0.0
        %1523 = vmatpush1.msra.mxu0 0.0
        %1524 = vmatprep.subr.mxu0 0.0
        %1525 = vmatpush1.msra.mxu0 0.0
        %1526 = vmatprep.subr.mxu0 0.0
        %1527 = vmatpush1.msra.mxu0 0.0
        %1528 = vmatprep.subr.mxu0 0.0
        %1529 = vmatpush1.msra.mxu0 0.0
        %1530 = vmatprep.subr.mxu0 0.0
        %1531 = vmatpush1.msra.mxu0 0.0
        %1532 = vmatprep.subr.mxu0 0.0
        %1533 = vmatpush1.msra.mxu0 0.0
        %1534 = vmatprep.mubr.f32.mxu0 0.0
        %1535 = vmatmul.mubr.f32.gmra.mrb[0].mxu0 %v1468
        %v1536 = vpop.f32.mrb[0].mxu0
        %v1537 = vadd.f32 0.0, %v1536
        %v1538 = vpop.f32.mrb[0].mxu0
        %1539 = vdwg.mxu0
        %v1540 = vpack.c.bf16 %v1537, %v1460
        %v1541 = vld [vmem:[%s9 + $0x4] sm:$0xf]
        %v1543 = vsel %vm885, %v1540, 0
        %vm1545 = vcmask 1043456
        %v1547 = vsel %vm1545, %v1541, 0
        %1549 = vmatprep.subr.bf16.mxu0 0
        %1550 = vmatpush1.bf16.msra.mxu0 %v1547
        %1551 = vmatprep.subr.bf16.mxu0 0
        %1552 = vmatpush1.bf16.msra.mxu0 0
        %1553 = vmatprep.subr.bf16.mxu0 0
        %1554 = vmatpush1.bf16.msra.mxu0 0
        %1555 = vmatprep.subr.bf16.mxu0 0
        %1556 = vmatpush1.bf16.msra.mxu0 0
        %1557 = vmatprep.subr.bf16.mxu0 0
        %1558 = vmatpush1.bf16.msra.mxu0 0
        %1559 = vmatprep.subr.bf16.mxu0 0
        %1560 = vmatpush1.bf16.msra.mxu0 0
        %1561 = vmatprep.subr.bf16.mxu0 0
        %1562 = vmatpush1.bf16.msra.mxu0 0
        %1563 = vmatprep.subr.bf16.mxu0 0
        %1564 = vmatpush1.bf16.msra.mxu0 0
        %1565 = vmatprep.subr.bf16.mxu0 0
        %1566 = vmatpush1.bf16.msra.mxu0 0
        %1567 = vmatprep.subr.bf16.mxu0 0
        %1568 = vmatpush1.bf16.msra.mxu0 0
        %1569 = vmatprep.subr.bf16.mxu0 0
        %1570 = vmatpush1.bf16.msra.mxu0 0
        %1571 = vmatprep.subr.bf16.mxu0 0
        %1572 = vmatpush1.bf16.msra.mxu0 0
        %1573 = vmatprep.subr.bf16.mxu0 0
        %1574 = vmatpush1.bf16.msra.mxu0 0
        %1575 = vmatprep.subr.bf16.mxu0 0
        %1576 = vmatpush1.bf16.msra.mxu0 0
        %1577 = vmatprep.subr.bf16.mxu0 0
        %1578 = vmatpush1.bf16.msra.mxu0 0
        %1579 = vmatprep.subr.bf16.mxu0 0
        %1580 = vmatpush1.bf16.msra.mxu0 0
        %1581 = vmatprep.mubr.bf16.mxu0 0
        %1582 = vmatmul.mubr.bf16.gmra.mrb[0].mxu0 %v1543
        %v1583 = vpop.f32.mrb[0].mxu0
        %v1584 = vadd.f32 0.0, %v1583
        %v1585 = vpop.f32.mrb[0].mxu0
        %v1586 = vpop.f32.mrb[0].mxu0
        %v1587 = vadd.f32 0.0, %v1586
        %v1588 = vpop.f32.mrb[0].mxu0
        %1589 = vdwg.mxu0
        %v1591 = vsel %vm885, %v1206, 0
        %v1594 = vsel %vm1545, %v1207, 0
        %1596 = vmatprep.subr.bf16.mxu0 0
        %1597 = vmatpush1.bf16.msra.mxu0 %v1594
        %1598 = vmatprep.subr.bf16.mxu0 0
        %1599 = vmatpush1.bf16.msra.mxu0 0
        %1600 = vmatprep.subr.bf16.mxu0 0
        %1601 = vmatpush1.bf16.msra.mxu0 0
        %1602 = vmatprep.subr.bf16.mxu0 0
        %1603 = vmatpush1.bf16.msra.mxu0 0
        %1604 = vmatprep.subr.bf16.mxu0 0
        %1605 = vmatpush1.bf16.msra.mxu0 0
        %1606 = vmatprep.subr.bf16.mxu0 0
        %1607 = vmatpush1.bf16.msra.mxu0 0
        %1608 = vmatprep.subr.bf16.mxu0 0
        %1609 = vmatpush1.bf16.msra.mxu0 0
        %1610 = vmatprep.subr.bf16.mxu0 0
        %1611 = vmatpush1.bf16.msra.mxu0 0
        %1612 = vmatprep.subr.bf16.mxu0 0
        %1613 = vmatpush1.bf16.msra.mxu0 0
        %1614 = vmatprep.subr.bf16.mxu0 0
        %1615 = vmatpush1.bf16.msra.mxu0 0
        %1616 = vmatprep.subr.bf16.mxu0 0
        %1617 = vmatpush1.bf16.msra.mxu0 0
        %1618 = vmatprep.subr.bf16.mxu0 0
        %1619 = vmatpush1.bf16.msra.mxu0 0
        %1620 = vmatprep.subr.bf16.mxu0 0
        %1621 = vmatpush1.bf16.msra.mxu0 0
        %1622 = vmatprep.subr.bf16.mxu0 0
        %1623 = vmatpush1.bf16.msra.mxu0 0
        %1624 = vmatprep.subr.bf16.mxu0 0
        %1625 = vmatpush1.bf16.msra.mxu0 0
        %1626 = vmatprep.subr.bf16.mxu0 0
        %1627 = vmatpush1.bf16.msra.mxu0 0
        %1628 = vmatprep.mubr.bf16.mxu0 0
        %1629 = vmatmul.mubr.bf16.gmra.mrb[0].mxu0 %v1591
        %v1630 = vpop.f32.mrb[0].mxu0
        %v1631 = vadd.f32 %v1584, %v1630
        %v1632 = vpop.f32.mrb[0].mxu0
        %v1633 = vpop.f32.mrb[0].mxu0
        %v1634 = vadd.f32 %v1587, %v1633
        %v1635 = vpop.f32.mrb[0].mxu0
        %1636 = vdwg.mxu0
        %1637 = vrot.lane.b32.xlu0 %v883, 112
        %v1638 = vpop.permute.xlu0 %1637
        %1639 = vrot.lane.b32.xlu0 %v813, 112
        %v1640 = vpop.permute.xlu0 %1639
        %v1641 = vsel %vm885, %v1638, 0
        %v1643 = vsel %vm885, %v1640, 0
        %1645 = vmatprep.subr.mxu0 0.0
        %1646 = vmatpush1.xpose.msra.mxu0 %v1643
        %1647 = vmatprep.subr.mxu0 0.0
        %1648 = vmatpush1.xpose.msra.mxu0 0.0
        %1649 = vmatprep.subr.mxu0 0.0
        %1650 = vmatpush1.xpose.msra.mxu0 0.0
        %1651 = vmatprep.subr.mxu0 0.0
        %1652 = vmatpush1.xpose.msra.mxu0 0.0
        %1653 = vmatprep.subr.mxu0 0.0
        %1654 = vmatpush1.xpose.msra.mxu0 0.0
        %1655 = vmatprep.subr.mxu0 0.0
        %1656 = vmatpush1.xpose.msra.mxu0 0.0
        %1657 = vmatprep.subr.mxu0 0.0
        %1658 = vmatpush1.xpose.msra.mxu0 0.0
        %1659 = vmatprep.subr.mxu0 0.0
        %1660 = vmatpush1.xpose.msra.mxu0 0.0
        %1661 = vmatprep.subr.mxu0 0.0
        %1662 = vmatpush1.xpose.msra.mxu0 0.0
        %1663 = vmatprep.subr.mxu0 0.0
        %1664 = vmatpush1.xpose.msra.mxu0 0.0
        %1665 = vmatprep.subr.mxu0 0.0
        %1666 = vmatpush1.xpose.msra.mxu0 0.0
        %1667 = vmatprep.subr.mxu0 0.0
        %1668 = vmatpush1.xpose.msra.mxu0 0.0
        %1669 = vmatprep.subr.mxu0 0.0
        %1670 = vmatpush1.xpose.msra.mxu0 0.0
        %1671 = vmatprep.subr.mxu0 0.0
        %1672 = vmatpush1.xpose.msra.mxu0 0.0
        %1673 = vmatprep.subr.mxu0 0.0
        %1674 = vmatpush1.xpose.msra.mxu0 0.0
        %1675 = vmatprep.subr.mxu0 0.0
        %1676 = vmatpush1.xpose.msra.mxu0 0.0
        %1677 = vmatprep.subr.mxu0 0.0
        %1678 = vmatpush1.xpose.msra.mxu0 0.0
        %1679 = vmatprep.subr.mxu0 0.0
        %1680 = vmatpush1.xpose.msra.mxu0 0.0
        %1681 = vmatprep.subr.mxu0 0.0
        %1682 = vmatpush1.xpose.msra.mxu0 0.0
        %1683 = vmatprep.subr.mxu0 0.0
        %1684 = vmatpush1.xpose.msra.mxu0 0.0
        %1685 = vmatprep.subr.mxu0 0.0
        %1686 = vmatpush1.xpose.msra.mxu0 0.0
        %1687 = vmatprep.subr.mxu0 0.0
        %1688 = vmatpush1.xpose.msra.mxu0 0.0
        %1689 = vmatprep.subr.mxu0 0.0
        %1690 = vmatpush1.xpose.msra.mxu0 0.0
        %1691 = vmatprep.subr.mxu0 0.0
        %1692 = vmatpush1.xpose.msra.mxu0 0.0
        %1693 = vmatprep.subr.mxu0 0.0
        %1694 = vmatpush1.xpose.msra.mxu0 0.0
        %1695 = vmatprep.subr.mxu0 0.0
        %1696 = vmatpush1.xpose.msra.mxu0 0.0
        %1697 = vmatprep.subr.mxu0 0.0
        %1698 = vmatpush1.xpose.msra.mxu0 0.0
        %1699 = vmatprep.subr.mxu0 0.0
        %1700 = vmatpush1.xpose.msra.mxu0 0.0
        %1701 = vmatprep.subr.mxu0 0.0
        %1702 = vmatpush1.xpose.msra.mxu0 0.0
        %1703 = vmatprep.subr.mxu0 0.0
        %1704 = vmatpush1.xpose.msra.mxu0 0.0
        %1705 = vmatprep.subr.mxu0 0.0
        %1706 = vmatpush1.xpose.msra.mxu0 0.0
        %1707 = vmatprep.subr.mxu0 0.0
        %1708 = vmatpush1.xpose.msra.mxu0 0.0
        %1709 = vmatprep.mubr.f32.mxu0 0.0
        %1710 = vmatmul.mubr.f32.gmra.mrb[0].mxu0 %v1641
        %v1711 = vpop.f32.mrb[0].mxu0
        %v1712 = vadd.f32 0.0, %v1711
        %v1713 = vpop.f32.mrb[0].mxu0
        %1714 = vdwg.mxu0
        %1715 = vrot.lane.b32.xlu0 %v884, 112
        %v1716 = vpop.permute.xlu0 %1715
        %1717 = vrot.lane.b32.xlu0 %v816, 112
        %v1718 = vpop.permute.xlu0 %1717
        %v1719 = vsel %vm885, %v1716, 0
        %v1721 = vsel %vm885, %v1718, 0
        %1723 = vmatprep.subr.mxu0 0.0
        %1724 = vmatpush1.xpose.msra.mxu0 %v1721
        %1725 = vmatprep.subr.mxu0 0.0
        %1726 = vmatpush1.xpose.msra.mxu0 0.0
        %1727 = vmatprep.subr.mxu0 0.0
        %1728 = vmatpush1.xpose.msra.mxu0 0.0
        %1729 = vmatprep.subr.mxu0 0.0
        %1730 = vmatpush1.xpose.msra.mxu0 0.0
        %1731 = vmatprep.subr.mxu0 0.0
        %1732 = vmatpush1.xpose.msra.mxu0 0.0
        %1733 = vmatprep.subr.mxu0 0.0
        %1734 = vmatpush1.xpose.msra.mxu0 0.0
        %1735 = vmatprep.subr.mxu0 0.0
        %1736 = vmatpush1.xpose.msra.mxu0 0.0
        %1737 = vmatprep.subr.mxu0 0.0
        %1738 = vmatpush1.xpose.msra.mxu0 0.0
        %1739 = vmatprep.subr.mxu0 0.0
        %1740 = vmatpush1.xpose.msra.mxu0 0.0
        %1741 = vmatprep.subr.mxu0 0.0
        %1742 = vmatpush1.xpose.msra.mxu0 0.0
        %1743 = vmatprep.subr.mxu0 0.0
        %1744 = vmatpush1.xpose.msra.mxu0 0.0
        %1745 = vmatprep.subr.mxu0 0.0
        %1746 = vmatpush1.xpose.msra.mxu0 0.0
        %1747 = vmatprep.subr.mxu0 0.0
        %1748 = vmatpush1.xpose.msra.mxu0 0.0
        %1749 = vmatprep.subr.mxu0 0.0
        %1750 = vmatpush1.xpose.msra.mxu0 0.0
        %1751 = vmatprep.subr.mxu0 0.0
        %1752 = vmatpush1.xpose.msra.mxu0 0.0
        %1753 = vmatprep.subr.mxu0 0.0
        %1754 = vmatpush1.xpose.msra.mxu0 0.0
        %1755 = vmatprep.subr.mxu0 0.0
        %1756 = vmatpush1.xpose.msra.mxu0 0.0
        %1757 = vmatprep.subr.mxu0 0.0
        %1758 = vmatpush1.xpose.msra.mxu0 0.0
        %1759 = vmatprep.subr.mxu0 0.0
        %1760 = vmatpush1.xpose.msra.mxu0 0.0
        %1761 = vmatprep.subr.mxu0 0.0
        %1762 = vmatpush1.xpose.msra.mxu0 0.0
        %1763 = vmatprep.subr.mxu0 0.0
        %1764 = vmatpush1.xpose.msra.mxu0 0.0
        %1765 = vmatprep.subr.mxu0 0.0
        %1766 = vmatpush1.xpose.msra.mxu0 0.0
        %1767 = vmatprep.subr.mxu0 0.0
        %1768 = vmatpush1.xpose.msra.mxu0 0.0
        %1769 = vmatprep.subr.mxu0 0.0
        %1770 = vmatpush1.xpose.msra.mxu0 0.0
        %1771 = vmatprep.subr.mxu0 0.0
        %1772 = vmatpush1.xpose.msra.mxu0 0.0
        %1773 = vmatprep.subr.mxu0 0.0
        %1774 = vmatpush1.xpose.msra.mxu0 0.0
        %1775 = vmatprep.subr.mxu0 0.0
        %1776 = vmatpush1.xpose.msra.mxu0 0.0
        %1777 = vmatprep.subr.mxu0 0.0
        %1778 = vmatpush1.xpose.msra.mxu0 0.0
        %1779 = vmatprep.subr.mxu0 0.0
        %1780 = vmatpush1.xpose.msra.mxu0 0.0
        %1781 = vmatprep.subr.mxu0 0.0
        %1782 = vmatpush1.xpose.msra.mxu0 0.0
        %1783 = vmatprep.subr.mxu0 0.0
        %1784 = vmatpush1.xpose.msra.mxu0 0.0
        %1785 = vmatprep.subr.mxu0 0.0
        %1786 = vmatpush1.xpose.msra.mxu0 0.0
        %1787 = vmatprep.mubr.f32.mxu0 0.0
        %1788 = vmatmul.mubr.f32.gmra.mrb[0].mxu0 %v1719
        %v1789 = vpop.f32.mrb[0].mxu0
        %v1790 = vadd.f32 0.0, %v1789
        %v1791 = vpop.f32.mrb[0].mxu0
        %1792 = vdwg.mxu0
        %v1793 = vsel %vm885, %v1712, -inf
        %1794 = vmax.xlane.f32.xlu0 %v1793
        %v1795 = vpop.xlane.xlu0 %1794
        %v1796 = vsel %vm885, %v1790, -inf
        %1797 = vmax.xlane.f32.xlu0 %v1796
        %v1798 = vpop.xlane.xlu0 %1797
        %v1799 = vsub.f32 %v1712, %v1795
        %v1800 = vsub.f32 %v1790, %v1798
        %v1801 = vmul.f32 %v1799, 1.442695
        %v1802 = vpow.pop %v1801
        %v1803 = vmul.f32 %v1800, 1.442695
        %v1804 = vpow.pop %v1803
        %v1805 = vsel %vm885, %v1802, 0.0
        %1806 = vadd.xlane.f32.xlu0 %v1805
        %v1807 = vpop.xlane.xlu0 %1806
        %v1808 = vsel %vm885, %v1804, 0.0
        %1809 = vadd.xlane.f32.xlu0 %v1808
        %v1810 = vpop.xlane.xlu0 %1809
        %v1811 = vrcp.pop %v1807
        %v1812 = vrcp.pop %v1810
        %v1813 = vmul.f32 %v1802, %v1811
        %v1814 = vmul.f32 %v1804, %v1812
        %1815 = vrot.lane.b32.xlu0 %v877, 112
        %v1816 = vpop.permute.xlu0 %1815
        %v1819 = vsel %vm885, %v1813, 0
        %1821 = vmatprep.subr.mxu0 0.0
        %1822 = vmatpush1.msra.mxu0 %v1816
        %1823 = vmatprep.subr.mxu0 0.0
        %1824 = vmatpush1.msra.mxu0 0.0
        %1825 = vmatprep.subr.mxu0 0.0
        %1826 = vmatpush1.msra.mxu0 0.0
        %1827 = vmatprep.subr.mxu0 0.0
        %1828 = vmatpush1.msra.mxu0 0.0
        %1829 = vmatprep.subr.mxu0 0.0
        %1830 = vmatpush1.msra.mxu0 0.0
        %1831 = vmatprep.subr.mxu0 0.0
        %1832 = vmatpush1.msra.mxu0 0.0
        %1833 = vmatprep.subr.mxu0 0.0
        %1834 = vmatpush1.msra.mxu0 0.0
        %1835 = vmatprep.subr.mxu0 0.0
        %1836 = vmatpush1.msra.mxu0 0.0
        %1837 = vmatprep.subr.mxu0 0.0
        %1838 = vmatpush1.msra.mxu0 0.0
        %1839 = vmatprep.subr.mxu0 0.0
        %1840 = vmatpush1.msra.mxu0 0.0
        %1841 = vmatprep.subr.mxu0 0.0
        %1842 = vmatpush1.msra.mxu0 0.0
        %1843 = vmatprep.subr.mxu0 0.0
        %1844 = vmatpush1.msra.mxu0 0.0
        %1845 = vmatprep.subr.mxu0 0.0
        %1846 = vmatpush1.msra.mxu0 0.0
        %1847 = vmatprep.subr.mxu0 0.0
        %1848 = vmatpush1.msra.mxu0 0.0
        %1849 = vmatprep.subr.mxu0 0.0
        %1850 = vmatpush1.msra.mxu0 0.0
        %1851 = vmatprep.subr.mxu0 0.0
        %1852 = vmatpush1.msra.mxu0 0.0
        %1853 = vmatprep.subr.mxu0 0.0
        %1854 = vmatpush1.msra.mxu0 0.0
        %1855 = vmatprep.subr.mxu0 0.0
        %1856 = vmatpush1.msra.mxu0 0.0
        %1857 = vmatprep.subr.mxu0 0.0
        %1858 = vmatpush1.msra.mxu0 0.0
        %1859 = vmatprep.subr.mxu0 0.0
        %1860 = vmatpush1.msra.mxu0 0.0
        %1861 = vmatprep.subr.mxu0 0.0
        %1862 = vmatpush1.msra.mxu0 0.0
        %1863 = vmatprep.subr.mxu0 0.0
        %1864 = vmatpush1.msra.mxu0 0.0
        %1865 = vmatprep.subr.mxu0 0.0
        %1866 = vmatpush1.msra.mxu0 0.0
        %1867 = vmatprep.subr.mxu0 0.0
        %1868 = vmatpush1.msra.mxu0 0.0
        %1869 = vmatprep.subr.mxu0 0.0
        %1870 = vmatpush1.msra.mxu0 0.0
        %1871 = vmatprep.subr.mxu0 0.0
        %1872 = vmatpush1.msra.mxu0 0.0
        %1873 = vmatprep.subr.mxu0 0.0
        %1874 = vmatpush1.msra.mxu0 0.0
        %1875 = vmatprep.subr.mxu0 0.0
        %1876 = vmatpush1.msra.mxu0 0.0
        %1877 = vmatprep.subr.mxu0 0.0
        %1878 = vmatpush1.msra.mxu0 0.0
        %1879 = vmatprep.subr.mxu0 0.0
        %1880 = vmatpush1.msra.mxu0 0.0
        %1881 = vmatprep.subr.mxu0 0.0
        %1882 = vmatpush1.msra.mxu0 0.0
        %1883 = vmatprep.subr.mxu0 0.0
        %1884 = vmatpush1.msra.mxu0 0.0
        %1885 = vmatprep.mubr.f32.mxu0 0.0
        %1886 = vmatmul.mubr.f32.gmra.mrb[0].mxu0 %v1819
        %v1887 = vpop.f32.mrb[0].mxu0
        %v1888 = vadd.f32 0.0, %v1887
        %v1889 = vpop.f32.mrb[0].mxu0
        %1890 = vdwg.mxu0
        %1891 = vrot.lane.b32.xlu0 %v880, 112
        %v1892 = vpop.permute.xlu0 %1891
        %v1895 = vsel %vm885, %v1814, 0
        %1897 = vmatprep.subr.mxu0 0.0
        %1898 = vmatpush1.msra.mxu0 %v1892
        %1899 = vmatprep.subr.mxu0 0.0
        %1900 = vmatpush1.msra.mxu0 0.0
        %1901 = vmatprep.subr.mxu0 0.0
        %1902 = vmatpush1.msra.mxu0 0.0
        %1903 = vmatprep.subr.mxu0 0.0
        %1904 = vmatpush1.msra.mxu0 0.0
        %1905 = vmatprep.subr.mxu0 0.0
        %1906 = vmatpush1.msra.mxu0 0.0
        %1907 = vmatprep.subr.mxu0 0.0
        %1908 = vmatpush1.msra.mxu0 0.0
        %1909 = vmatprep.subr.mxu0 0.0
        %1910 = vmatpush1.msra.mxu0 0.0
        %1911 = vmatprep.subr.mxu0 0.0
        %1912 = vmatpush1.msra.mxu0 0.0
        %1913 = vmatprep.subr.mxu0 0.0
        %1914 = vmatpush1.msra.mxu0 0.0
        %1915 = vmatprep.subr.mxu0 0.0
        %1916 = vmatpush1.msra.mxu0 0.0
        %1917 = vmatprep.subr.mxu0 0.0
        %1918 = vmatpush1.msra.mxu0 0.0
        %1919 = vmatprep.subr.mxu0 0.0
        %1920 = vmatpush1.msra.mxu0 0.0
        %1921 = vmatprep.subr.mxu0 0.0
        %1922 = vmatpush1.msra.mxu0 0.0
        %1923 = vmatprep.subr.mxu0 0.0
        %1924 = vmatpush1.msra.mxu0 0.0
        %1925 = vmatprep.subr.mxu0 0.0
        %1926 = vmatpush1.msra.mxu0 0.0
        %1927 = vmatprep.subr.mxu0 0.0
        %1928 = vmatpush1.msra.mxu0 0.0
        %1929 = vmatprep.subr.mxu0 0.0
        %1930 = vmatpush1.msra.mxu0 0.0
        %1931 = vmatprep.subr.mxu0 0.0
        %1932 = vmatpush1.msra.mxu0 0.0
        %1933 = vmatprep.subr.mxu0 0.0
        %1934 = vmatpush1.msra.mxu0 0.0
        %1935 = vmatprep.subr.mxu0 0.0
        %1936 = vmatpush1.msra.mxu0 0.0
        %1937 = vmatprep.subr.mxu0 0.0
        %1938 = vmatpush1.msra.mxu0 0.0
        %1939 = vmatprep.subr.mxu0 0.0
        %1940 = vmatpush1.msra.mxu0 0.0
        %1941 = vmatprep.subr.mxu0 0.0
        %1942 = vmatpush1.msra.mxu0 0.0
        %1943 = vmatprep.subr.mxu0 0.0
        %1944 = vmatpush1.msra.mxu0 0.0
        %1945 = vmatprep.subr.mxu0 0.0
        %1946 = vmatpush1.msra.mxu0 0.0
        %1947 = vmatprep.subr.mxu0 0.0
        %1948 = vmatpush1.msra.mxu0 0.0
        %1949 = vmatprep.subr.mxu0 0.0
        %1950 = vmatpush1.msra.mxu0 0.0
        %1951 = vmatprep.subr.mxu0 0.0
        %1952 = vmatpush1.msra.mxu0 0.0
        %1953 = vmatprep.subr.mxu0 0.0
        %1954 = vmatpush1.msra.mxu0 0.0
        %1955 = vmatprep.subr.mxu0 0.0
        %1956 = vmatpush1.msra.mxu0 0.0
        %1957 = vmatprep.subr.mxu0 0.0
        %1958 = vmatpush1.msra.mxu0 0.0
        %1959 = vmatprep.subr.mxu0 0.0
        %1960 = vmatpush1.msra.mxu0 0.0
        %1961 = vmatprep.mubr.f32.mxu0 0.0
        %1962 = vmatmul.mubr.f32.gmra.mrb[0].mxu0 %v1895
        %v1963 = vpop.f32.mrb[0].mxu0
        %v1964 = vadd.f32 0.0, %v1963
        %v1965 = vpop.f32.mrb[0].mxu0
        %1966 = vdwg.mxu0
        %v1967 = vpack.c.bf16 %v1964, %v1888
        %v1968 = vld [vmem:[%s9 + $0x8] sm:$0xf]
        %v1970 = vsel %vm885, %v1967, 0
        %v1973 = vsel %vm1545, %v1968, 0
        %1975 = vmatprep.subr.bf16.mxu0 0
        %1976 = vmatpush1.bf16.msra.mxu0 %v1973
        %1977 = vmatprep.subr.bf16.mxu0 0
        %1978 = vmatpush1.bf16.msra.mxu0 0
        %1979 = vmatprep.subr.bf16.mxu0 0
        %1980 = vmatpush1.bf16.msra.mxu0 0
        %1981 = vmatprep.subr.bf16.mxu0 0
        %1982 = vmatpush1.bf16.msra.mxu0 0
        %1983 = vmatprep.subr.bf16.mxu0 0
        %1984 = vmatpush1.bf16.msra.mxu0 0
        %1985 = vmatprep.subr.bf16.mxu0 0
        %1986 = vmatpush1.bf16.msra.mxu0 0
        %1987 = vmatprep.subr.bf16.mxu0 0
        %1988 = vmatpush1.bf16.msra.mxu0 0
        %1989 = vmatprep.subr.bf16.mxu0 0
        %1990 = vmatpush1.bf16.msra.mxu0 0
        %1991 = vmatprep.subr.bf16.mxu0 0
        %1992 = vmatpush1.bf16.msra.mxu0 0
        %1993 = vmatprep.subr.bf16.mxu0 0
        %1994 = vmatpush1.bf16.msra.mxu0 0
        %1995 = vmatprep.subr.bf16.mxu0 0
        %1996 = vmatpush1.bf16.msra.mxu0 0
        %1997 = vmatprep.subr.bf16.mxu0 0
        %1998 = vmatpush1.bf16.msra.mxu0 0
        %1999 = vmatprep.subr.bf16.mxu0 0
        %2000 = vmatpush1.bf16.msra.mxu0 0
        %2001 = vmatprep.subr.bf16.mxu0 0
        %2002 = vmatpush1.bf16.msra.mxu0 0
        %2003 = vmatprep.subr.bf16.mxu0 0
        %2004 = vmatpush1.bf16.msra.mxu0 0
        %2005 = vmatprep.subr.bf16.mxu0 0
        %2006 = vmatpush1.bf16.msra.mxu0 0
        %2007 = vmatprep.mubr.bf16.mxu0 0
        %2008 = vmatmul.mubr.bf16.gmra.mrb[0].mxu0 %v1970
        %v2009 = vpop.f32.mrb[0].mxu0
        %v2010 = vadd.f32 0.0, %v2009
        %v2011 = vpop.f32.mrb[0].mxu0
        %v2012 = vpop.f32.mrb[0].mxu0
        %v2013 = vadd.f32 0.0, %v2012
        %v2014 = vpop.f32.mrb[0].mxu0
        %2015 = vdwg.mxu0
        %v2016 = vadd.f32 %v1631, %v2010
        %v2017 = vadd.f32 %v1634, %v2013
        %2018 = vrot.lane.b32.xlu0 %v883, 104
        %v2019 = vpop.permute.xlu0 %2018
        %2020 = vrot.lane.b32.xlu0 %v813, 104
        %v2021 = vpop.permute.xlu0 %2020
        %v2022 = vsel %vm885, %v2019, 0
        %v2024 = vsel %vm885, %v2021, 0
        %2026 = vmatprep.subr.mxu0 0.0
        %2027 = vmatpush1.xpose.msra.mxu0 %v2024
        %2028 = vmatprep.subr.mxu0 0.0
        %2029 = vmatpush1.xpose.msra.mxu0 0.0
        %2030 = vmatprep.subr.mxu0 0.0
        %2031 = vmatpush1.xpose.msra.mxu0 0.0
        %2032 = vmatprep.subr.mxu0 0.0
        %2033 = vmatpush1.xpose.msra.mxu0 0.0
        %2034 = vmatprep.subr.mxu0 0.0
        %2035 = vmatpush1.xpose.msra.mxu0 0.0
        %2036 = vmatprep.subr.mxu0 0.0
        %2037 = vmatpush1.xpose.msra.mxu0 0.0
        %2038 = vmatprep.subr.mxu0 0.0
        %2039 = vmatpush1.xpose.msra.mxu0 0.0
        %2040 = vmatprep.subr.mxu0 0.0
        %2041 = vmatpush1.xpose.msra.mxu0 0.0
        %2042 = vmatprep.subr.mxu0 0.0
        %2043 = vmatpush1.xpose.msra.mxu0 0.0
        %2044 = vmatprep.subr.mxu0 0.0
        %2045 = vmatpush1.xpose.msra.mxu0 0.0
        %2046 = vmatprep.subr.mxu0 0.0
        %2047 = vmatpush1.xpose.msra.mxu0 0.0
        %2048 = vmatprep.subr.mxu0 0.0
        %2049 = vmatpush1.xpose.msra.mxu0 0.0
        %2050 = vmatprep.subr.mxu0 0.0
        %2051 = vmatpush1.xpose.msra.mxu0 0.0
        %2052 = vmatprep.subr.mxu0 0.0
        %2053 = vmatpush1.xpose.msra.mxu0 0.0
        %2054 = vmatprep.subr.mxu0 0.0
        %2055 = vmatpush1.xpose.msra.mxu0 0.0
        %2056 = vmatprep.subr.mxu0 0.0
        %2057 = vmatpush1.xpose.msra.mxu0 0.0
        %2058 = vmatprep.subr.mxu0 0.0
        %2059 = vmatpush1.xpose.msra.mxu0 0.0
        %2060 = vmatprep.subr.mxu0 0.0
        %2061 = vmatpush1.xpose.msra.mxu0 0.0
        %2062 = vmatprep.subr.mxu0 0.0
        %2063 = vmatpush1.xpose.msra.mxu0 0.0
        %2064 = vmatprep.subr.mxu0 0.0
        %2065 = vmatpush1.xpose.msra.mxu0 0.0
        %2066 = vmatprep.subr.mxu0 0.0
        %2067 = vmatpush1.xpose.msra.mxu0 0.0
        %2068 = vmatprep.subr.mxu0 0.0
        %2069 = vmatpush1.xpose.msra.mxu0 0.0
        %2070 = vmatprep.subr.mxu0 0.0
        %2071 = vmatpush1.xpose.msra.mxu0 0.0
        %2072 = vmatprep.subr.mxu0 0.0
        %2073 = vmatpush1.xpose.msra.mxu0 0.0
        %2074 = vmatprep.subr.mxu0 0.0
        %2075 = vmatpush1.xpose.msra.mxu0 0.0
        %2076 = vmatprep.subr.mxu0 0.0
        %2077 = vmatpush1.xpose.msra.mxu0 0.0
        %2078 = vmatprep.subr.mxu0 0.0
        %2079 = vmatpush1.xpose.msra.mxu0 0.0
        %2080 = vmatprep.subr.mxu0 0.0
        %2081 = vmatpush1.xpose.msra.mxu0 0.0
        %2082 = vmatprep.subr.mxu0 0.0
        %2083 = vmatpush1.xpose.msra.mxu0 0.0
        %2084 = vmatprep.subr.mxu0 0.0
        %2085 = vmatpush1.xpose.msra.mxu0 0.0
        %2086 = vmatprep.subr.mxu0 0.0
        %2087 = vmatpush1.xpose.msra.mxu0 0.0
        %2088 = vmatprep.subr.mxu0 0.0
        %2089 = vmatpush1.xpose.msra.mxu0 0.0
        %2090 = vmatprep.mubr.f32.mxu0 0.0
        %2091 = vmatmul.mubr.f32.gmra.mrb[0].mxu0 %v2022
        %v2092 = vpop.f32.mrb[0].mxu0
        %v2093 = vadd.f32 0.0, %v2092
        %v2094 = vpop.f32.mrb[0].mxu0
        %2095 = vdwg.mxu0
        %2096 = vrot.lane.b32.xlu0 %v884, 104
        %v2097 = vpop.permute.xlu0 %2096
        %2098 = vrot.lane.b32.xlu0 %v816, 104
        %v2099 = vpop.permute.xlu0 %2098
        %v2100 = vsel %vm885, %v2097, 0
        %v2102 = vsel %vm885, %v2099, 0
        %2104 = vmatprep.subr.mxu0 0.0
        %2105 = vmatpush1.xpose.msra.mxu0 %v2102
        %2106 = vmatprep.subr.mxu0 0.0
        %2107 = vmatpush1.xpose.msra.mxu0 0.0
        %2108 = vmatprep.subr.mxu0 0.0
        %2109 = vmatpush1.xpose.msra.mxu0 0.0
        %2110 = vmatprep.subr.mxu0 0.0
        %2111 = vmatpush1.xpose.msra.mxu0 0.0
        %2112 = vmatprep.subr.mxu0 0.0
        %2113 = vmatpush1.xpose.msra.mxu0 0.0
        %2114 = vmatprep.subr.mxu0 0.0
        %2115 = vmatpush1.xpose.msra.mxu0 0.0
        %2116 = vmatprep.subr.mxu0 0.0
        %2117 = vmatpush1.xpose.msra.mxu0 0.0
        %2118 = vmatprep.subr.mxu0 0.0
        %2119 = vmatpush1.xpose.msra.mxu0 0.0
        %2120 = vmatprep.subr.mxu0 0.0
        %2121 = vmatpush1.xpose.msra.mxu0 0.0
        %2122 = vmatprep.subr.mxu0 0.0
        %2123 = vmatpush1.xpose.msra.mxu0 0.0
        %2124 = vmatprep.subr.mxu0 0.0
        %2125 = vmatpush1.xpose.msra.mxu0 0.0
        %2126 = vmatprep.subr.mxu0 0.0
        %2127 = vmatpush1.xpose.msra.mxu0 0.0
        %2128 = vmatprep.subr.mxu0 0.0
        %2129 = vmatpush1.xpose.msra.mxu0 0.0
        %2130 = vmatprep.subr.mxu0 0.0
        %2131 = vmatpush1.xpose.msra.mxu0 0.0
        %2132 = vmatprep.subr.mxu0 0.0
        %2133 = vmatpush1.xpose.msra.mxu0 0.0
        %2134 = vmatprep.subr.mxu0 0.0
        %2135 = vmatpush1.xpose.msra.mxu0 0.0
        %2136 = vmatprep.subr.mxu0 0.0
        %2137 = vmatpush1.xpose.msra.mxu0 0.0
        %2138 = vmatprep.subr.mxu0 0.0
        %2139 = vmatpush1.xpose.msra.mxu0 0.0
        %2140 = vmatprep.subr.mxu0 0.0
        %2141 = vmatpush1.xpose.msra.mxu0 0.0
        %2142 = vmatprep.subr.mxu0 0.0
        %2143 = vmatpush1.xpose.msra.mxu0 0.0
        %2144 = vmatprep.subr.mxu0 0.0
        %2145 = vmatpush1.xpose.msra.mxu0 0.0
        %2146 = vmatprep.subr.mxu0 0.0
        %2147 = vmatpush1.xpose.msra.mxu0 0.0
        %2148 = vmatprep.subr.mxu0 0.0
        %2149 = vmatpush1.xpose.msra.mxu0 0.0
        %2150 = vmatprep.subr.mxu0 0.0
        %2151 = vmatpush1.xpose.msra.mxu0 0.0
        %2152 = vmatprep.subr.mxu0 0.0
        %2153 = vmatpush1.xpose.msra.mxu0 0.0
        %2154 = vmatprep.subr.mxu0 0.0
        %2155 = vmatpush1.xpose.msra.mxu0 0.0
        %2156 = vmatprep.subr.mxu0 0.0
        %2157 = vmatpush1.xpose.msra.mxu0 0.0
        %2158 = vmatprep.subr.mxu0 0.0
        %2159 = vmatpush1.xpose.msra.mxu0 0.0
        %2160 = vmatprep.subr.mxu0 0.0
        %2161 = vmatpush1.xpose.msra.mxu0 0.0
        %2162 = vmatprep.subr.mxu0 0.0
        %2163 = vmatpush1.xpose.msra.mxu0 0.0
        %2164 = vmatprep.subr.mxu0 0.0
        %2165 = vmatpush1.xpose.msra.mxu0 0.0
        %2166 = vmatprep.subr.mxu0 0.0
        %2167 = vmatpush1.xpose.msra.mxu0 0.0
        %2168 = vmatprep.mubr.f32.mxu0 0.0
        %2169 = vmatmul.mubr.f32.gmra.mrb[0].mxu0 %v2100
        %v2170 = vpop.f32.mrb[0].mxu0
        %v2171 = vadd.f32 0.0, %v2170
        %v2172 = vpop.f32.mrb[0].mxu0
        %2173 = vdwg.mxu0
        %v2174 = vsel %vm885, %v2093, -inf
        %2175 = vmax.xlane.f32.xlu0 %v2174
        %v2176 = vpop.xlane.xlu0 %2175
        %v2177 = vsel %vm885, %v2171, -inf
        %2178 = vmax.xlane.f32.xlu0 %v2177
        %v2179 = vpop.xlane.xlu0 %2178
        %v2180 = vsub.f32 %v2093, %v2176
        %v2181 = vsub.f32 %v2171, %v2179
        %v2182 = vmul.f32 %v2180, 1.442695
        %v2183 = vpow.pop %v2182
        %v2184 = vmul.f32 %v2181, 1.442695
        %v2185 = vpow.pop %v2184
        %v2186 = vsel %vm885, %v2183, 0.0
        %2187 = vadd.xlane.f32.xlu0 %v2186
        %v2188 = vpop.xlane.xlu0 %2187
        %v2189 = vsel %vm885, %v2185, 0.0
        %2190 = vadd.xlane.f32.xlu0 %v2189
        %v2191 = vpop.xlane.xlu0 %2190
        %v2192 = vrcp.pop %v2188
        %v2193 = vrcp.pop %v2191
        %v2194 = vmul.f32 %v2183, %v2192
        %v2195 = vmul.f32 %v2185, %v2193
        %2196 = vrot.lane.b32.xlu0 %v877, 104
        %v2197 = vpop.permute.xlu0 %2196
        %v2200 = vsel %vm885, %v2194, 0
        %2202 = vmatprep.subr.mxu0 0.0
        %2203 = vmatpush1.msra.mxu0 %v2197
        %2204 = vmatprep.subr.mxu0 0.0
        %2205 = vmatpush1.msra.mxu0 0.0
        %2206 = vmatprep.subr.mxu0 0.0
        %2207 = vmatpush1.msra.mxu0 0.0
        %2208 = vmatprep.subr.mxu0 0.0
        %2209 = vmatpush1.msra.mxu0 0.0
        %2210 = vmatprep.subr.mxu0 0.0
        %2211 = vmatpush1.msra.mxu0 0.0
        %2212 = vmatprep.subr.mxu0 0.0
        %2213 = vmatpush1.msra.mxu0 0.0
        %2214 = vmatprep.subr.mxu0 0.0
        %2215 = vmatpush1.msra.mxu0 0.0
        %2216 = vmatprep.subr.mxu0 0.0
        %2217 = vmatpush1.msra.mxu0 0.0
        %2218 = vmatprep.subr.mxu0 0.0
        %2219 = vmatpush1.msra.mxu0 0.0
        %2220 = vmatprep.subr.mxu0 0.0
        %2221 = vmatpush1.msra.mxu0 0.0
        %2222 = vmatprep.subr.mxu0 0.0
        %2223 = vmatpush1.msra.mxu0 0.0
        %2224 = vmatprep.subr.mxu0 0.0
        %2225 = vmatpush1.msra.mxu0 0.0
        %2226 = vmatprep.subr.mxu0 0.0
        %2227 = vmatpush1.msra.mxu0 0.0
        %2228 = vmatprep.subr.mxu0 0.0
        %2229 = vmatpush1.msra.mxu0 0.0
        %2230 = vmatprep.subr.mxu0 0.0
        %2231 = vmatpush1.msra.mxu0 0.0
        %2232 = vmatprep.subr.mxu0 0.0
        %2233 = vmatpush1.msra.mxu0 0.0
        %2234 = vmatprep.subr.mxu0 0.0
        %2235 = vmatpush1.msra.mxu0 0.0
        %2236 = vmatprep.subr.mxu0 0.0
        %2237 = vmatpush1.msra.mxu0 0.0
        %2238 = vmatprep.subr.mxu0 0.0
        %2239 = vmatpush1.msra.mxu0 0.0
        %2240 = vmatprep.subr.mxu0 0.0
        %2241 = vmatpush1.msra.mxu0 0.0
        %2242 = vmatprep.subr.mxu0 0.0
        %2243 = vmatpush1.msra.mxu0 0.0
        %2244 = vmatprep.subr.mxu0 0.0
        %2245 = vmatpush1.msra.mxu0 0.0
        %2246 = vmatprep.subr.mxu0 0.0
        %2247 = vmatpush1.msra.mxu0 0.0
        %2248 = vmatprep.subr.mxu0 0.0
        %2249 = vmatpush1.msra.mxu0 0.0
        %2250 = vmatprep.subr.mxu0 0.0
        %2251 = vmatpush1.msra.mxu0 0.0
        %2252 = vmatprep.subr.mxu0 0.0
        %2253 = vmatpush1.msra.mxu0 0.0
        %2254 = vmatprep.subr.mxu0 0.0
        %2255 = vmatpush1.msra.mxu0 0.0
        %2256 = vmatprep.subr.mxu0 0.0
        %2257 = vmatpush1.msra.mxu0 0.0
        %2258 = vmatprep.subr.mxu0 0.0
        %2259 = vmatpush1.msra.mxu0 0.0
        %2260 = vmatprep.subr.mxu0 0.0
        %2261 = vmatpush1.msra.mxu0 0.0
        %2262 = vmatprep.subr.mxu0 0.0
        %2263 = vmatpush1.msra.mxu0 0.0
        %2264 = vmatprep.subr.mxu0 0.0
        %2265 = vmatpush1.msra.mxu0 0.0
        %2266 = vmatprep.mubr.f32.mxu0 0.0
        %2267 = vmatmul.mubr.f32.gmra.mrb[0].mxu0 %v2200
        %v2268 = vpop.f32.mrb[0].mxu0
        %v2269 = vadd.f32 0.0, %v2268
        %v2270 = vpop.f32.mrb[0].mxu0
        %2271 = vdwg.mxu0
        %2272 = vrot.lane.b32.xlu0 %v880, 104
        %v2273 = vpop.permute.xlu0 %2272
        %v2276 = vsel %vm885, %v2195, 0
        %2278 = vmatprep.subr.mxu0 0.0
        %2279 = vmatpush1.msra.mxu0 %v2273
        %2280 = vmatprep.subr.mxu0 0.0
        %2281 = vmatpush1.msra.mxu0 0.0
        %2282 = vmatprep.subr.mxu0 0.0
        %2283 = vmatpush1.msra.mxu0 0.0
        %2284 = vmatprep.subr.mxu0 0.0
        %2285 = vmatpush1.msra.mxu0 0.0
        %2286 = vmatprep.subr.mxu0 0.0
        %2287 = vmatpush1.msra.mxu0 0.0
        %2288 = vmatprep.subr.mxu0 0.0
        %2289 = vmatpush1.msra.mxu0 0.0
        %2290 = vmatprep.subr.mxu0 0.0
        %2291 = vmatpush1.msra.mxu0 0.0
        %2292 = vmatprep.subr.mxu0 0.0
        %2293 = vmatpush1.msra.mxu0 0.0
        %2294 = vmatprep.subr.mxu0 0.0
        %2295 = vmatpush1.msra.mxu0 0.0
        %2296 = vmatprep.subr.mxu0 0.0
        %2297 = vmatpush1.msra.mxu0 0.0
        %2298 = vmatprep.subr.mxu0 0.0
        %2299 = vmatpush1.msra.mxu0 0.0
        %2300 = vmatprep.subr.mxu0 0.0
        %2301 = vmatpush1.msra.mxu0 0.0
        %2302 = vmatprep.subr.mxu0 0.0
        %2303 = vmatpush1.msra.mxu0 0.0
        %2304 = vmatprep.subr.mxu0 0.0
        %2305 = vmatpush1.msra.mxu0 0.0
        %2306 = vmatprep.subr.mxu0 0.0
        %2307 = vmatpush1.msra.mxu0 0.0
        %2308 = vmatprep.subr.mxu0 0.0
        %2309 = vmatpush1.msra.mxu0 0.0
        %2310 = vmatprep.subr.mxu0 0.0
        %2311 = vmatpush1.msra.mxu0 0.0
        %2312 = vmatprep.subr.mxu0 0.0
        %2313 = vmatpush1.msra.mxu0 0.0
        %2314 = vmatprep.subr.mxu0 0.0
        %2315 = vmatpush1.msra.mxu0 0.0
        %2316 = vmatprep.subr.mxu0 0.0
        %2317 = vmatpush1.msra.mxu0 0.0
        %2318 = vmatprep.subr.mxu0 0.0
        %2319 = vmatpush1.msra.mxu0 0.0
        %2320 = vmatprep.subr.mxu0 0.0
        %2321 = vmatpush1.msra.mxu0 0.0
        %2322 = vmatprep.subr.mxu0 0.0
        %2323 = vmatpush1.msra.mxu0 0.0
        %2324 = vmatprep.subr.mxu0 0.0
        %2325 = vmatpush1.msra.mxu0 0.0
        %2326 = vmatprep.subr.mxu0 0.0
        %2327 = vmatpush1.msra.mxu0 0.0
        %2328 = vmatprep.subr.mxu0 0.0
        %2329 = vmatpush1.msra.mxu0 0.0
        %2330 = vmatprep.subr.mxu0 0.0
        %2331 = vmatpush1.msra.mxu0 0.0
        %2332 = vmatprep.subr.mxu0 0.0
        %2333 = vmatpush1.msra.mxu0 0.0
        %2334 = vmatprep.subr.mxu0 0.0
        %2335 = vmatpush1.msra.mxu0 0.0
        %2336 = vmatprep.subr.mxu0 0.0
        %2337 = vmatpush1.msra.mxu0 0.0
        %2338 = vmatprep.subr.mxu0 0.0
        %2339 = vmatpush1.msra.mxu0 0.0
        %2340 = vmatprep.subr.mxu0 0.0
        %2341 = vmatpush1.msra.mxu0 0.0
        %2342 = vmatprep.mubr.f32.mxu0 0.0
        %2343 = vmatmul.mubr.f32.gmra.mrb[0].mxu0 %v2276
        %v2344 = vpop.f32.mrb[0].mxu0
        %v2345 = vadd.f32 0.0, %v2344
        %v2346 = vpop.f32.mrb[0].mxu0
        %2347 = vdwg.mxu0
        %v2348 = vpack.c.bf16 %v2345, %v2269
        %v2349 = vld [vmem:[%s9 + $0xc] sm:$0xf]
        %v2351 = vsel %vm885, %v2348, 0
        %v2354 = vsel %vm1545, %v2349, 0
        %2356 = vmatprep.subr.bf16.mxu0 0
        %2357 = vmatpush1.bf16.msra.mxu0 %v2354
        %2358 = vmatprep.subr.bf16.mxu0 0
        %2359 = vmatpush1.bf16.msra.mxu0 0
        %2360 = vmatprep.subr.bf16.mxu0 0
        %2361 = vmatpush1.bf16.msra.mxu0 0
        %2362 = vmatprep.subr.bf16.mxu0 0
        %2363 = vmatpush1.bf16.msra.mxu0 0
        %2364 = vmatprep.subr.bf16.mxu0 0
        %2365 = vmatpush1.bf16.msra.mxu0 0
        %2366 = vmatprep.subr.bf16.mxu0 0
        %2367 = vmatpush1.bf16.msra.mxu0 0
        %2368 = vmatprep.subr.bf16.mxu0 0
        %2369 = vmatpush1.bf16.msra.mxu0 0
        %2370 = vmatprep.subr.bf16.mxu0 0
        %2371 = vmatpush1.bf16.msra.mxu0 0
        %2372 = vmatprep.subr.bf16.mxu0 0
        %2373 = vmatpush1.bf16.msra.mxu0 0
        %2374 = vmatprep.subr.bf16.mxu0 0
        %2375 = vmatpush1.bf16.msra.mxu0 0
        %2376 = vmatprep.subr.bf16.mxu0 0
        %2377 = vmatpush1.bf16.msra.mxu0 0
        %2378 = vmatprep.subr.bf16.mxu0 0
        %2379 = vmatpush1.bf16.msra.mxu0 0
        %2380 = vmatprep.subr.bf16.mxu0 0
        %2381 = vmatpush1.bf16.msra.mxu0 0
        %2382 = vmatprep.subr.bf16.mxu0 0
        %2383 = vmatpush1.bf16.msra.mxu0 0
        %2384 = vmatprep.subr.bf16.mxu0 0
        %2385 = vmatpush1.bf16.msra.mxu0 0
        %2386 = vmatprep.subr.bf16.mxu0 0
        %2387 = vmatpush1.bf16.msra.mxu0 0
        %2388 = vmatprep.mubr.bf16.mxu0 0
        %2389 = vmatmul.mubr.bf16.gmra.mrb[0].mxu0 %v2351
        %v2390 = vpop.f32.mrb[0].mxu0
        %v2391 = vadd.f32 0.0, %v2390
        %v2392 = vpop.f32.mrb[0].mxu0
        %v2393 = vpop.f32.mrb[0].mxu0
        %v2394 = vadd.f32 0.0, %v2393
        %v2395 = vpop.f32.mrb[0].mxu0
        %2396 = vdwg.mxu0
        %v2397 = vadd.f32 %v2016, %v2391
        %v2398 = vadd.f32 %v2017, %v2394
        %v2399 = vadd.f32 %v639, %v2397
        %v2400 = vadd.f32 %v640, %v2398
        %v2401 = vld [vmem:[#allocation10] sm:$0x1]
        %v2403 = vlaneseq
        %v2404 = vshrl.u32 %v2403, 7
        %v2405 = vsub.s32 0, %v2404
        %v2406 = vrot.slane %v2401, %v2405
        %v2408 = vadd.f32 %v2399, %v2406
        %v2409 = vadd.f32 %v2400, %v2406
        %v2410 = vld [vmem:[#allocation11] sm:$0x1]
        %v2411 = vld [vmem:[#allocation13] sm:$0x1]
        %v2412 = vsel %vm643, %v2408, 0.0
        %2413 = vadd.xlane.f32.xlu0 %v2412
        %v2414 = vpop.xlane.xlu0 %2413
        %v2415 = vsel %vm643, %v2409, 0.0
        %2416 = vadd.xlane.f32.xlu0 %v2415
        %v2417 = vpop.xlane.xlu0 %2416
        %v2418 = vmul.f32 %v2414, %v650
        %v2419 = vmul.f32 %v2417, %v650
        %v2420 = vsub.f32 %v2408, %v2418
        %v2421 = vsub.f32 %v2409, %v2419
        %v2422 = vmul.f32 %v2420, %v2420
        %v2423 = vmul.f32 %v2421, %v2421
        %v2424 = vsel %vm643, %v2422, 0.0
        %2425 = vadd.xlane.f32.xlu0 %v2424
        %v2426 = vpop.xlane.xlu0 %2425
        %v2427 = vsel %vm643, %v2423, 0.0
        %2428 = vadd.xlane.f32.xlu0 %v2427
        %v2429 = vpop.xlane.xlu0 %2428
        %v2430 = vmul.f32 %v2426, %v650
        %v2431 = vmul.f32 %v2429, %v650
        %v2432 = vadd.f32 %v2430, 1e-05
        %v2433 = vadd.f32 %v2431, 1e-05
        %v2434 = vrsqrt.pop %v2432
        %v2435 = vrsqrt.pop %v2433
        %v2436 = vmul.f32 %v2420, %v2434
        %v2437 = vmul.f32 %v2421, %v2435
        %v2439 = vlaneseq
        %v2440 = vshrl.u32 %v2439, 7
        %v2441 = vsub.s32 0, %v2440
        %v2442 = vrot.slane %v2410, %v2441
        %v2444 = vmul.f32 %v2436, %v2442
        %v2445 = vmul.f32 %v2437, %v2442
        %v2447 = vlaneseq
        %v2448 = vshrl.u32 %v2447, 7
        %v2449 = vsub.s32 0, %v2448
        %v2450 = vrot.slane %v2411, %v2449
        %v2452 = vadd.f32 %v2444, %v2450
        %v2453 = vadd.f32 %v2445, %v2450
        %v2454 = vpack.c.bf16 %v2453, %v2452
        %v2455 = vld [vmem:[%s13] sm:$0xf]
        %v2456 = vld [vmem:[%s13 + $0x4] sm:$0xf]
        %v2457 = vld [vmem:[%s13 + $0x8] sm:$0xf]
        %v2458 = vld [vmem:[%s13 + $0xc] sm:$0xf]
        %v2459 = vld [vmem:[%s14] sm:$0x1]
        %v2461 = vlaneseq
        %v2462 = vshrl.u32 %v2461, 7
        %v2463 = vsub.s32 0, %v2462
        %v2464 = vrot.slane %v2459, %v2463
        %v2470 = vunpack.c.l.b16 %v2455
        %v2471 = vunpack.c.l.b16 %v2456
        %v2472 = vunpack.c.l.b16 %v2457
        %v2473 = vunpack.c.l.b16 %v2458
        %v2474 = vpack.c.b16 %v2471, %v2470
        %v2475 = vpack.c.b16 %v2473, %v2472
        %v2479 = vsel %vm643, %v2454, 0
        %2481 = vmatprep.subr.bf16.mxu0 0
        %2482 = vmatpush1.bf16.msra.mxu0 %v2474
        %2483 = vmatprep.subr.bf16.mxu0 0
        %2484 = vmatpush1.bf16.msra.mxu0 %v2475
        %2485 = vmatprep.subr.bf16.mxu0 0
        %2486 = vmatpush1.bf16.msra.mxu0 0
        %2487 = vmatprep.subr.bf16.mxu0 0
        %2488 = vmatpush1.bf16.msra.mxu0 0
        %2489 = vmatprep.subr.bf16.mxu0 0
        %2490 = vmatpush1.bf16.msra.mxu0 0
        %2491 = vmatprep.subr.bf16.mxu0 0
        %2492 = vmatpush1.bf16.msra.mxu0 0
        %2493 = vmatprep.subr.bf16.mxu0 0
        %2494 = vmatpush1.bf16.msra.mxu0 0
        %2495 = vmatprep.subr.bf16.mxu0 0
        %2496 = vmatpush1.bf16.msra.mxu0 0
        %2497 = vmatprep.subr.bf16.mxu0 0
        %2498 = vmatpush1.bf16.msra.mxu0 0
        %2499 = vmatprep.subr.bf16.mxu0 0
        %2500 = vmatpush1.bf16.msra.mxu0 0
        %2501 = vmatprep.subr.bf16.mxu0 0
        %2502 = vmatpush1.bf16.msra.mxu0 0
        %2503 = vmatprep.subr.bf16.mxu0 0
        %2504 = vmatpush1.bf16.msra.mxu0 0
        %2505 = vmatprep.subr.bf16.mxu0 0
        %2506 = vmatpush1.bf16.msra.mxu0 0
        %2507 = vmatprep.subr.bf16.mxu0 0
        %2508 = vmatpush1.bf16.msra.mxu0 0
        %2509 = vmatprep.subr.bf16.mxu0 0
        %2510 = vmatpush1.bf16.msra.mxu0 0
        %2511 = vmatprep.subr.bf16.mxu0 0
        %2512 = vmatpush1.bf16.msra.mxu0 0
        %2513 = vmatprep.mubr.bf16.mxu0 0
        %2514 = vmatmul.mubr.bf16.gmra.mrb[0].mxu0 %v2479
        %v2515 = vpop.f32.mrb[0].mxu0
        %v2516 = vadd.f32 %v2464, %v2515
        %v2517 = vpop.f32.mrb[0].mxu0
        %v2518 = vpop.f32.mrb[0].mxu0
        %v2519 = vadd.f32 %v2464, %v2518
        %v2520 = vpop.f32.mrb[0].mxu0
        %2521 = vdwg.mxu0
        %v2522 = vmul.f32 %v2516, 0.5
        %v2523 = vmul.f32 %v2519, 0.5
        %v2524 = vmul.f32 %v2516, 0.70710677
        %v2525 = vmul.f32 %v2519, 0.70710677
        %v2526 = vand.u32 2147483647, %v2524
        %v2527 = vand.u32 2147483647, %v2525
        %v2528 = vmul.f32 %v2526, 0.3275911
        %v2529 = vmul.f32 %v2527, 0.3275911
        %v2530 = vadd.f32 %v2528, 1.0
        %v2531 = vadd.f32 %v2529, 1.0
        %v2532 = vrcp.pop %v2530
        %v2533 = vmul.f32 1.0, %v2532
        %v2534 = vrcp.pop %v2531
        %v2535 = vmul.f32 1.0, %v2534
        %v2536 = vmul.f32 %v2533, 1.0614054
        %v2537 = vmul.f32 %v2535, 1.0614054
        %v2538 = vadd.f32 %v2536, -1.4531521
        %v2539 = vadd.f32 %v2537, -1.4531521
        %v2540 = vmul.f32 %v2533, %v2538
        %v2541 = vmul.f32 %v2535, %v2539
        %v2542 = vadd.f32 %v2540, 1.4214138
        %v2543 = vadd.f32 %v2541, 1.4214138
        %v2544 = vmul.f32 %v2533, %v2542
        %v2545 = vmul.f32 %v2535, %v2543
        %v2546 = vadd.f32 %v2544, -0.28449672
        %v2547 = vadd.f32 %v2545, -0.28449672
        %v2548 = vmul.f32 %v2533, %v2546
        %v2549 = vmul.f32 %v2535, %v2547
        %v2550 = vadd.f32 %v2548, 0.2548296
        %v2551 = vadd.f32 %v2549, 0.2548296
        %v2552 = vmul.f32 %v2533, %v2550
        %v2553 = vmul.f32 %v2535, %v2551
        %v2554 = vsub.f32 0.0, %v2526
        %v2555 = vsub.f32 0.0, %v2527
        %v2556 = vmul.f32 %v2554, %v2526
        %v2557 = vmul.f32 %v2555, %v2527
        %v2558 = vmul.f32 %v2556, 1.442695
        %v2559 = vpow.pop %v2558
        %v2560 = vmul.f32 %v2557, 1.442695
        %v2561 = vpow.pop %v2560
        %v2562 = vmul.f32 %v2552, %v2559
        %v2563 = vmul.f32 %v2553, %v2561
        %v2564 = vsub.f32 1.0, %v2562
        %v2565 = vsub.f32 1.0, %v2563
        %vm2566 = vcmp.lt.f32.partialorder %v2524, 0.0
        %vm2567 = vcmp.lt.f32.partialorder %v2525, 0.0
        %v2568 = vsub.f32 0.0, %v2564
        %v2569 = vsub.f32 0.0, %v2565
        %v2570 = vsel %vm2566, %v2568, %v2564
        %v2571 = vsel %vm2567, %v2569, %v2565
        %v2572 = vadd.f32 %v2570, 1.0
        %v2573 = vadd.f32 %v2571, 1.0
        %v2574 = vmul.f32 %v2522, %v2572
        %v2575 = vmul.f32 %v2523, %v2573
        %v2576 = vpack.c.bf16 %v2575, %v2574
        %v2577 = vld [vmem:[%s15] sm:$0xf]
        %v2578 = vld [vmem:[%s15 + $0x4] sm:$0xf]
        %v2579 = vld [vmem:[%s15 + $0x8] sm:$0xf]
        %v2580 = vld [vmem:[%s15 + $0xc] sm:$0xf]
        %v2581 = vld [vmem:[%s15 + $0x10] sm:$0xf]
        %v2582 = vld [vmem:[%s15 + $0x14] sm:$0xf]
        %v2583 = vld [vmem:[%s15 + $0x18] sm:$0xf]
        %v2584 = vld [vmem:[%s15 + $0x1c] sm:$0xf]
        %v2585 = vld [vmem:[%s15 + $0x20] sm:$0xf]
        %v2586 = vld [vmem:[%s15 + $0x24] sm:$0xf]
        %v2587 = vld [vmem:[%s15 + $0x28] sm:$0xf]
        %v2588 = vld [vmem:[%s15 + $0x2c] sm:$0xf]
        %v2589 = vld [vmem:[%s15 + $0x30] sm:$0xf]
        %v2590 = vld [vmem:[%s15 + $0x34] sm:$0xf]
        %v2591 = vld [vmem:[%s15 + $0x38] sm:$0xf]
        %v2592 = vld [vmem:[%s15 + $0x3c] sm:$0xf]
        %v2609 = vunpack.c.l.b16 %v2577
        %v2610 = vunpack.c.l.b16 %v2578
        %v2611 = vunpack.c.l.b16 %v2579
        %v2612 = vunpack.c.l.b16 %v2580
        %v2613 = vunpack.c.l.b16 %v2581
        %v2614 = vunpack.c.l.b16 %v2582
        %v2615 = vunpack.c.l.b16 %v2583
        %v2616 = vunpack.c.l.b16 %v2584
        %v2617 = vunpack.c.l.b16 %v2585
        %v2618 = vunpack.c.l.b16 %v2586
        %v2619 = vunpack.c.l.b16 %v2587
        %v2620 = vunpack.c.l.b16 %v2588
        %v2621 = vunpack.c.l.b16 %v2589
        %v2622 = vunpack.c.l.b16 %v2590
        %v2623 = vunpack.c.l.b16 %v2591
        %v2624 = vunpack.c.l.b16 %v2592
        %v2625 = vpack.c.b16 %v2610, %v2609
        %v2626 = vpack.c.b16 %v2612, %v2611
        %v2627 = vpack.c.b16 %v2614, %v2613
        %v2628 = vpack.c.b16 %v2616, %v2615
        %v2629 = vpack.c.b16 %v2618, %v2617
        %v2630 = vpack.c.b16 %v2620, %v2619
        %v2631 = vpack.c.b16 %v2622, %v2621
        %v2632 = vpack.c.b16 %v2624, %v2623
        %2641 = vmatprep.subr.bf16.mxu0 0
        %2642 = vmatpush1.bf16.msra.mxu0 %v2625
        %2643 = vmatprep.subr.bf16.mxu0 0
        %2644 = vmatpush1.bf16.msra.mxu0 %v2626
        %2645 = vmatprep.subr.bf16.mxu0 0
        %2646 = vmatpush1.bf16.msra.mxu0 %v2627
        %2647 = vmatprep.subr.bf16.mxu0 0
        %2648 = vmatpush1.bf16.msra.mxu0 %v2628
        %2649 = vmatprep.subr.bf16.mxu0 0
        %2650 = vmatpush1.bf16.msra.mxu0 %v2629
        %2651 = vmatprep.subr.bf16.mxu0 0
        %2652 = vmatpush1.bf16.msra.mxu0 %v2630
        %2653 = vmatprep.subr.bf16.mxu0 0
        %2654 = vmatpush1.bf16.msra.mxu0 %v2631
        %2655 = vmatprep.subr.bf16.mxu0 0
        %2656 = vmatpush1.bf16.msra.mxu0 %v2632
        %2657 = vmatprep.subr.bf16.mxu0 0
        %2658 = vmatpush1.bf16.msra.mxu0 0
        %2659 = vmatprep.subr.bf16.mxu0 0
        %2660 = vmatpush1.bf16.msra.mxu0 0
        %2661 = vmatprep.subr.bf16.mxu0 0
        %2662 = vmatpush1.bf16.msra.mxu0 0
        %2663 = vmatprep.subr.bf16.mxu0 0
        %2664 = vmatpush1.bf16.msra.mxu0 0
        %2665 = vmatprep.subr.bf16.mxu0 0
        %2666 = vmatpush1.bf16.msra.mxu0 0
        %2667 = vmatprep.subr.bf16.mxu0 0
        %2668 = vmatpush1.bf16.msra.mxu0 0
        %2669 = vmatprep.subr.bf16.mxu0 0
        %2670 = vmatpush1.bf16.msra.mxu0 0
        %2671 = vmatprep.subr.bf16.mxu0 0
        %2672 = vmatpush1.bf16.msra.mxu0 0
        %2673 = vmatprep.mubr.bf16.mxu0 0
        %2674 = vmatmul.mubr.bf16.gmra.mrb[0].mxu0 %v2576
        %v2675 = vpop.f32.mrb[0].mxu0
        %v2676 = vadd.f32 0.0, %v2675
        %v2677 = vpop.f32.mrb[0].mxu0
        %v2678 = vpop.f32.mrb[0].mxu0
        %v2679 = vadd.f32 0.0, %v2678
        %v2680 = vpop.f32.mrb[0].mxu0
        %2681 = vdwg.mxu0
        %v2682 = vadd.f32 %v2408, %v2676
        %v2683 = vadd.f32 %v2409, %v2679
        %v2684 = vld [vmem:[%s16] sm:$0x1]
        %v2686 = vlaneseq
        %v2687 = vshrl.u32 %v2686, 7
        %v2688 = vsub.s32 0, %v2687
        %v2689 = vrot.slane %v2684, %v2688
        %v2691 = vadd.f32 %v2682, %v2689
        %v2692 = vadd.f32 %v2683, %v2689
        %2693 = vst.msk [vmem:[%s630] sm:$0xff] %vm643, %v2691
        %2694 = vst.msk [vmem:[%s630 + $0x8] sm:$0xff] %vm643, %v2692
        %s2695 = sand.u32 %s405, 1
        %s2696 = scalar_lea.sflag [#allocation4], %s2695
        %s2697 = sand.u32 %s405, 1
        %s2698 = smul.addr %s2697, 16
        %s2699 = scalar_lea.vmem [#allocation14], %s2698
        // Predicated region
        $region117: #{tpu_custom_call.1} parent=87 // pred_check
          %p2700 = pneg %p415
        $region118: #{tpu_custom_call.1} parent=87 // pred_check_branch
          %2702 = sbr.rel (%p2700) target = $region120
        $region119: #{tpu_custom_call.1} parent=87 // pred_region
          %s2703 = smul.u32 2, %s35
          %s2705 = ssub.s32 256, 256
          %2706 = vsyncadd %s2696, %s2705
          %s2707 = smul.addr %s2703, 128
          %s2708 = scalar_lea.hbm %s17, %s2707
          %s2709 = sshll.u32 %s2699, 4
          %s2710 = int_to_ptr.vmem [resolvable:$true] %s2709
          %2715 = dma.vmem_to_hbm [thread:$0]  %s2710, 256, %s2708, %s2696, 128, 128, 8
        $region120: #{tpu_custom_call.1} parent=87 // pred_fallthru
          _
      $region88: #{tpu_custom_call.1} parent=5 // pred_fallthru
        _
      %p2716 = scmp.le.s32.totalorder 2, %s30
      // Predicated region
      $region121: #{tpu_custom_call.1} parent=5 // pred_check
        %p2717 = pneg %p2716
      $region122: #{tpu_custom_call.1} parent=5 // pred_check_branch
        %2719 = sbr.rel (%p2717) target = $region124
      $region123: #{tpu_custom_call.1} parent=5 // pred_region
        %s2720 = ssub.s32 %s30, 2
        // Predicated region
        $region125: #{tpu_custom_call.1} parent=123 // pred_check
          %p2721 = pneg %p421
        $region126: #{tpu_custom_call.1} parent=123 // pred_check_branch
          %2723 = sbr.rel (%p2721) target = $region128
        $region127: #{tpu_custom_call.1} parent=123 // pred_region
          %s2724 = sand.u32 %s406, 1
          %s2725 = scalar_lea.sflag [#allocation4], %s2724
          %s2726 = sand.u32 %s406, 1
          %s2727 = smul.addr %s2726, 16
          %s2728 = scalar_lea.vmem [#allocation14], %s2727
          %2729 = dma.done %s2725, 256
        $region128: #{tpu_custom_call.1} parent=123 // pred_fallthru
          _
      $region124: #{tpu_custom_call.1} parent=5 // pred_fallthru
        _
    $region6: #{tpu_custom_call.1} parent=1 // loop_footer
      %s34 = sadd.s32 1, %s30
    $region7: #{tpu_custom_call.1} parent=1 // loop_footer_branch
      %29 = sbr.rel target = $region3
    $region8: #{tpu_custom_call.1} parent=1 // loop_exit
      _
    %2730 = vsyncpa [#allocation3], 1
    %s2731 = scalar_lea.sflag [#allocation3], 1
    %2732 = vsyncpa %s2731, 1
    %2733 = vsyncpa [#allocation6], 1
    %2734 = vsyncpa [#allocation9], 1
    %2735 = vsyncpa [#allocation12], 1
    %2736 = vsyncpa [#allocation4], 1
    %s2737 = scalar_lea.sflag [#allocation4], 1
    %2738 = vsyncpa %s2737, 1

</llo_original>
